<compile_context>
chip_gen: v5e
topology: v5e:2x2
jax: 0.10.0
libtpu: 0.0.40
codegen_flags: <defaults>
</compile_context>

<pallas_src>
import functools

import numpy as np
import jax
import jax.numpy as jnp
from jax import lax
from jax.experimental import pallas as pl
from jax.experimental.pallas import tpu as pltpu

EPS = 1e-5
EXPANSION = 4
VMEM_LIMIT = 32 * 1024 * 1024


# ---------------------------------------------------------------------------
# Pallas kernels
# ---------------------------------------------------------------------------
def conv1_stats_kernel(x_ref, w1_ref, y1_ref, acc_ref):
    """1x1 conv (MXU matmul) + streaming per-channel sum / sum-of-squares."""
    y = jnp.dot(x_ref[...], w1_ref[...], preferred_element_type=jnp.float32)
    y1_ref[...] = y.astype(y1_ref.dtype)

    @pl.when(pl.program_id(1) == 0)
    def _init():
        acc_ref[...] = jnp.zeros_like(acc_ref)

    acc_ref[0:1, 0:1, :] += jnp.sum(y, axis=0, keepdims=True)[None]
    acc_ref[0:1, 1:2, :] += jnp.sum(y * y, axis=0, keepdims=True)[None]


def conv2_stats_kernel(y1_ref, s1_ref, t1_ref, w2_ref, y2_ref, acc_ref):
    """bn1 affine + ReLU, in-VMEM halo, grouped 3x3 conv as 9 per-tap matmuls + bn2 stats.

    y1_ref: (1, H, W, mid) raw bf16 conv1 output for one image (unpadded).
    """
    _, h, w, mid = y1_ref.shape
    bf16 = jnp.bfloat16

    # bn1 affine + ReLU in f32, single early bf16 cast (halves all downstream copies).
    a = jnp.maximum(
        y1_ref[0].astype(jnp.float32) * s1_ref[...].reshape(1, 1, mid)
        + t1_ref[...].reshape(1, 1, mid), 0.0).astype(bf16)

    # Zero halo built in VMEM (no XLA pad / HBM round trip, no iota mask).
    zrow = jnp.zeros((1, w, mid), bf16)
    a = jnp.concatenate([zrow, a, zrow], axis=0)            # (h+2, w, mid)
    zcol = jnp.zeros((h + 2, 1, mid), bf16)
    a = jnp.concatenate([zcol, a, zcol], axis=1)            # (h+2, w+2, mid)

    # Grouped 3x3 conv: 9 accumulating MXU matmuls (K = mid), no taps buffer.
    y2 = jnp.zeros((h * w, mid), jnp.float32)
    for t in range(9):
        dy, dx = divmod(t, 3)
        tap = a[dy:dy + h, dx:dx + w, :].reshape(h * w, mid)
        y2 = y2 + jnp.dot(tap, w2_ref[t], preferred_element_type=jnp.float32)
    y2_ref[0] = y2.astype(y2_ref.dtype)

    @pl.when(pl.program_id(1) == 0)
    def _init():
        acc_ref[...] = jnp.zeros_like(acc_ref)

    acc_ref[0:1, 0:1, :] += jnp.sum(y2, axis=0, keepdims=True)[None]
    acc_ref[0:1, 1:2, :] += jnp.sum(y2 * y2, axis=0, keepdims=True)[None]


def conv3_stats_kernel(y2_ref, s2_ref, t2_ref, w3_ref, y3_ref, acc_ref):
    """bn2 affine + ReLU prologue + 1x1 conv (MXU) + bn3 stats."""
    a = jnp.maximum(y2_ref[...].astype(jnp.float32) * s2_ref[...] + t2_ref[...], 0.0)
    y3 = jnp.dot(a.astype(jnp.bfloat16), w3_ref[...],
                 preferred_element_type=jnp.float32)
    y3_ref[...] = y3.astype(y3_ref.dtype)

    @pl.when(pl.program_id(1) == 0)
    def _init():
        acc_ref[...] = jnp.zeros_like(acc_ref)

    acc_ref[0:1, 0:1, :] += jnp.sum(y3, axis=0, keepdims=True)[None]
    acc_ref[0:1, 1:2, :] += jnp.sum(y3 * y3, axis=0, keepdims=True)[None]


def bn_res_relu_kernel(y3_ref, x_ref, s3_ref, t3_ref, o_ref):
    """bn3 affine + residual add (bf16 residual) + ReLU (pure VPU, megacore-parallel)."""
    z = y3_ref[...].astype(jnp.float32) * s3_ref[...] + t3_ref[...]
    o_ref[...] = jnp.maximum(z + x_ref[...].astype(jnp.float32), 0.0)


# ---------------------------------------------------------------------------
# Parameters & one-time weight preparation
# ---------------------------------------------------------------------------
def init_params(key, inplanes, planes, cardinality):
    mid = cardinality * planes // 32
    outp = planes * EXPANSION
    k1, k2, k3 = jax.random.split(key, 3)
    # PyTorch conv weight layouts (OIHW); no biases.
    w1 = jax.random.normal(k1, (mid, inplanes, 1, 1), jnp.float32) * 0.1
    w2 = jax.random.normal(k2, (mid, mid // cardinality, 3, 3), jnp.float32) * 0.1
    w3 = jax.random.normal(k3, (outp, mid, 1, 1), jnp.float32) * 0.1
    bn = lambda c: (jnp.ones((1, c), jnp.float32), jnp.zeros((1, c), jnp.float32))
    g1, b1 = bn(mid)
    g2, b2 = bn(mid)
    g3, b3 = bn(outp)
    return dict(w1=w1, w2=w2, w3=w3, g1=g1, b1=b1, g2=g2, b2=b2, g3=g3, b3=b3)


def expand_grouped_w2(w2, cardinality):
    """PyTorch grouped weight (mid, mid//card, 3, 3) -> per-tap block-diagonal dense
    weights of shape (9, mid_in, mid_out)."""
    mid, cpg = w2.shape[0], w2.shape[1]
    w2t = jnp.transpose(w2.reshape(mid, cpg, 9), (2, 1, 0))             # (9, cpg, mid)
    onehot = (jnp.arange(mid)[None, :] // cpg
              == jnp.arange(cardinality)[:, None]).astype(w2.dtype)     # (card, mid)
    dense = w2t[:, None, :, :] * onehot[None, :, None, :]               # (9,card,cpg,mid)
    return dense.reshape(9, mid, mid)


def prepare_weights(params, cardinality):
    """Device-side, done once: transposes, grouped expansion, bf16 MXU operands."""
    return dict(
        w1=params["w1"][:, :, 0, 0].T.astype(jnp.bfloat16),             # (Cin, mid)
        w2t=expand_grouped_w2(params["w2"], cardinality).astype(jnp.bfloat16),
        w3=params["w3"][:, :, 0, 0].T.astype(jnp.bfloat16),             # (mid, outp)
        g1=params["g1"], b1=params["b1"],
        g2=params["g2"], b2=params["b2"],
        g3=params["g3"], b3=params["b3"])


def _affine_from_stats(stats, gamma, beta, count):
    """(sum, sumsq) per channel -> BN scale/shift (training-mode biased variance)."""
    mean = stats[0:1] / count
    var = jnp.maximum(stats[1:2] / count - mean * mean, 0.0)
    scale = gamma * lax.rsqrt(var + EPS)
    shift = beta - mean * scale
    return scale, shift


# ---------------------------------------------------------------------------
# Forward wrapper (channels-last NHWC in / NHWC out — layout conversion is a
# network-boundary concern, not a per-block one)
# ---------------------------------------------------------------------------
def bottleneck_forward(x_nhwc, prep, row_tile=256):
    N, H, W, Cin = x_nhwc.shape
    mid = prep["w1"].shape[1]
    outp = prep["w3"].shape[1]
    assert Cin == outp, "downsample=None requires inplanes == planes * expansion"
    M = N * H * W
    row_tile = min(row_tile, M)
    assert M % row_tile == 0 and row_tile % 8 == 0
    n_row = M // row_tile
    # Leading "parallel" split so v7x megacore gets both stats stages' halves;
    # single-core chips just run the two halves sequentially.
    P = 2 if (n_row % 2 == 0 and n_row >= 2) else 1
    n_inner = n_row // P
    PN = 2 if (N % 2 == 0 and N >= 2) else 1
    n_img = N // PN
    f32 = jnp.float32

    cp_stats = pltpu.CompilerParams(
        dimension_semantics=("parallel", "arbitrary"), vmem_limit_bytes=VMEM_LIMIT)
    cp_par = pltpu.CompilerParams(
        dimension_semantics=("parallel",), vmem_limit_bytes=VMEM_LIMIT)

    # Single bf16 copy of the input: MXU operand for conv1 AND stage-4 residual.
    x2d_bf = x_nhwc.reshape(M, Cin).astype(jnp.bfloat16)

    # ---- stage 1: conv1 (1x1) + streaming BN1 statistics ---------------------
    y1raw, stats1 = pl.pallas_call(
        conv1_stats_kernel,
        grid=(P, n_inner),
        in_specs=[pl.BlockSpec((row_tile, Cin), lambda p, i: (p * n_inner + i, 0)),
                  pl.BlockSpec((Cin, mid), lambda p, i: (0, 0))],
        out_specs=(pl.BlockSpec((row_tile, mid), lambda p, i: (p * n_inner + i, 0)),
                   pl.BlockSpec((1, 2, mid), lambda p, i: (p, 0, 0))),
        out_shape=(jax.ShapeDtypeStruct((M, mid), jnp.bfloat16),
                   jax.ShapeDtypeStruct((P, 2, mid), f32)),
        compiler_params=cp_stats,
        cost_estimate=pl.CostEstimate(
            flops=2 * M * Cin * mid, transcendentals=0,
            bytes_accessed=2 * M * (Cin + mid) + 2 * Cin * mid),
    )(x2d_bf, prep["w1"])
    s1, t1 = _affine_from_stats(stats1.sum(axis=0), prep["g1"], prep["b1"], M)

    # ---- stage 2: bn1+relu -> grouped 3x3 conv (per-tap matmuls) -> BN2 stats --
    y2raw, stats2 = pl.pallas_call(
        conv2_stats_kernel,
        grid=(PN, n_img),
        in_specs=[pl.BlockSpec((1, H, W, mid), lambda p, n: (p * n_img + n, 0, 0, 0)),
                  pl.BlockSpec((1, mid), lambda p, n: (0, 0)),
                  pl.BlockSpec((1, mid), lambda p, n: (0, 0)),
                  pl.BlockSpec((9, mid, mid), lambda p, n: (0, 0, 0))],
        out_specs=(pl.BlockSpec((1, H * W, mid), lambda p, n: (p * n_img + n, 0, 0)),
                   pl.BlockSpec((1, 2, mid), lambda p, n: (p, 0, 0))),
        out_shape=(jax.ShapeDtypeStruct((N, H * W, mid), jnp.bfloat16),
                   jax.ShapeDtypeStruct((PN, 2, mid), f32)),
        compiler_params=cp_stats,
        cost_estimate=pl.CostEstimate(
            flops=2 * M * 9 * mid * mid, transcendentals=0,
            bytes_accessed=4 * M * mid + 2 * 9 * mid * mid),
    )(y1raw.reshape(N, H, W, mid), s1, t1, prep["w2t"])
    s2, t2 = _affine_from_stats(stats2.sum(axis=0), prep["g2"], prep["b2"], M)

    # ---- stage 3: bn2+relu -> conv3 (1x1) -> streaming BN3 stats -------------
    y3raw, stats3 = pl.pallas_call(
        conv3_stats_kernel,
        grid=(P, n_inner),
        in_specs=[pl.BlockSpec((row_tile, mid), lambda p, i: (p * n_inner + i, 0)),
                  pl.BlockSpec((1, mid), lambda p, i: (0, 0)),
                  pl.BlockSpec((1, mid), lambda p, i: (0, 0)),
                  pl.BlockSpec((mid, outp), lambda p, i: (0, 0))],
        out_specs=(pl.BlockSpec((row_tile, outp), lambda p, i: (p * n_inner + i, 0)),
                   pl.BlockSpec((1, 2, outp), lambda p, i: (p, 0, 0))),
        out_shape=(jax.ShapeDtypeStruct((M, outp), jnp.bfloat16),
                   jax.ShapeDtypeStruct((P, 2, outp), f32)),
        compiler_params=cp_stats,
        cost_estimate=pl.CostEstimate(
            flops=2 * M * mid * outp, transcendentals=0,
            bytes_accessed=2 * M * (mid + outp) + 2 * mid * outp),
    )(y2raw.reshape(M, mid), s2, t2, prep["w3"])
    s3, t3 = _affine_from_stats(stats3.sum(axis=0), prep["g3"], prep["b3"], M)

    # ---- stage 4: bn3 + residual (bf16) + relu (parallel over row tiles) ------
    out2d = pl.pallas_call(
        bn_res_relu_kernel,
        grid=(n_row,),
        in_specs=[pl.BlockSpec((row_tile, outp), lambda i: (i, 0)),
                  pl.BlockSpec((row_tile, outp), lambda i: (i, 0)),
                  pl.BlockSpec((1, outp), lambda i: (0, 0)),
                  pl.BlockSpec((1, outp), lambda i: (0, 0))],
        out_specs=pl.BlockSpec((row_tile, outp), lambda i: (i, 0)),
        out_shape=jax.ShapeDtypeStruct((M, outp), f32),
        compiler_params=cp_par,
    )(y3raw, x2d_bf, s3, t3)

    return out2d.reshape(N, H, W, outp)      # NHWC


# ---------------------------------------------------------------------------
# Pure-JAX (XLA) reference mirroring the PyTorch forward exactly
# ---------------------------------------------------------------------------
def torch_ref(x, p, cardinality):
    def bn(y, g, b):  # y: NCHW, training-mode batch stats (biased var)
        mean = y.mean(axis=(0, 2, 3), keepdims=True)
        var = ((y - mean) ** 2).mean(axis=(0, 2, 3), keepdims=True)
        return ((y - mean) / jnp.sqrt(var + EPS)
                * g.reshape(1, -1, 1, 1) + b.reshape(1, -1, 1, 1))

    def conv(x, w, groups=1):
        ph, pw = w.shape[2] // 2, w.shape[3] // 2
        return lax.conv_general_dilated(
            x, w, (1, 1), ((ph, ph), (pw, pw)),
            dimension_numbers=("NCHW", "OIHW", "NCHW"),
            feature_group_count=groups)

    out = jnp.maximum(bn(conv(x, p["w1"]), p["g1"], p["b1"]), 0.0)
    out = jnp.maximum(bn(conv(out, p["w2"], cardinality), p["g2"], p["b2"]), 0.0)
    out = bn(conv(out, p["w3"]), p["g3"], p["b3"])
    return jnp.maximum(out + x, 0.0)


if __name__ == "__main__":
    key = jax.random.PRNGKey(0)
    N, H, W = 2, 8, 8
    cardinality, planes = 4, 64           # mid = 4*64//32 = 8, 2 channels per group
    inplanes = planes * EXPANSION         # 256 -> identity residual, downsample=None
    kx, kp = jax.random.split(key)
    x = jax.random.normal(kx, (N, inplanes, H, W), jnp.float32)   # NCHW input
    params = init_params(kp, inplanes, planes, cardinality)

    prep = prepare_weights(params, cardinality)                   # once, on device
    # NCHW <-> NHWC conversion happens only here (network boundary), not per block.
    x_nhwc = jnp.transpose(x, (0, 2, 3, 1))
    fwd = jax.jit(functools.partial(bottleneck_forward, row_tile=64))
    out_nhwc = jax.block_until_ready(fwd(x_nhwc, prep))
    out = jnp.transpose(out_nhwc, (0, 3, 1, 2))                   # back to NCHW to check

    ref = jax.block_until_ready(torch_ref(x, params, cardinality))
    np.testing.assert_allclose(np.asarray(out), np.asarray(ref),
                               atol=5e-2, rtol=5e-2)
    print("KERNEL_OK")
</pallas_src>

<mosaic_0001>
module attributes {stable_mosaic.version = 11 : i64} {
  func.func @conv1_stats_kernel(%arg0: i32, %arg1: i32, %arg2: memref<64x256xbf16, #tpu.memory_space<vmem>>, %arg3: memref<256x8xbf16, #tpu.memory_space<vmem>>, %arg4: memref<64x8xbf16, #tpu.memory_space<vmem>>, %arg5: memref<1x2x8xf32, #tpu.memory_space<vmem>>) attributes {dimension_semantics = [#tpu.dimension_semantics<parallel>, #tpu.dimension_semantics<arbitrary>], iteration_bounds = array<i64: 2, 1>, scalar_prefetch = 0 : i64, scratch_operands = 0 : i64, tpu.core_type = #tpu.core_type<tc>, window_params = [{transform_indices = @transform_0, window_bounds = array<i64: 64, 256>}, {pipeline_mode = #tpu.pipeline_mode<synchronous>, transform_indices = @transform_1, window_bounds = array<i64: 256, 8>}, {transform_indices = @transform_2, window_bounds = array<i64: 64, 8>}, {transform_indices = @transform_3, window_bounds = array<i64: 1, 2, 8>}]} {
    %c0 = arith.constant 0 : index
    %c0_0 = arith.constant 0 : index
    %0 = vector.load %arg2[%c0, %c0_0] : memref<64x256xbf16, #tpu.memory_space<vmem>>, vector<64x256xbf16>
    %c0_1 = arith.constant 0 : index
    %c0_2 = arith.constant 0 : index
    %1 = vector.load %arg3[%c0_1, %c0_2] : memref<256x8xbf16, #tpu.memory_space<vmem>>, vector<256x8xbf16>
    %cst = arith.constant dense<0.000000e+00> : vector<64x8xf32>
    %2 = tpu.matmul %0, %1, %cst {dimension_numbers = #tpu.dot_dimension_numbers<[1], [0], [0], [1], [0, 0, 1, 1], [], []>} : vector<64x256xbf16>, vector<256x8xbf16>, vector<64x8xf32> -> vector<64x8xf32>
    %3 = arith.truncf %2 : vector<64x8xf32> to vector<64x8xbf16>
    %c0_3 = arith.constant 0 : index
    %c0_4 = arith.constant 0 : index
    %4 = vector.load %arg4[%c0_3, %c0_4] : memref<64x8xbf16, #tpu.memory_space<vmem>>, vector<64x8xbf16>
    tpu.vector_store %arg4[%c0_3, %c0_4], %3 {strides = array<i32>} : memref<64x8xbf16, #tpu.memory_space<vmem>>, vector<64x8xbf16>,
    %c0_i32 = arith.constant 0 : i32
    %5 = arith.cmpi eq, %arg1, %c0_i32 : i32
    %6 = arith.extui %5 : i1 to i32
    %c0_i32_5 = arith.constant 0 : i32
    %7 = arith.cmpi ne, %6, %c0_i32_5 : i32
    scf.if %7 {
      %cst_19 = arith.constant 0.000000e+00 : f32
      %21 = vector.broadcast %cst_19 : f32 to vector<1x2x8xf32>
      %c0_20 = arith.constant 0 : index
      %c0_21 = arith.constant 0 : index
      %c0_22 = arith.constant 0 : index
      %22 = vector.load %arg5[%c0_20, %c0_21, %c0_22] : memref<1x2x8xf32, #tpu.memory_space<vmem>>, vector<1x2x8xf32>
      tpu.vector_store %arg5[%c0_20, %c0_21, %c0_22], %21 {strides = array<i32>} : memref<1x2x8xf32, #tpu.memory_space<vmem>>, vector<1x2x8xf32>,
    } else {
    }
    %c0_6 = arith.constant 0 : index
    %c0_7 = arith.constant 0 : index
    %c0_8 = arith.constant 0 : index
    %8 = vector.load %arg5[%c0_6, %c0_7, %c0_8] : memref<1x2x8xf32, #tpu.memory_space<vmem>>, vector<1x1x8xf32>
    %cst_9 = arith.constant dense<0.000000e+00> : vector<8xf32>
    %9 = vector.multi_reduction <add>, %2, %cst_9 [0] : vector<64x8xf32> to vector<8xf32>
    %10 = vector.shape_cast %9 : vector<8xf32> to vector<1x8xf32>
    %11 = vector.shape_cast %10 : vector<1x8xf32> to vector<1x1x8xf32>
    %12 = arith.addf %8, %11 : vector<1x1x8xf32>
    %c0_10 = arith.constant 0 : index
    %c0_11 = arith.constant 0 : index
    %c0_12 = arith.constant 0 : index
    %13 = vector.load %arg5[%c0_10, %c0_11, %c0_12] : memref<1x2x8xf32, #tpu.memory_space<vmem>>, vector<1x1x8xf32>
    tpu.vector_store %arg5[%c0_10, %c0_11, %c0_12], %12 {strides = array<i32>} : memref<1x2x8xf32, #tpu.memory_space<vmem>>, vector<1x1x8xf32>,
    %c0_13 = arith.constant 0 : index
    %c1 = arith.constant 1 : index
    %c0_14 = arith.constant 0 : index
    %14 = vector.load %arg5[%c0_13, %c1, %c0_14] : memref<1x2x8xf32, #tpu.memory_space<vmem>>, vector<1x1x8xf32>
    %15 = arith.mulf %2, %2 : vector<64x8xf32>
    %cst_15 = arith.constant dense<0.000000e+00> : vector<8xf32>
    %16 = vector.multi_reduction <add>, %15, %cst_15 [0] : vector<64x8xf32> to vector<8xf32>
    %17 = vector.shape_cast %16 : vector<8xf32> to vector<1x8xf32>
    %18 = vector.shape_cast %17 : vector<1x8xf32> to vector<1x1x8xf32>
    %19 = arith.addf %14, %18 : vector<1x1x8xf32>
    %c0_16 = arith.constant 0 : index
    %c1_17 = arith.constant 1 : index
    %c0_18 = arith.constant 0 : index
    %20 = vector.load %arg5[%c0_16, %c1_17, %c0_18] : memref<1x2x8xf32, #tpu.memory_space<vmem>>, vector<1x1x8xf32>
    tpu.vector_store %arg5[%c0_16, %c1_17, %c0_18], %19 {strides = array<i32>} : memref<1x2x8xf32, #tpu.memory_space<vmem>>, vector<1x1x8xf32>,
    return
  }
  func.func @transform_0(%arg0: i32, %arg1: i32) -> (i32, i32) {
    %c1_i32 = arith.constant 1 : i32
    %0 = arith.muli %arg0, %c1_i32 : i32
    %1 = arith.addi %0, %arg1 : i32
    %c0_i32 = arith.constant 0 : i32
    %c0_i32_0 = arith.constant 0 : i32
    return %1, %c0_i32 : i32, i32
  }
  func.func @transform_1(%arg0: i32, %arg1: i32) -> (i32, i32) {
    %c0_i32 = arith.constant 0 : i32
    %c0_i32_0 = arith.constant 0 : i32
    %c0_i32_1 = arith.constant 0 : i32
    return %c0_i32, %c0_i32_0 : i32, i32
  }
  func.func @transform_2(%arg0: i32, %arg1: i32) -> (i32, i32) {
    %c1_i32 = arith.constant 1 : i32
    %0 = arith.muli %arg0, %c1_i32 : i32
    %1 = arith.addi %0, %arg1 : i32
    %c0_i32 = arith.constant 0 : i32
    %c0_i32_0 = arith.constant 0 : i32
    return %1, %c0_i32 : i32, i32
  }
  func.func @transform_3(%arg0: i32, %arg1: i32) -> (i32, i32, i32) {
    %c0_i32 = arith.constant 0 : i32
    %c0_i32_0 = arith.constant 0 : i32
    %c0_i32_1 = arith.constant 0 : i32
    return %arg0, %c0_i32, %c0_i32_0 : i32, i32, i32
  }
}

module attributes {stable_mosaic.version = 11 : i64} {
  func.func @conv3_stats_kernel(%arg0: i32, %arg1: i32, %arg2: memref<64x8xbf16, #tpu.memory_space<vmem>>, %arg3: memref<1x8xf32, #tpu.memory_space<vmem>>, %arg4: memref<1x8xf32, #tpu.memory_space<vmem>>, %arg5: memref<8x256xbf16, #tpu.memory_space<vmem>>, %arg6: memref<64x256xbf16, #tpu.memory_space<vmem>>, %arg7: memref<1x2x256xf32, #tpu.memory_space<vmem>>) attributes {dimension_semantics = [#tpu.dimension_semantics<parallel>, #tpu.dimension_semantics<arbitrary>], iteration_bounds = array<i64: 2, 1>, scalar_prefetch = 0 : i64, scratch_operands = 0 : i64, tpu.core_type = #tpu.core_type<tc>, window_params = [{transform_indices = @transform_0, window_bounds = array<i64: 64, 8>}, {pipeline_mode = #tpu.pipeline_mode<synchronous>, transform_indices = @transform_1, window_bounds = array<i64: 1, 8>}, {pipeline_mode = #tpu.pipeline_mode<synchronous>, transform_indices = @transform_2, window_bounds = array<i64: 1, 8>}, {pipeline_mode = #tpu.pipeline_mode<synchronous>, transform_indices = @transform_3, window_bounds = array<i64: 8, 256>}, {transform_indices = @transform_4, window_bounds = array<i64: 64, 256>}, {transform_indices = @transform_5, window_bounds = array<i64: 1, 2, 256>}]} {
    %c0 = arith.constant 0 : index
    %c0_0 = arith.constant 0 : index
    %0 = vector.load %arg2[%c0, %c0_0] : memref<64x8xbf16, #tpu.memory_space<vmem>>, vector<64x8xbf16>
    %1 = arith.extf %0 : vector<64x8xbf16> to vector<64x8xf32>
    %c0_1 = arith.constant 0 : index
    %c0_2 = arith.constant 0 : index
    %2 = vector.load %arg3[%c0_1, %c0_2] : memref<1x8xf32, #tpu.memory_space<vmem>>, vector<1x8xf32>
    %3 = vector.broadcast %2 : vector<1x8xf32> to vector<64x8xf32>
    %4 = arith.mulf %1, %3 : vector<64x8xf32>
    %c0_3 = arith.constant 0 : index
    %c0_4 = arith.constant 0 : index
    %5 = vector.load %arg4[%c0_3, %c0_4] : memref<1x8xf32, #tpu.memory_space<vmem>>, vector<1x8xf32>
    %6 = vector.broadcast %5 : vector<1x8xf32> to vector<64x8xf32>
    %7 = arith.addf %4, %6 : vector<64x8xf32>
    %cst = arith.constant 0.000000e+00 : f32
    %8 = vector.broadcast %cst : f32 to vector<64x8xf32>
    %9 = arith.maximumf %7, %8 : vector<64x8xf32>
    %10 = arith.truncf %9 : vector<64x8xf32> to vector<64x8xbf16>
    %c0_5 = arith.constant 0 : index
    %c0_6 = arith.constant 0 : index
    %11 = vector.load %arg5[%c0_5, %c0_6] : memref<8x256xbf16, #tpu.memory_space<vmem>>, vector<8x256xbf16>
    %cst_7 = arith.constant dense<0.000000e+00> : vector<64x256xf32>
    %12 = tpu.matmul %10, %11, %cst_7 {dimension_numbers = #tpu.dot_dimension_numbers<[1], [0], [0], [1], [0, 0, 1, 1], [], []>} : vector<64x8xbf16>, vector<8x256xbf16>, vector<64x256xf32> -> vector<64x256xf32>
    %13 = arith.truncf %12 : vector<64x256xf32> to vector<64x256xbf16>
    %c0_8 = arith.constant 0 : index
    %c0_9 = arith.constant 0 : index
    %14 = vector.load %arg6[%c0_8, %c0_9] : memref<64x256xbf16, #tpu.memory_space<vmem>>, vector<64x256xbf16>
    tpu.vector_store %arg6[%c0_8, %c0_9], %13 {strides = array<i32>} : memref<64x256xbf16, #tpu.memory_space<vmem>>, vector<64x256xbf16>,
    %c0_i32 = arith.constant 0 : i32
    %15 = arith.cmpi eq, %arg1, %c0_i32 : i32
    %16 = arith.extui %15 : i1 to i32
    %c0_i32_10 = arith.constant 0 : i32
    %17 = arith.cmpi ne, %16, %c0_i32_10 : i32
    scf.if %17 {
      %cst_24 = arith.constant 0.000000e+00 : f32
      %31 = vector.broadcast %cst_24 : f32 to vector<1x2x256xf32>
      %c0_25 = arith.constant 0 : index
      %c0_26 = arith.constant 0 : index
      %c0_27 = arith.constant 0 : index
      %32 = vector.load %arg7[%c0_25, %c0_26, %c0_27] : memref<1x2x256xf32, #tpu.memory_space<vmem>>, vector<1x2x256xf32>
      tpu.vector_store %arg7[%c0_25, %c0_26, %c0_27], %31 {strides = array<i32>} : memref<1x2x256xf32, #tpu.memory_space<vmem>>, vector<1x2x256xf32>,
    } else {
    }
    %c0_11 = arith.constant 0 : index
    %c0_12 = arith.constant 0 : index
    %c0_13 = arith.constant 0 : index
    %18 = vector.load %arg7[%c0_11, %c0_12, %c0_13] : memref<1x2x256xf32, #tpu.memory_space<vmem>>, vector<1x1x256xf32>
    %cst_14 = arith.constant dense<0.000000e+00> : vector<256xf32>
    %19 = vector.multi_reduction <add>, %12, %cst_14 [0] : vector<64x256xf32> to vector<256xf32>
    %20 = vector.shape_cast %19 : vector<256xf32> to vector<1x256xf32>
    %21 = vector.shape_cast %20 : vector<1x256xf32> to vector<1x1x256xf32>
    %22 = arith.addf %18, %21 : vector<1x1x256xf32>
    %c0_15 = arith.constant 0 : index
    %c0_16 = arith.constant 0 : index
    %c0_17 = arith.constant 0 : index
    %23 = vector.load %arg7[%c0_15, %c0_16, %c0_17] : memref<1x2x256xf32, #tpu.memory_space<vmem>>, vector<1x1x256xf32>
    tpu.vector_store %arg7[%c0_15, %c0_16, %c0_17], %22 {strides = array<i32>} : memref<1x2x256xf32, #tpu.memory_space<vmem>>, vector<1x1x256xf32>,
    %c0_18 = arith.constant 0 : index
    %c1 = arith.constant 1 : index
    %c0_19 = arith.constant 0 : index
    %24 = vector.load %arg7[%c0_18, %c1, %c0_19] : memref<1x2x256xf32, #tpu.memory_space<vmem>>, vector<1x1x256xf32>
    %25 = arith.mulf %12, %12 : vector<64x256xf32>
    %cst_20 = arith.constant dense<0.000000e+00> : vector<256xf32>
    %26 = vector.multi_reduction <add>, %25, %cst_20 [0] : vector<64x256xf32> to vector<256xf32>
    %27 = vector.shape_cast %26 : vector<256xf32> to vector<1x256xf32>
    %28 = vector.shape_cast %27 : vector<1x256xf32> to vector<1x1x256xf32>
    %29 = arith.addf %24, %28 : vector<1x1x256xf32>
    %c0_21 = arith.constant 0 : index
    %c1_22 = arith.constant 1 : index
    %c0_23 = arith.constant 0 : index
    %30 = vector.load %arg7[%c0_21, %c1_22, %c0_23] : memref<1x2x256xf32, #tpu.memory_space<vmem>>, vector<1x1x256xf32>
    tpu.vector_store %arg7[%c0_21, %c1_22, %c0_23], %29 {strides = array<i32>} : memref<1x2x256xf32, #tpu.memory_space<vmem>>, vector<1x1x256xf32>,
    return
  }
  func.func @transform_0(%arg0: i32, %arg1: i32) -> (i32, i32) {
    %c1_i32 = arith.constant 1 : i32
    %0 = arith.muli %arg0, %c1_i32 : i32
    %1 = arith.addi %0, %arg1 : i32
    %c0_i32 = arith.constant 0 : i32
    %c0_i32_0 = arith.constant 0 : i32
    return %1, %c0_i32 : i32, i32
  }
  func.func @transform_1(%arg0: i32, %arg1: i32) -> (i32, i32) {
    %c0_i32 = arith.constant 0 : i32
    %c0_i32_0 = arith.constant 0 : i32
    %c0_i32_1 = arith.constant 0 : i32
    return %c0_i32, %c0_i32_0 : i32, i32
  }
  func.func @transform_2(%arg0: i32, %arg1: i32) -> (i32, i32) {
    %c0_i32 = arith.constant 0 : i32
    %c0_i32_0 = arith.constant 0 : i32
    %c0_i32_1 = arith.constant 0 : i32
    return %c0_i32, %c0_i32_0 : i32, i32
  }
  func.func @transform_3(%arg0: i32, %arg1: i32) -> (i32, i32) {
    %c0_i32 = arith.constant 0 : i32
    %c0_i32_0 = arith.constant 0 : i32
    %c0_i32_1 = arith.constant 0 : i32
    return %c0_i32, %c0_i32_0 : i32, i32
  }
  func.func @transform_4(%arg0: i32, %arg1: i32) -> (i32, i32) {
    %c1_i32 = arith.constant 1 : i32
    %0 = arith.muli %arg0, %c1_i32 : i32
    %1 = arith.addi %0, %arg1 : i32
    %c0_i32 = arith.constant 0 : i32
    %c0_i32_0 = arith.constant 0 : i32
    return %1, %c0_i32 : i32, i32
  }
  func.func @transform_5(%arg0: i32, %arg1: i32) -> (i32, i32, i32) {
    %c0_i32 = arith.constant 0 : i32
    %c0_i32_0 = arith.constant 0 : i32
    %c0_i32_1 = arith.constant 0 : i32
    return %arg0, %c0_i32, %c0_i32_0 : i32, i32, i32
  }
}

module attributes {stable_mosaic.version = 11 : i64} {
  func.func @conv2_stats_kernel(%arg0: i32, %arg1: i32, %arg2: memref<1x8x8x8xbf16, #tpu.memory_space<vmem>>, %arg3: memref<1x8xf32, #tpu.memory_space<vmem>>, %arg4: memref<1x8xf32, #tpu.memory_space<vmem>>, %arg5: memref<9x8x8xbf16, #tpu.memory_space<vmem>>, %arg6: memref<1x64x8xbf16, #tpu.memory_space<vmem>>, %arg7: memref<1x2x8xf32, #tpu.memory_space<vmem>>) attributes {dimension_semantics = [#tpu.dimension_semantics<parallel>, #tpu.dimension_semantics<arbitrary>], iteration_bounds = array<i64: 2, 1>, scalar_prefetch = 0 : i64, scratch_operands = 0 : i64, tpu.core_type = #tpu.core_type<tc>, window_params = [{transform_indices = @transform_0, window_bounds = array<i64: 1, 8, 8, 8>}, {pipeline_mode = #tpu.pipeline_mode<synchronous>, transform_indices = @transform_1, window_bounds = array<i64: 1, 8>}, {pipeline_mode = #tpu.pipeline_mode<synchronous>, transform_indices = @transform_2, window_bounds = array<i64: 1, 8>}, {pipeline_mode = #tpu.pipeline_mode<synchronous>, transform_indices = @transform_3, window_bounds = array<i64: 9, 8, 8>}, {transform_indices = @transform_4, window_bounds = array<i64: 1, 64, 8>}, {transform_indices = @transform_5, window_bounds = array<i64: 1, 2, 8>}]} {
    %c0 = arith.constant 0 : index
    %c0_0 = arith.constant 0 : index
    %c0_1 = arith.constant 0 : index
    %c0_2 = arith.constant 0 : index
    %0 = vector.load %arg2[%c0, %c0_0, %c0_1, %c0_2] : memref<1x8x8x8xbf16, #tpu.memory_space<vmem>>, vector<1x8x8x8xbf16>
    %1 = vector.shape_cast %0 : vector<1x8x8x8xbf16> to vector<8x8x8xbf16>
    %2 = arith.extf %1 : vector<8x8x8xbf16> to vector<8x8x8xf32>
    %c0_3 = arith.constant 0 : index
    %c0_4 = arith.constant 0 : index
    %3 = vector.load %arg3[%c0_3, %c0_4] : memref<1x8xf32, #tpu.memory_space<vmem>>, vector<1x8xf32>
    %4 = vector.shape_cast %3 : vector<1x8xf32> to vector<1x1x8xf32>
    %5 = vector.broadcast %4 : vector<1x1x8xf32> to vector<8x8x8xf32>
    %6 = arith.mulf %2, %5 : vector<8x8x8xf32>
    %c0_5 = arith.constant 0 : index
    %c0_6 = arith.constant 0 : index
    %7 = vector.load %arg4[%c0_5, %c0_6] : memref<1x8xf32, #tpu.memory_space<vmem>>, vector<1x8xf32>
    %8 = vector.shape_cast %7 : vector<1x8xf32> to vector<1x1x8xf32>
    %9 = vector.broadcast %8 : vector<1x1x8xf32> to vector<8x8x8xf32>
    %10 = arith.addf %6, %9 : vector<8x8x8xf32>
    %cst = arith.constant 0.000000e+00 : f32
    %11 = vector.broadcast %cst : f32 to vector<8x8x8xf32>
    %12 = arith.maximumf %10, %11 : vector<8x8x8xf32>
    %13 = arith.truncf %12 : vector<8x8x8xf32> to vector<8x8x8xbf16>
    %cst_7 = arith.constant 0.000000e+00 : bf16
    %14 = vector.broadcast %cst_7 : bf16 to vector<1x8x8xbf16>
    %15 = tpu.concatenate %14, %13, %14 in 0 : vector<1x8x8xbf16>, vector<8x8x8xbf16>, vector<1x8x8xbf16> -> vector<10x8x8xbf16>
    %cst_8 = arith.constant 0.000000e+00 : bf16
    %16 = vector.broadcast %cst_8 : bf16 to vector<10x1x8xbf16>
    %17 = tpu.concatenate %16, %15, %16 in 1 : vector<10x1x8xbf16>, vector<10x8x8xbf16>, vector<10x1x8xbf16> -> vector<10x10x8xbf16>
    %cst_9 = arith.constant 0.000000e+00 : f32
    %18 = vector.broadcast %cst_9 : f32 to vector<64x8xf32>
    %19 = vector.extract_strided_slice %17 {offsets = [0, 0, 0], sizes = [8, 8, 8], strides = [1, 1, 1]} : vector<10x10x8xbf16> to vector<8x8x8xbf16>
    %20 = vector.shape_cast %19 : vector<8x8x8xbf16> to vector<64x8xbf16>
    %c0_10 = arith.constant 0 : index
    %c0_11 = arith.constant 0 : index
    %c0_12 = arith.constant 0 : index
    %21 = vector.load %arg5[%c0_10, %c0_11, %c0_12] : memref<9x8x8xbf16, #tpu.memory_space<vmem>>, vector<1x8x8xbf16>
    %22 = vector.shape_cast %21 : vector<1x8x8xbf16> to vector<8x8xbf16>
    %cst_13 = arith.constant dense<0.000000e+00> : vector<64x8xf32>
    %23 = tpu.matmul %20, %22, %cst_13 {dimension_numbers = #tpu.dot_dimension_numbers<[1], [0], [0], [1], [0, 0, 1, 1], [], []>} : vector<64x8xbf16>, vector<8x8xbf16>, vector<64x8xf32> -> vector<64x8xf32>
    %24 = arith.addf %18, %23 : vector<64x8xf32>
    %25 = vector.extract_strided_slice %17 {offsets = [0, 1, 0], sizes = [8, 8, 8], strides = [1, 1, 1]} : vector<10x10x8xbf16> to vector<8x8x8xbf16>
    %26 = vector.shape_cast %25 : vector<8x8x8xbf16> to vector<64x8xbf16>
    %c1 = arith.constant 1 : index
    %c0_14 = arith.constant 0 : index
    %c0_15 = arith.constant 0 : index
    %27 = vector.load %arg5[%c1, %c0_14, %c0_15] : memref<9x8x8xbf16, #tpu.memory_space<vmem>>, vector<1x8x8xbf16>
    %28 = vector.shape_cast %27 : vector<1x8x8xbf16> to vector<8x8xbf16>
    %cst_16 = arith.constant dense<0.000000e+00> : vector<64x8xf32>
    %29 = tpu.matmul %26, %28, %cst_16 {dimension_numbers = #tpu.dot_dimension_numbers<[1], [0], [0], [1], [0, 0, 1, 1], [], []>} : vector<64x8xbf16>, vector<8x8xbf16>, vector<64x8xf32> -> vector<64x8xf32>
    %30 = arith.addf %24, %29 : vector<64x8xf32>
    %31 = vector.extract_strided_slice %17 {offsets = [0, 2, 0], sizes = [8, 8, 8], strides = [1, 1, 1]} : vector<10x10x8xbf16> to vector<8x8x8xbf16>
    %32 = vector.shape_cast %31 : vector<8x8x8xbf16> to vector<64x8xbf16>
    %c2 = arith.constant 2 : index
    %c0_17 = arith.constant 0 : index
    %c0_18 = arith.constant 0 : index
    %33 = vector.load %arg5[%c2, %c0_17, %c0_18] : memref<9x8x8xbf16, #tpu.memory_space<vmem>>, vector<1x8x8xbf16>
    %34 = vector.shape_cast %33 : vector<1x8x8xbf16> to vector<8x8xbf16>
    %cst_19 = arith.constant dense<0.000000e+00> : vector<64x8xf32>
    %35 = tpu.matmul %32, %34, %cst_19 {dimension_numbers = #tpu.dot_dimension_numbers<[1], [0], [0], [1], [0, 0, 1, 1], [], []>} : vector<64x8xbf16>, vector<8x8xbf16>, vector<64x8xf32> -> vector<64x8xf32>
    %36 = arith.addf %30, %35 : vector<64x8xf32>
    %37 = vector.extract_strided_slice %17 {offsets = [1, 0, 0], sizes = [8, 8, 8], strides = [1, 1, 1]} : vector<10x10x8xbf16> to vector<8x8x8xbf16>
    %38 = vector.shape_cast %37 : vector<8x8x8xbf16> to vector<64x8xbf16>
    %c3 = arith.constant 3 : index
    %c0_20 = arith.constant 0 : index
    %c0_21 = arith.constant 0 : index
    %39 = vector.load %arg5[%c3, %c0_20, %c0_21] : memref<9x8x8xbf16, #tpu.memory_space<vmem>>, vector<1x8x8xbf16>
    %40 = vector.shape_cast %39 : vector<1x8x8xbf16> to vector<8x8xbf16>
    %cst_22 = arith.constant dense<0.000000e+00> : vector<64x8xf32>
    %41 = tpu.matmul %38, %40, %cst_22 {dimension_numbers = #tpu.dot_dimension_numbers<[1], [0], [0], [1], [0, 0, 1, 1], [], []>} : vector<64x8xbf16>, vector<8x8xbf16>, vector<64x8xf32> -> vector<64x8xf32>
    %42 = arith.addf %36, %41 : vector<64x8xf32>
    %43 = vector.extract_strided_slice %17 {offsets = [1, 1, 0], sizes = [8, 8, 8], strides = [1, 1, 1]} : vector<10x10x8xbf16> to vector<8x8x8xbf16>
    %44 = vector.shape_cast %43 : vector<8x8x8xbf16> to vector<64x8xbf16>
    %c4 = arith.constant 4 : index
    %c0_23 = arith.constant 0 : index
    %c0_24 = arith.constant 0 : index
    %45 = vector.load %arg5[%c4, %c0_23, %c0_24] : memref<9x8x8xbf16, #tpu.memory_space<vmem>>, vector<1x8x8xbf16>
    %46 = vector.shape_cast %45 : vector<1x8x8xbf16> to vector<8x8xbf16>
    %cst_25 = arith.constant dense<0.000000e+00> : vector<64x8xf32>
    %47 = tpu.matmul %44, %46, %cst_25 {dimension_numbers = #tpu.dot_dimension_numbers<[1], [0], [0], [1], [0, 0, 1, 1], [], []>} : vector<64x8xbf16>, vector<8x8xbf16>, vector<64x8xf32> -> vector<64x8xf32>
    %48 = arith.addf %42, %47 : vector<64x8xf32>
    %49 = vector.extract_strided_slice %17 {offsets = [1, 2, 0], sizes = [8, 8, 8], strides = [1, 1, 1]} : vector<10x10x8xbf16> to vector<8x8x8xbf16>
    %50 = vector.shape_cast %49 : vector<8x8x8xbf16> to vector<64x8xbf16>
    %c5 = arith.constant 5 : index
    %c0_26 = arith.constant 0 : index
    %c0_27 = arith.constant 0 : index
    %51 = vector.load %arg5[%c5, %c0_26, %c0_27] : memref<9x8x8xbf16, #tpu.memory_space<vmem>>, vector<1x8x8xbf16>
    %52 = vector.shape_cast %51 : vector<1x8x8xbf16> to vector<8x8xbf16>
    %cst_28 = arith.constant dense<0.000000e+00> : vector<64x8xf32>
    %53 = tpu.matmul %50, %52, %cst_28 {dimension_numbers = #tpu.dot_dimension_numbers<[1], [0], [0], [1], [0, 0, 1, 1], [], []>} : vector<64x8xbf16>, vector<8x8xbf16>, vector<64x8xf32> -> vector<64x8xf32>
    %54 = arith.addf %48, %53 : vector<64x8xf32>
    %55 = vector.extract_strided_slice %17 {offsets = [2, 0, 0], sizes = [8, 8, 8], strides = [1, 1, 1]} : vector<10x10x8xbf16> to vector<8x8x8xbf16>
    %56 = vector.shape_cast %55 : vector<8x8x8xbf16> to vector<64x8xbf16>
    %c6 = arith.constant 6 : index
    %c0_29 = arith.constant 0 : index
    %c0_30 = arith.constant 0 : index
    %57 = vector.load %arg5[%c6, %c0_29, %c0_30] : memref<9x8x8xbf16, #tpu.memory_space<vmem>>, vector<1x8x8xbf16>
    %58 = vector.shape_cast %57 : vector<1x8x8xbf16> to vector<8x8xbf16>
    %cst_31 = arith.constant dense<0.000000e+00> : vector<64x8xf32>
    %59 = tpu.matmul %56, %58, %cst_31 {dimension_numbers = #tpu.dot_dimension_numbers<[1], [0], [0], [1], [0, 0, 1, 1], [], []>} : vector<64x8xbf16>, vector<8x8xbf16>, vector<64x8xf32> -> vector<64x8xf32>
    %60 = arith.addf %54, %59 : vector<64x8xf32>
    %61 = vector.extract_strided_slice %17 {offsets = [2, 1, 0], sizes = [8, 8, 8], strides = [1, 1, 1]} : vector<10x10x8xbf16> to vector<8x8x8xbf16>
    %62 = vector.shape_cast %61 : vector<8x8x8xbf16> to vector<64x8xbf16>
    %c7 = arith.constant 7 : index
    %c0_32 = arith.constant 0 : index
    %c0_33 = arith.constant 0 : index
    %63 = vector.load %arg5[%c7, %c0_32, %c0_33] : memref<9x8x8xbf16, #tpu.memory_space<vmem>>, vector<1x8x8xbf16>
    %64 = vector.shape_cast %63 : vector<1x8x8xbf16> to vector<8x8xbf16>
    %cst_34 = arith.constant dense<0.000000e+00> : vector<64x8xf32>
    %65 = tpu.matmul %62, %64, %cst_34 {dimension_numbers = #tpu.dot_dimension_numbers<[1], [0], [0], [1], [0, 0, 1, 1], [], []>} : vector<64x8xbf16>, vector<8x8xbf16>, vector<64x8xf32> -> vector<64x8xf32>
    %66 = arith.addf %60, %65 : vector<64x8xf32>
    %67 = vector.extract_strided_slice %17 {offsets = [2, 2, 0], sizes = [8, 8, 8], strides = [1, 1, 1]} : vector<10x10x8xbf16> to vector<8x8x8xbf16>
    %68 = vector.shape_cast %67 : vector<8x8x8xbf16> to vector<64x8xbf16>
    %c8 = arith.constant 8 : index
    %c0_35 = arith.constant 0 : index
    %c0_36 = arith.constant 0 : index
    %69 = vector.load %arg5[%c8, %c0_35, %c0_36] : memref<9x8x8xbf16, #tpu.memory_space<vmem>>, vector<1x8x8xbf16>
    %70 = vector.shape_cast %69 : vector<1x8x8xbf16> to vector<8x8xbf16>
    %cst_37 = arith.constant dense<0.000000e+00> : vector<64x8xf32>
    %71 = tpu.matmul %68, %70, %cst_37 {dimension_numbers = #tpu.dot_dimension_numbers<[1], [0], [0], [1], [0, 0, 1, 1], [], []>} : vector<64x8xbf16>, vector<8x8xbf16>, vector<64x8xf32> -> vector<64x8xf32>
    %72 = arith.addf %66, %71 : vector<64x8xf32>
    %73 = arith.truncf %72 : vector<64x8xf32> to vector<64x8xbf16>
    %c0_38 = arith.constant 0 : index
    %c0_39 = arith.constant 0 : index
    %c0_40 = arith.constant 0 : index
    %74 = vector.load %arg6[%c0_38, %c0_39, %c0_40] : memref<1x64x8xbf16, #tpu.memory_space<vmem>>, vector<1x64x8xbf16>
    %75 = vector.shape_cast %74 : vector<1x64x8xbf16> to vector<64x8xbf16>
    %76 = vector.shape_cast %73 : vector<64x8xbf16> to vector<1x64x8xbf16>
    tpu.vector_store %arg6[%c0_38, %c0_39, %c0_40], %76 {strides = array<i32>} : memref<1x64x8xbf16, #tpu.memory_space<vmem>>, vector<1x64x8xbf16>,
    %c0_i32 = arith.constant 0 : i32
    %77 = arith.cmpi eq, %arg1, %c0_i32 : i32
    %78 = arith.extui %77 : i1 to i32
    %c0_i32_41 = arith.constant 0 : i32
    %79 = arith.cmpi ne, %78, %c0_i32_41 : i32
    scf.if %79 {
      %cst_56 = arith.constant 0.000000e+00 : f32
      %93 = vector.broadcast %cst_56 : f32 to vector<1x2x8xf32>
      %c0_57 = arith.constant 0 : index
      %c0_58 = arith.constant 0 : index
      %c0_59 = arith.constant 0 : index
      %94 = vector.load %arg7[%c0_57, %c0_58, %c0_59] : memref<1x2x8xf32, #tpu.memory_space<vmem>>, vector<1x2x8xf32>
      tpu.vector_store %arg7[%c0_57, %c0_58, %c0_59], %93 {strides = array<i32>} : memref<1x2x8xf32, #tpu.memory_space<vmem>>, vector<1x2x8xf32>,
    } else {
    }
    %c0_42 = arith.constant 0 : index
    %c0_43 = arith.constant 0 : index
    %c0_44 = arith.constant 0 : index
    %80 = vector.load %arg7[%c0_42, %c0_43, %c0_44] : memref<1x2x8xf32, #tpu.memory_space<vmem>>, vector<1x1x8xf32>
    %cst_45 = arith.constant dense<0.000000e+00> : vector<8xf32>
    %81 = vector.multi_reduction <add>, %72, %cst_45 [0] : vector<64x8xf32> to vector<8xf32>
    %82 = vector.shape_cast %81 : vector<8xf32> to vector<1x8xf32>
    %83 = vector.shape_cast %82 : vector<1x8xf32> to vector<1x1x8xf32>
    %84 = arith.addf %80, %83 : vector<1x1x8xf32>
    %c0_46 = arith.constant 0 : index
    %c0_47 = arith.constant 0 : index
    %c0_48 = arith.constant 0 : index
    %85 = vector.load %arg7[%c0_46, %c0_47, %c0_48] : memref<1x2x8xf32, #tpu.memory_space<vmem>>, vector<1x1x8xf32>
    tpu.vector_store %arg7[%c0_46, %c0_47, %c0_48], %84 {strides = array<i32>} : memref<1x2x8xf32, #tpu.memory_space<vmem>>, vector<1x1x8xf32>,
    %c0_49 = arith.constant 0 : index
    %c1_50 = arith.constant 1 : index
    %c0_51 = arith.constant 0 : index
    %86 = vector.load %arg7[%c0_49, %c1_50, %c0_51] : memref<1x2x8xf32, #tpu.memory_space<vmem>>, vector<1x1x8xf32>
    %87 = arith.mulf %72, %72 : vector<64x8xf32>
    %cst_52 = arith.constant dense<0.000000e+00> : vector<8xf32>
    %88 = vector.multi_reduction <add>, %87, %cst_52 [0] : vector<64x8xf32> to vector<8xf32>
    %89 = vector.shape_cast %88 : vector<8xf32> to vector<1x8xf32>
    %90 = vector.shape_cast %89 : vector<1x8xf32> to vector<1x1x8xf32>
    %91 = arith.addf %86, %90 : vector<1x1x8xf32>
    %c0_53 = arith.constant 0 : index
    %c1_54 = arith.constant 1 : index
    %c0_55 = arith.constant 0 : index
    %92 = vector.load %arg7[%c0_53, %c1_54, %c0_55] : memref<1x2x8xf32, #tpu.memory_space<vmem>>, vector<1x1x8xf32>
    tpu.vector_store %arg7[%c0_53, %c1_54, %c0_55], %91 {strides = array<i32>} : memref<1x2x8xf32, #tpu.memory_space<vmem>>, vector<1x1x8xf32>,
    return
  }
  func.func @transform_0(%arg0: i32, %arg1: i32) -> (i32, i32, i32, i32) {
    %c1_i32 = arith.constant 1 : i32
    %0 = arith.muli %arg0, %c1_i32 : i32
    %1 = arith.addi %0, %arg1 : i32
    %c0_i32 = arith.constant 0 : i32
    %c0_i32_0 = arith.constant 0 : i32
    %c0_i32_1 = arith.constant 0 : i32
    %c0_i32_2 = arith.constant 0 : i32
    return %1, %c0_i32, %c0_i32_0, %c0_i32_1 : i32, i32, i32, i32
  }
  func.func @transform_1(%arg0: i32, %arg1: i32) -> (i32, i32) {
    %c0_i32 = arith.constant 0 : i32
    %c0_i32_0 = arith.constant 0 : i32
    %c0_i32_1 = arith.constant 0 : i32
    return %c0_i32, %c0_i32_0 : i32, i32
  }
  func.func @transform_2(%arg0: i32, %arg1: i32) -> (i32, i32) {
    %c0_i32 = arith.constant 0 : i32
    %c0_i32_0 = arith.constant 0 : i32
    %c0_i32_1 = arith.constant 0 : i32
    return %c0_i32, %c0_i32_0 : i32, i32
  }
  func.func @transform_3(%arg0: i32, %arg1: i32) -> (i32, i32, i32) {
    %c0_i32 = arith.constant 0 : i32
    %c0_i32_0 = arith.constant 0 : i32
    %c0_i32_1 = arith.constant 0 : i32
    %c0_i32_2 = arith.constant 0 : i32
    return %c0_i32, %c0_i32_0, %c0_i32_1 : i32, i32, i32
  }
  func.func @transform_4(%arg0: i32, %arg1: i32) -> (i32, i32, i32) {
    %c1_i32 = arith.constant 1 : i32
    %0 = arith.muli %arg0, %c1_i32 : i32
    %1 = arith.addi %0, %arg1 : i32
    %c0_i32 = arith.constant 0 : i32
    %c0_i32_0 = arith.constant 0 : i32
    %c0_i32_1 = arith.constant 0 : i32
    return %1, %c0_i32, %c0_i32_0 : i32, i32, i32
  }
  func.func @transform_5(%arg0: i32, %arg1: i32) -> (i32, i32, i32) {
    %c0_i32 = arith.constant 0 : i32
    %c0_i32_0 = arith.constant 0 : i32
    %c0_i32_1 = arith.constant 0 : i32
    return %arg0, %c0_i32, %c0_i32_0 : i32, i32, i32
  }
}

module attributes {stable_mosaic.version = 11 : i64} {
  func.func @bn_res_relu_kernel(%arg0: i32, %arg1: memref<64x256xbf16, #tpu.memory_space<vmem>>, %arg2: memref<64x256xbf16, #tpu.memory_space<vmem>>, %arg3: memref<1x256xf32, #tpu.memory_space<vmem>>, %arg4: memref<1x256xf32, #tpu.memory_space<vmem>>, %arg5: memref<64x256xf32, #tpu.memory_space<vmem>>) attributes {dimension_semantics = [#tpu.dimension_semantics<parallel>], iteration_bounds = array<i64: 2>, scalar_prefetch = 0 : i64, scratch_operands = 0 : i64, tpu.core_type = #tpu.core_type<tc>, window_params = [{transform_indices = @transform_0, window_bounds = array<i64: 64, 256>}, {transform_indices = @transform_1, window_bounds = array<i64: 64, 256>}, {pipeline_mode = #tpu.pipeline_mode<synchronous>, transform_indices = @transform_2, window_bounds = array<i64: 1, 256>}, {pipeline_mode = #tpu.pipeline_mode<synchronous>, transform_indices = @transform_3, window_bounds = array<i64: 1, 256>}, {transform_indices = @transform_4, window_bounds = array<i64: 64, 256>}]} {
    %c0 = arith.constant 0 : index
    %c0_0 = arith.constant 0 : index
    %0 = vector.load %arg1[%c0, %c0_0] : memref<64x256xbf16, #tpu.memory_space<vmem>>, vector<64x256xbf16>
    %1 = arith.extf %0 : vector<64x256xbf16> to vector<64x256xf32>
    %c0_1 = arith.constant 0 : index
    %c0_2 = arith.constant 0 : index
    %2 = vector.load %arg3[%c0_1, %c0_2] : memref<1x256xf32, #tpu.memory_space<vmem>>, vector<1x256xf32>
    %3 = vector.broadcast %2 : vector<1x256xf32> to vector<64x256xf32>
    %4 = arith.mulf %1, %3 : vector<64x256xf32>
    %c0_3 = arith.constant 0 : index
    %c0_4 = arith.constant 0 : index
    %5 = vector.load %arg4[%c0_3, %c0_4] : memref<1x256xf32, #tpu.memory_space<vmem>>, vector<1x256xf32>
    %6 = vector.broadcast %5 : vector<1x256xf32> to vector<64x256xf32>
    %7 = arith.addf %4, %6 : vector<64x256xf32>
    %c0_5 = arith.constant 0 : index
    %c0_6 = arith.constant 0 : index
    %8 = vector.load %arg2[%c0_5, %c0_6] : memref<64x256xbf16, #tpu.memory_space<vmem>>, vector<64x256xbf16>
    %9 = arith.extf %8 : vector<64x256xbf16> to vector<64x256xf32>
    %10 = arith.addf %7, %9 : vector<64x256xf32>
    %cst = arith.constant 0.000000e+00 : f32
    %11 = vector.broadcast %cst : f32 to vector<64x256xf32>
    %12 = arith.maximumf %10, %11 : vector<64x256xf32>
    %c0_7 = arith.constant 0 : index
    %c0_8 = arith.constant 0 : index
    %13 = vector.load %arg5[%c0_7, %c0_8] : memref<64x256xf32, #tpu.memory_space<vmem>>, vector<64x256xf32>
    tpu.vector_store %arg5[%c0_7, %c0_8], %12 {strides = array<i32>} : memref<64x256xf32, #tpu.memory_space<vmem>>, vector<64x256xf32>,
    return
  }
  func.func @transform_0(%arg0: i32) -> (i32, i32) {
    %c0_i32 = arith.constant 0 : i32
    %c0_i32_0 = arith.constant 0 : i32
    return %arg0, %c0_i32 : i32, i32
  }
  func.func @transform_1(%arg0: i32) -> (i32, i32) {
    %c0_i32 = arith.constant 0 : i32
    %c0_i32_0 = arith.constant 0 : i32
    return %arg0, %c0_i32 : i32, i32
  }
  func.func @transform_2(%arg0: i32) -> (i32, i32) {
    %c0_i32 = arith.constant 0 : i32
    %c0_i32_0 = arith.constant 0 : i32
    %c0_i32_1 = arith.constant 0 : i32
    return %c0_i32, %c0_i32_0 : i32, i32
  }
  func.func @transform_3(%arg0: i32) -> (i32, i32) {
    %c0_i32 = arith.constant 0 : i32
    %c0_i32_0 = arith.constant 0 : i32
    %c0_i32_1 = arith.constant 0 : i32
    return %c0_i32, %c0_i32_0 : i32, i32
  }
  func.func @transform_4(%arg0: i32) -> (i32, i32) {
    %c0_i32 = arith.constant 0 : i32
    %c0_i32_0 = arith.constant 0 : i32
    return %arg0, %c0_i32 : i32, i32
  }
}

</mosaic_0001>

<llo_original>
// kernel: bottleneck_forward.4
$region0: #{bottleneck_forward.4}
  #allocation0 [shape = 'u32[]', space=smem, size = 0x4, offset = 0x4, fixed_abs, tag = 'smem constant byte address 0x4 - core index']
  #allocation1 [shape = 'u32[72,128]{1,0:T(1,128)}', space=vmem, size = 0x9000, scoped, tag = 'internal scratch']
  %s0 = inlined_call_operand.vmem [shape: bf16[128,256], index: 0, kind: input, shape index: {}]
  %s1 = inlined_call_operand.vmem [shape: bf16[256,8], index: 1, kind: input, shape index: {}]
  %s2 = inlined_call_operand.vmem [shape: bf16[128,8], index: 2, kind: output, shape index: {0}]
  %s3 = inlined_call_operand.vmem [shape: f32[2,2,8], index: 3, kind: output, shape index: {1}]
  %4 = xla_tuple %s2, %s3
  %s5 = sld [smem:[#allocation0]]
  $region53: #{bottleneck_forward.4} parent=0
    _
  %s7 = ssub.s32 1, %s5
  %s8 = scalar_select 0, %s7, %s5
  loop: start=0, step=1, limit=4
  $region2: #{bottleneck_forward.4} parent=0 // loop_pre_header
    _
  $region3: #{bottleneck_forward.4} parent=0 // loop_header
    %s10 = sphi 0, %s14
    %p11 = scmp.ge.s32.totalorder %s10, 4
    %s17 = sphi 0, %s29
    %s18 = sphi 0, %s25
    %s19 = sphi 0, %s17
    %s20 = sphi 0, %s18
    %s21 = sphi 0, %s19
    %s22 = sphi 0, %s20
    %s34 = sphi 0, %s36
    %s37 = sphi 0, %s34
    %s38 = sphi 0, %s37
    %s54 = sphi 0, %s38
    %s58 = sphi 0, %s58
    %s60 = sphi 0, %s58
    %s61 = sphi 0, %s60
    %s75 = sphi 0, %s61
    %s83 = sphi 0, %s85
    %s86 = sphi 0, %s83
    %s87 = sphi 0, %s86
    %s103 = sphi 0, %s87
    %s109 = sphi 0, %s111
    %s112 = sphi 0, %s109
    %s113 = sphi 0, %s112
    %s129 = sphi 0, %s113
  $region4: #{bottleneck_forward.4} parent=0 // loop_header_branch
    %13 = sbr.rel (%p11) target = $region8
  $region5: #{bottleneck_forward.4} parent=0 // loop_body
    %s15 = ssub.s32 %s10, 1
    %s16 = ssub.s32 %s10, 2
    %s23 = sadd.s32 1, %s18
    %p24 = scmp.ge.s32.totalorder %s23, 1
    %s25 = scalar_select %p24, 0, %s23
    %s26 = sadd.s32 1, %s17
    %s27 = scalar_select %p24, %s26, %s17
    %p28 = scmp.ge.s32.totalorder %s27, 2
    %s29 = scalar_select %p28, 0, %s27
    %s30 = sadd.s32 %s17, %s18
    %s31 = sadd.s32 %s29, %s25
    %s32 = ssub.s32 %s30, %s31
    %p33 = scmp.eq.s32.totalorder %s32, 0
    %s35 = sadd.s32 %s34, 1
    %s36 = scalar_select %p33, %s34, %s35
    %p39 = pneg %p33
    %p40 = scmp.eq.s32.totalorder %s10, 1
    %p41 = por %p39, %p40
    %p42 = scmp.ne.s32.totalorder %s34, %s37
    %p43 = scmp.eq.s32.totalorder %s10, 0
    %p44 = por %p42, %p43
    %p45 = scmp.ne.s32.totalorder %s34, %s37
    %p46 = scmp.eq.s32.totalorder %s15, 1
    %p47 = por %p45, %p46
    %p48 = scmp.ne.s32.totalorder %s37, %s38
    %p49 = scmp.eq.s32.totalorder %s15, 0
    %p50 = por %p48, %p49
    %p51 = scmp.ne.s32.totalorder %s37, %s38
    %p52 = scmp.eq.s32.totalorder %s16, 1
    %p53 = por %p51, %p52
    %p55 = scmp.ne.s32.totalorder %s38, %s54
    %p56 = scmp.eq.s32.totalorder %s16, 0
    %p57 = por %p55, %p56
    %s59 = sadd.s32 %s58, 1
    %p62 = scmp.eq.s32.totalorder %s10, 1
    %p63 = scmp.ne.s32.totalorder %s58, %s60
    %p64 = scmp.eq.s32.totalorder %s10, 0
    %p65 = por %p63, %p64
    %p66 = scmp.ne.s32.totalorder %s58, %s60
    %p67 = scmp.eq.s32.totalorder %s15, 1
    %p68 = por %p66, %p67
    %p69 = scmp.ne.s32.totalorder %s60, %s61
    %p70 = scmp.eq.s32.totalorder %s15, 0
    %p71 = por %p69, %p70
    %p72 = scmp.ne.s32.totalorder %s60, %s61
    %p73 = scmp.eq.s32.totalorder %s16, 1
    %p74 = por %p72, %p73
    %p76 = scmp.ne.s32.totalorder %s61, %s75
    %p77 = scmp.eq.s32.totalorder %s16, 0
    %p78 = por %p76, %p77
    %s79 = sadd.s32 %s17, %s18
    %s80 = sadd.s32 %s29, %s25
    %s81 = ssub.s32 %s79, %s80
    %p82 = scmp.eq.s32.totalorder %s81, 0
    %s84 = sadd.s32 %s83, 1
    %s85 = scalar_select %p82, %s83, %s84
    %p88 = pneg %p82
    %p89 = scmp.eq.s32.totalorder %s10, 1
    %p90 = por %p88, %p89
    %p91 = scmp.ne.s32.totalorder %s83, %s86
    %p92 = scmp.eq.s32.totalorder %s10, 0
    %p93 = por %p91, %p92
    %p94 = scmp.ne.s32.totalorder %s83, %s86
    %p95 = scmp.eq.s32.totalorder %s15, 1
    %p96 = por %p94, %p95
    %p97 = scmp.ne.s32.totalorder %s86, %s87
    %p98 = scmp.eq.s32.totalorder %s15, 0
    %p99 = por %p97, %p98
    %p100 = scmp.ne.s32.totalorder %s86, %s87
    %p101 = scmp.eq.s32.totalorder %s16, 1
    %p102 = por %p100, %p101
    %p104 = scmp.ne.s32.totalorder %s87, %s103
    %p105 = scmp.eq.s32.totalorder %s16, 0
    %p106 = por %p104, %p105
    %s107 = ssub.s32 %s17, %s29
    %p108 = scmp.eq.s32.totalorder %s107, 0
    %s110 = sadd.s32 %s109, 1
    %s111 = scalar_select %p108, %s109, %s110
    %p114 = pneg %p108
    %p115 = scmp.eq.s32.totalorder %s10, 1
    %p116 = por %p114, %p115
    %p117 = scmp.ne.s32.totalorder %s109, %s112
    %p118 = scmp.eq.s32.totalorder %s10, 0
    %p119 = por %p117, %p118
    %p120 = scmp.ne.s32.totalorder %s109, %s112
    %p121 = scmp.eq.s32.totalorder %s15, 1
    %p122 = por %p120, %p121
    %p123 = scmp.ne.s32.totalorder %s112, %s113
    %p124 = scmp.eq.s32.totalorder %s15, 0
    %p125 = por %p123, %p124
    %p126 = scmp.ne.s32.totalorder %s112, %s113
    %p127 = scmp.eq.s32.totalorder %s16, 1
    %p128 = por %p126, %p127
    %p130 = scmp.ne.s32.totalorder %s113, %s129
    %p131 = scmp.eq.s32.totalorder %s16, 0
    %p132 = por %p130, %p131
    %p133 = scmp.le.s32.totalorder 1, %s10
    %p134 = scmp.lt.s32.totalorder %s10, 3
    %p135 = pnand %p133, %p134
    %p136 = pneg %p135
    // Predicated region
    $region9: #{bottleneck_forward.4} parent=5 // pred_check
      _
    $region10: #{bottleneck_forward.4} parent=5 // pred_check_branch
      %138 = sbr.rel (%p135) target = $region12
    $region11: #{bottleneck_forward.4} parent=5 // pred_region
      %s139 = ssub.s32 %s10, 1
      // Predicated region
      $region13: #{bottleneck_forward.4} parent=11 // pred_check
        %p140 = pneg %p71
      $region14: #{bottleneck_forward.4} parent=11 // pred_check_branch
        %142 = sbr.rel (%p140) target = $region16
      $region15: #{bottleneck_forward.4} parent=11 // pred_region
        _
      $region16: #{bottleneck_forward.4} parent=11 // pred_fallthru
        _
    $region12: #{bottleneck_forward.4} parent=5 // pred_fallthru
      _
    %p143 = scmp.lt.s32.totalorder %s10, 2
    // Predicated region
    $region17: #{bottleneck_forward.4} parent=5 // pred_check
      %p144 = pneg %p143
    $region18: #{bottleneck_forward.4} parent=5 // pred_check_branch
      %146 = sbr.rel (%p144) target = $region20
    $region19: #{bottleneck_forward.4} parent=5 // pred_region
      // Predicated region
      $region21: #{bottleneck_forward.4} parent=19 // pred_check
        %p147 = pneg %p44
      $region22: #{bottleneck_forward.4} parent=19 // pred_check_branch
        %149 = sbr.rel (%p147) target = $region24
      $region23: #{bottleneck_forward.4} parent=19 // pred_region
        %s150 = sadd.s32 %s17, %s18
        %s151 = smul.u32 8, %s150
        %p152 = scmp.lt.s32.totalorder %s151, 15
        %s153 = scalar_select %p152, %s151, 15
        %s154 = smul.addr %s153, 2
        %s155 = smul.addr %s154, 4
        %s156 = scalar_lea.vmem %s0, %s155
        %s157 = sadd.s32 %s17, %s18
        %s158 = smul.u32 8, %s157
      $region24: #{bottleneck_forward.4} parent=19 // pred_fallthru
        _
    $region20: #{bottleneck_forward.4} parent=5 // pred_fallthru
      _
    %p159 = scmp.le.s32.totalorder 1, %s10
    %p160 = scmp.lt.s32.totalorder %s10, 3
    %p161 = pnand %p159, %p160
    %p162 = pneg %p161
    // Predicated region
    $region25: #{bottleneck_forward.4} parent=5 // pred_check
      _
    $region26: #{bottleneck_forward.4} parent=5 // pred_check_branch
      %164 = sbr.rel (%p161) target = $region28
    $region27: #{bottleneck_forward.4} parent=5 // pred_region
      %s165 = ssub.s32 %s10, 1
      %s166 = sadd.s32 %s19, %s20
      %s167 = smul.u32 8, %s166
      %p168 = scmp.lt.s32.totalorder %s167, 15
      %s169 = scalar_select %p168, %s167, 15
      %s170 = smul.addr %s169, 2
      %s171 = smul.addr %s170, 4
      %s172 = scalar_lea.vmem %s0, %s171
      %p173 = pneg %p50
      %p174 = pneg %p47
      %p175 = pneg %p71
      %p176 = pneg %p68
      %p177 = pneg %p99
      %p178 = pneg %p96
      %s179 = sadd.s32 %s19, %s20
      %s180 = smul.u32 8, %s179
      %p181 = scmp.lt.s32.totalorder %s180, 15
      %s182 = scalar_select %p181, %s180, 15
      %s183 = smul.addr %s182, 4
      %s184 = scalar_lea.vmem %s2, %s183
      %p185 = pneg %p125
      %p186 = pneg %p122
      %p187 = scmp.lt.s32.totalorder %s19, 1
      %s188 = scalar_select %p187, %s19, 1
      %s189 = smul.addr %s188, 2
      %s190 = scalar_lea.vmem %s3, %s189
      %s191 = sadd.s32 %s19, %s20
      %s192 = smul.u32 8, %s191
      %p193 = scmp.lt.s32.totalorder %s192, 15
      %s194 = scalar_select %p193, %s192, 15
      %s195 = smul.addr %s194, 2
      %s196 = smul.addr %s195, 4
      %s197 = scalar_lea.vmem %s0, %s196
      %s198 = sadd.s32 %s19, %s20
      %s199 = smul.u32 8, %s198
      %s200 = sadd.s32 %s19, %s20
      %s201 = smul.u32 8, %s200
      %p202 = scmp.lt.s32.totalorder %s201, 15
      %s203 = scalar_select %p202, %s201, 15
      %s204 = smul.addr %s203, 4
      %s205 = scalar_lea.vmem %s2, %s204
      %s206 = sadd.s32 %s19, %s20
      %s207 = smul.u32 8, %s206
      %p208 = scmp.lt.s32.totalorder %s19, 1
      %s209 = scalar_select %p208, %s19, 1
      %s210 = smul.addr %s209, 2
      %s211 = scalar_lea.vmem %s3, %s210
      %v212 = vld [vmem:[%s197] sm:$0xff]
      %v213 = vld [vmem:[%s197 + $0x8] sm:$0xff]
      %v214 = vld [vmem:[%s197 + $0x10] sm:$0xff]
      %v215 = vld [vmem:[%s197 + $0x18] sm:$0xff]
      %v216 = vld [vmem:[%s197 + $0x20] sm:$0xff]
      %v217 = vld [vmem:[%s197 + $0x28] sm:$0xff]
      %v218 = vld [vmem:[%s197 + $0x30] sm:$0xff]
      %v219 = vld [vmem:[%s197 + $0x38] sm:$0xff]
      %v220 = vld [vmem:[%s1] sm:$0xf]
      %v221 = vld [vmem:[%s1 + $0x4] sm:$0xf]
      %v222 = vld [vmem:[%s1 + $0x8] sm:$0xf]
      %v223 = vld [vmem:[%s1 + $0xc] sm:$0xf]
      %v224 = vld [vmem:[%s1 + $0x10] sm:$0xf]
      %v225 = vld [vmem:[%s1 + $0x14] sm:$0xf]
      %v226 = vld [vmem:[%s1 + $0x18] sm:$0xf]
      %v227 = vld [vmem:[%s1 + $0x1c] sm:$0xf]
      %v228 = vld [vmem:[%s1 + $0x20] sm:$0xf]
      %v229 = vld [vmem:[%s1 + $0x24] sm:$0xf]
      %v230 = vld [vmem:[%s1 + $0x28] sm:$0xf]
      %v231 = vld [vmem:[%s1 + $0x2c] sm:$0xf]
      %v232 = vld [vmem:[%s1 + $0x30] sm:$0xf]
      %v233 = vld [vmem:[%s1 + $0x34] sm:$0xf]
      %v234 = vld [vmem:[%s1 + $0x38] sm:$0xf]
      %v235 = vld [vmem:[%s1 + $0x3c] sm:$0xf]
      %v236 = vld [vmem:[%s1 + $0x40] sm:$0xf]
      %v237 = vld [vmem:[%s1 + $0x44] sm:$0xf]
      %v238 = vld [vmem:[%s1 + $0x48] sm:$0xf]
      %v239 = vld [vmem:[%s1 + $0x4c] sm:$0xf]
      %v240 = vld [vmem:[%s1 + $0x50] sm:$0xf]
      %v241 = vld [vmem:[%s1 + $0x54] sm:$0xf]
      %v242 = vld [vmem:[%s1 + $0x58] sm:$0xf]
      %v243 = vld [vmem:[%s1 + $0x5c] sm:$0xf]
      %v244 = vld [vmem:[%s1 + $0x60] sm:$0xf]
      %v245 = vld [vmem:[%s1 + $0x64] sm:$0xf]
      %v246 = vld [vmem:[%s1 + $0x68] sm:$0xf]
      %v247 = vld [vmem:[%s1 + $0x6c] sm:$0xf]
      %v248 = vld [vmem:[%s1 + $0x70] sm:$0xf]
      %v249 = vld [vmem:[%s1 + $0x74] sm:$0xf]
      %v250 = vld [vmem:[%s1 + $0x78] sm:$0xf]
      %v251 = vld [vmem:[%s1 + $0x7c] sm:$0xf]
      %v260 = vunpack.c.l.b16 %v212
      %v261 = vunpack.c.h.b16 %v212
      %v262 = vunpack.c.l.b16 %v213
      %v263 = vunpack.c.h.b16 %v213
      %v264 = vunpack.c.l.b16 %v214
      %v265 = vunpack.c.h.b16 %v214
      %v266 = vunpack.c.l.b16 %v215
      %v267 = vunpack.c.h.b16 %v215
      %v268 = vunpack.c.l.b16 %v216
      %v269 = vunpack.c.h.b16 %v216
      %v270 = vunpack.c.l.b16 %v217
      %v271 = vunpack.c.h.b16 %v217
      %v272 = vunpack.c.l.b16 %v218
      %v273 = vunpack.c.h.b16 %v218
      %v274 = vunpack.c.l.b16 %v219
      %v275 = vunpack.c.h.b16 %v219
      %v276 = vpack.c.b16 %v262, %v260
      %v277 = vpack.c.b16 %v263, %v261
      %v278 = vpack.c.b16 %v266, %v264
      %v279 = vpack.c.b16 %v267, %v265
      %v280 = vpack.c.b16 %v270, %v268
      %v281 = vpack.c.b16 %v271, %v269
      %v282 = vpack.c.b16 %v274, %v272
      %v283 = vpack.c.b16 %v275, %v273
      %v324 = vunpack.c.l.b16 %v220
      %v325 = vunpack.c.l.b16 %v221
      %v326 = vunpack.c.l.b16 %v222
      %v327 = vunpack.c.l.b16 %v223
      %v328 = vunpack.c.l.b16 %v224
      %v329 = vunpack.c.l.b16 %v225
      %v330 = vunpack.c.l.b16 %v226
      %v331 = vunpack.c.l.b16 %v227
      %v332 = vunpack.c.l.b16 %v228
      %v333 = vunpack.c.l.b16 %v229
      %v334 = vunpack.c.l.b16 %v230
      %v335 = vunpack.c.l.b16 %v231
      %v336 = vunpack.c.l.b16 %v232
      %v337 = vunpack.c.l.b16 %v233
      %v338 = vunpack.c.l.b16 %v234
      %v339 = vunpack.c.l.b16 %v235
      %v340 = vunpack.c.l.b16 %v236
      %v341 = vunpack.c.l.b16 %v237
      %v342 = vunpack.c.l.b16 %v238
      %v343 = vunpack.c.l.b16 %v239
      %v344 = vunpack.c.l.b16 %v240
      %v345 = vunpack.c.l.b16 %v241
      %v346 = vunpack.c.l.b16 %v242
      %v347 = vunpack.c.l.b16 %v243
      %v348 = vunpack.c.l.b16 %v244
      %v349 = vunpack.c.l.b16 %v245
      %v350 = vunpack.c.l.b16 %v246
      %v351 = vunpack.c.l.b16 %v247
      %v352 = vunpack.c.l.b16 %v248
      %v353 = vunpack.c.l.b16 %v249
      %v354 = vunpack.c.l.b16 %v250
      %v355 = vunpack.c.l.b16 %v251
      %v356 = vpack.c.b16 %v325, %v324
      %v357 = vpack.c.b16 %v327, %v326
      %v358 = vpack.c.b16 %v329, %v328
      %v359 = vpack.c.b16 %v331, %v330
      %v360 = vpack.c.b16 %v333, %v332
      %v361 = vpack.c.b16 %v335, %v334
      %v362 = vpack.c.b16 %v337, %v336
      %v363 = vpack.c.b16 %v339, %v338
      %v364 = vpack.c.b16 %v341, %v340
      %v365 = vpack.c.b16 %v343, %v342
      %v366 = vpack.c.b16 %v345, %v344
      %v367 = vpack.c.b16 %v347, %v346
      %v368 = vpack.c.b16 %v349, %v348
      %v369 = vpack.c.b16 %v351, %v350
      %v370 = vpack.c.b16 %v353, %v352
      %v371 = vpack.c.b16 %v355, %v354
      %388 = vmatpush.bf16.msra.mxu0 %v363
      %389 = vmatpush.bf16.msra.mxu0 %v362
      %390 = vmatpush.bf16.msra.mxu0 %v361
      %391 = vmatpush.bf16.msra.mxu0 %v360
      %392 = vmatpush.bf16.msra.mxu0 %v359
      %393 = vmatpush.bf16.msra.mxu0 %v358
      %394 = vmatpush.bf16.msra.mxu0 %v357
      %395 = vmatpush.bf16.msra.mxu0 %v356
      %396 = vmatmul.bf16.gmra.mxu0 %v276
      %v397 = vpop.f32.mrf.mxu0
      %v398 = vadd.f32 0.0, %v397
      %v399 = vpop.f32.mrf.mxu0
      %v400 = vadd.f32 0.0, %v399
      %401 = vmatmul.bf16.gmra.mxu0 %v278
      %v402 = vpop.f32.mrf.mxu0
      %v403 = vadd.f32 0.0, %v402
      %v404 = vpop.f32.mrf.mxu0
      %v405 = vadd.f32 0.0, %v404
      %406 = vmatmul.bf16.gmra.mxu0 %v280
      %v407 = vpop.f32.mrf.mxu0
      %v408 = vadd.f32 0.0, %v407
      %v409 = vpop.f32.mrf.mxu0
      %v410 = vadd.f32 0.0, %v409
      %411 = vmatmul.bf16.gmra.mxu0 %v282
      %v412 = vpop.f32.mrf.mxu0
      %v413 = vadd.f32 0.0, %v412
      %v414 = vpop.f32.mrf.mxu0
      %v415 = vadd.f32 0.0, %v414
      %416 = vdwg.mxu0
      %417 = vmatpush.bf16.msra.mxu0 %v371
      %418 = vmatpush.bf16.msra.mxu0 %v370
      %419 = vmatpush.bf16.msra.mxu0 %v369
      %420 = vmatpush.bf16.msra.mxu0 %v368
      %421 = vmatpush.bf16.msra.mxu0 %v367
      %422 = vmatpush.bf16.msra.mxu0 %v366
      %423 = vmatpush.bf16.msra.mxu0 %v365
      %424 = vmatpush.bf16.msra.mxu0 %v364
      %425 = vmatmul.bf16.gmra.mxu0 %v277
      %v426 = vpop.f32.mrf.mxu0
      %v427 = vadd.f32 %v398, %v426
      %v428 = vpop.f32.mrf.mxu0
      %v429 = vadd.f32 %v400, %v428
      %430 = vmatmul.bf16.gmra.mxu0 %v279
      %v431 = vpop.f32.mrf.mxu0
      %v432 = vadd.f32 %v403, %v431
      %v433 = vpop.f32.mrf.mxu0
      %v434 = vadd.f32 %v405, %v433
      %435 = vmatmul.bf16.gmra.mxu0 %v281
      %v436 = vpop.f32.mrf.mxu0
      %v437 = vadd.f32 %v408, %v436
      %v438 = vpop.f32.mrf.mxu0
      %v439 = vadd.f32 %v410, %v438
      %440 = vmatmul.bf16.gmra.mxu0 %v283
      %v441 = vpop.f32.mrf.mxu0
      %v442 = vadd.f32 %v413, %v441
      %v443 = vpop.f32.mrf.mxu0
      %v444 = vadd.f32 %v415, %v443
      %445 = vdwg.mxu0
      %v446 = vpack.c.bf16 %v427, %v427
      %v447 = vpack.c.bf16 %v429, %v429
      %v448 = vpack.c.bf16 %v432, %v432
      %v449 = vpack.c.bf16 %v434, %v434
      %v450 = vpack.c.bf16 %v437, %v437
      %v451 = vpack.c.bf16 %v439, %v439
      %v452 = vpack.c.bf16 %v442, %v442
      %v453 = vpack.c.bf16 %v444, %v444
      %vm454 = vcmask 60416
      %455 = vst.msk [vmem:[%s205] sm:$0xf] %vm454, %v446
      %456 = vst.msk [vmem:[%s205 + $0x4] sm:$0xf] %vm454, %v447
      %457 = vst.msk [vmem:[%s205 + $0x8] sm:$0xf] %vm454, %v448
      %458 = vst.msk [vmem:[%s205 + $0xc] sm:$0xf] %vm454, %v449
      %459 = vst.msk [vmem:[%s205 + $0x10] sm:$0xf] %vm454, %v450
      %460 = vst.msk [vmem:[%s205 + $0x14] sm:$0xf] %vm454, %v451
      %461 = vst.msk [vmem:[%s205 + $0x18] sm:$0xf] %vm454, %v452
      %462 = vst.msk [vmem:[%s205 + $0x1c] sm:$0xf] %vm454, %v453
      %p463 = scmp.eq.s32.totalorder %s20, 0
      // Predicated region
      $region29: #{bottleneck_forward.4} parent=27 // pred_check
        %p464 = pneg %p463
      $region30: #{bottleneck_forward.4} parent=27 // pred_check_branch
        %466 = sbr.rel (%p464) target = $region32
      $region31: #{bottleneck_forward.4} parent=27 // pred_region
        %vm467 = vcmask 58368
        %468 = vst.msk [vmem:[%s211] sm:$0x3] %vm467, 0.0
      $region32: #{bottleneck_forward.4} parent=27 // pred_fallthru
        _
      %v469 = vld [vmem:[%s211] sm:$0x1]
      %vm470 = vcmask 64512
      %v471 = vsel %vm470, %v427, 0.0
      %v472 = vsel %vm470, %v429, 0.0
      %v473 = vadd.f32 %v471, %v472
      %v474 = vsel %vm470, %v432, 0.0
      %v475 = vadd.f32 %v473, %v474
      %v476 = vsel %vm470, %v434, 0.0
      %v477 = vadd.f32 %v475, %v476
      %v478 = vsel %vm470, %v437, 0.0
      %v479 = vadd.f32 %v477, %v478
      %v480 = vsel %vm470, %v439, 0.0
      %v481 = vadd.f32 %v479, %v480
      %v482 = vsel %vm470, %v442, 0.0
      %v483 = vadd.f32 %v481, %v482
      %v484 = vsel %vm470, %v444, 0.0
      %v485 = vadd.f32 %v483, %v484
      %v486 = vrot.slane %v485, 4
      %v487 = vadd.f32 %v485, %v486
      %v488 = vrot.slane %v487, 2
      %v489 = vadd.f32 %v487, %v488
      %v490 = vrot.slane %v489, 1
      %v491 = vadd.f32 %v489, %v490
      %v492 = vadd.f32 %v469, %v491
      %vm493 = vcmask 57344
      %494 = vst.msk [vmem:[%s211] sm:$0x1] %vm493, %v492
      %v495 = vld [vmem:[%s211 + $0x1] sm:$0x1]
      %v496 = vmul.f32 %v427, %v427
      %v497 = vmul.f32 %v429, %v429
      %v498 = vmul.f32 %v432, %v432
      %v499 = vmul.f32 %v434, %v434
      %v500 = vmul.f32 %v437, %v437
      %v501 = vmul.f32 %v439, %v439
      %v502 = vmul.f32 %v442, %v442
      %v503 = vmul.f32 %v444, %v444
      %v504 = vsel %vm470, %v496, 0.0
      %v505 = vsel %vm470, %v497, 0.0
      %v506 = vadd.f32 %v504, %v505
      %v507 = vsel %vm470, %v498, 0.0
      %v508 = vadd.f32 %v506, %v507
      %v509 = vsel %vm470, %v499, 0.0
      %v510 = vadd.f32 %v508, %v509
      %v511 = vsel %vm470, %v500, 0.0
      %v512 = vadd.f32 %v510, %v511
      %v513 = vsel %vm470, %v501, 0.0
      %v514 = vadd.f32 %v512, %v513
      %v515 = vsel %vm470, %v502, 0.0
      %v516 = vadd.f32 %v514, %v515
      %v517 = vsel %vm470, %v503, 0.0
      %v518 = vadd.f32 %v516, %v517
      %v519 = vrot.slane %v518, 4
      %v520 = vadd.f32 %v518, %v519
      %v521 = vrot.slane %v520, 2
      %v522 = vadd.f32 %v520, %v521
      %v523 = vrot.slane %v522, 1
      %v524 = vadd.f32 %v522, %v523
      %v525 = vadd.f32 %v495, %v524
      %526 = vst.msk [vmem:[%s211 + $0x1] sm:$0x1] %vm493, %v525
      %s527 = sadd.s32 %s19, %s20
      %s528 = smul.u32 8, %s527
      %p529 = scmp.lt.s32.totalorder %s528, 15
      %s530 = scalar_select %p529, %s528, 15
      %s531 = smul.addr %s530, 4
      %s532 = scalar_lea.vmem %s2, %s531
      %p533 = scmp.lt.s32.totalorder %s19, 1
      %s534 = scalar_select %p533, %s19, 1
      %s535 = smul.addr %s534, 2
      %s536 = scalar_lea.vmem %s3, %s535
      // Predicated region
      $region33: #{bottleneck_forward.4} parent=27 // pred_check
        %p537 = pneg %p96
      $region34: #{bottleneck_forward.4} parent=27 // pred_check_branch
        %539 = sbr.rel (%p537) target = $region36
      $region35: #{bottleneck_forward.4} parent=27 // pred_region
        %s540 = sadd.s32 %s19, %s20
        %s541 = smul.u32 8, %s540
      $region36: #{bottleneck_forward.4} parent=27 // pred_fallthru
        _
      // Predicated region
      $region37: #{bottleneck_forward.4} parent=27 // pred_check
        %p542 = pneg %p122
      $region38: #{bottleneck_forward.4} parent=27 // pred_check_branch
        %544 = sbr.rel (%p542) target = $region40
      $region39: #{bottleneck_forward.4} parent=27 // pred_region
        _
      $region40: #{bottleneck_forward.4} parent=27 // pred_fallthru
        _
    $region28: #{bottleneck_forward.4} parent=5 // pred_fallthru
      _
    %p545 = scmp.le.s32.totalorder 2, %s10
    // Predicated region
    $region41: #{bottleneck_forward.4} parent=5 // pred_check
      %p546 = pneg %p545
    $region42: #{bottleneck_forward.4} parent=5 // pred_check_branch
      %548 = sbr.rel (%p546) target = $region44
    $region43: #{bottleneck_forward.4} parent=5 // pred_region
      %s549 = ssub.s32 %s10, 2
      // Predicated region
      $region45: #{bottleneck_forward.4} parent=43 // pred_check
        %p550 = pneg %p102
      $region46: #{bottleneck_forward.4} parent=43 // pred_check_branch
        %552 = sbr.rel (%p550) target = $region48
      $region47: #{bottleneck_forward.4} parent=43 // pred_region
        %s553 = sadd.s32 %s21, %s22
        %s554 = smul.u32 8, %s553
        %p555 = scmp.lt.s32.totalorder %s554, 15
        %s556 = scalar_select %p555, %s554, 15
        %s557 = smul.addr %s556, 4
        %s558 = scalar_lea.vmem %s2, %s557
      $region48: #{bottleneck_forward.4} parent=43 // pred_fallthru
        _
      // Predicated region
      $region49: #{bottleneck_forward.4} parent=43 // pred_check
        %p559 = pneg %p128
      $region50: #{bottleneck_forward.4} parent=43 // pred_check_branch
        %561 = sbr.rel (%p559) target = $region52
      $region51: #{bottleneck_forward.4} parent=43 // pred_region
        %p562 = scmp.lt.s32.totalorder %s21, 1
        %s563 = scalar_select %p562, %s21, 1
        %s564 = smul.addr %s563, 2
        %s565 = scalar_lea.vmem %s3, %s564
      $region52: #{bottleneck_forward.4} parent=43 // pred_fallthru
        _
    $region44: #{bottleneck_forward.4} parent=5 // pred_fallthru
      _
  $region6: #{bottleneck_forward.4} parent=0 // loop_footer
    %s14 = sadd.s32 1, %s10
  $region7: #{bottleneck_forward.4} parent=0 // loop_footer_branch
    %9 = sbr.rel target = $region3
  $region8: #{bottleneck_forward.4} parent=0 // loop_exit
    _

// kernel: bottleneck_forward.6
$region0: #{bottleneck_forward.6}
  #allocation0 [shape = 'u32[]', space=smem, size = 0x4, offset = 0x4, fixed_abs, tag = 'smem constant byte address 0x4 - core index']
  #allocation1 [shape = 'u32[72,128]{1,0:T(1,128)}', space=vmem, size = 0x9000, scoped, tag = 'internal scratch']
  %s0 = inlined_call_operand.vmem [shape: bf16[128,8], index: 0, kind: input, shape index: {}]
  %s1 = inlined_call_operand.vmem [shape: f32[1,8], index: 1, kind: input, shape index: {}]
  %s2 = inlined_call_operand.vmem [shape: f32[1,8], index: 2, kind: input, shape index: {}]
  %s3 = inlined_call_operand.vmem [shape: bf16[8,256], index: 3, kind: input, shape index: {}]
  %s4 = inlined_call_operand.vmem [shape: bf16[128,256], index: 4, kind: output, shape index: {0}]
  %s5 = inlined_call_operand.vmem [shape: f32[2,2,256], index: 5, kind: output, shape index: {1}]
  %6 = xla_tuple %s4, %s5
  %s7 = sld [smem:[#allocation0]]
  $region61: #{bottleneck_forward.6} parent=0
    _
  %s9 = ssub.s32 1, %s7
  %s10 = scalar_select 0, %s9, %s7
  loop: start=0, step=1, limit=4
  $region2: #{bottleneck_forward.6} parent=0 // loop_pre_header
    _
  $region3: #{bottleneck_forward.6} parent=0 // loop_header
    %s12 = sphi 0, %s16
    %p13 = scmp.ge.s32.totalorder %s12, 4
    %s19 = sphi 0, %s31
    %s20 = sphi 0, %s27
    %s21 = sphi 0, %s19
    %s22 = sphi 0, %s20
    %s23 = sphi 0, %s21
    %s24 = sphi 0, %s22
    %s36 = sphi 0, %s38
    %s39 = sphi 0, %s36
    %s40 = sphi 0, %s39
    %s56 = sphi 0, %s40
    %s60 = sphi 0, %s60
    %s62 = sphi 0, %s60
    %s63 = sphi 0, %s62
    %s77 = sphi 0, %s63
    %s81 = sphi 0, %s81
    %s83 = sphi 0, %s81
    %s84 = sphi 0, %s83
    %s98 = sphi 0, %s84
    %s102 = sphi 0, %s102
    %s104 = sphi 0, %s102
    %s105 = sphi 0, %s104
    %s119 = sphi 0, %s105
    %s127 = sphi 0, %s129
    %s130 = sphi 0, %s127
    %s131 = sphi 0, %s130
    %s147 = sphi 0, %s131
    %s153 = sphi 0, %s155
    %s156 = sphi 0, %s153
    %s157 = sphi 0, %s156
    %s173 = sphi 0, %s157
  $region4: #{bottleneck_forward.6} parent=0 // loop_header_branch
    %15 = sbr.rel (%p13) target = $region8
  $region5: #{bottleneck_forward.6} parent=0 // loop_body
    %s17 = ssub.s32 %s12, 1
    %s18 = ssub.s32 %s12, 2
    %s25 = sadd.s32 1, %s20
    %p26 = scmp.ge.s32.totalorder %s25, 1
    %s27 = scalar_select %p26, 0, %s25
    %s28 = sadd.s32 1, %s19
    %s29 = scalar_select %p26, %s28, %s19
    %p30 = scmp.ge.s32.totalorder %s29, 2
    %s31 = scalar_select %p30, 0, %s29
    %s32 = sadd.s32 %s19, %s20
    %s33 = sadd.s32 %s31, %s27
    %s34 = ssub.s32 %s32, %s33
    %p35 = scmp.eq.s32.totalorder %s34, 0
    %s37 = sadd.s32 %s36, 1
    %s38 = scalar_select %p35, %s36, %s37
    %p41 = pneg %p35
    %p42 = scmp.eq.s32.totalorder %s12, 1
    %p43 = por %p41, %p42
    %p44 = scmp.ne.s32.totalorder %s36, %s39
    %p45 = scmp.eq.s32.totalorder %s12, 0
    %p46 = por %p44, %p45
    %p47 = scmp.ne.s32.totalorder %s36, %s39
    %p48 = scmp.eq.s32.totalorder %s17, 1
    %p49 = por %p47, %p48
    %p50 = scmp.ne.s32.totalorder %s39, %s40
    %p51 = scmp.eq.s32.totalorder %s17, 0
    %p52 = por %p50, %p51
    %p53 = scmp.ne.s32.totalorder %s39, %s40
    %p54 = scmp.eq.s32.totalorder %s18, 1
    %p55 = por %p53, %p54
    %p57 = scmp.ne.s32.totalorder %s40, %s56
    %p58 = scmp.eq.s32.totalorder %s18, 0
    %p59 = por %p57, %p58
    %s61 = sadd.s32 %s60, 1
    %p64 = scmp.eq.s32.totalorder %s12, 1
    %p65 = scmp.ne.s32.totalorder %s60, %s62
    %p66 = scmp.eq.s32.totalorder %s12, 0
    %p67 = por %p65, %p66
    %p68 = scmp.ne.s32.totalorder %s60, %s62
    %p69 = scmp.eq.s32.totalorder %s17, 1
    %p70 = por %p68, %p69
    %p71 = scmp.ne.s32.totalorder %s62, %s63
    %p72 = scmp.eq.s32.totalorder %s17, 0
    %p73 = por %p71, %p72
    %p74 = scmp.ne.s32.totalorder %s62, %s63
    %p75 = scmp.eq.s32.totalorder %s18, 1
    %p76 = por %p74, %p75
    %p78 = scmp.ne.s32.totalorder %s63, %s77
    %p79 = scmp.eq.s32.totalorder %s18, 0
    %p80 = por %p78, %p79
    %s82 = sadd.s32 %s81, 1
    %p85 = scmp.eq.s32.totalorder %s12, 1
    %p86 = scmp.ne.s32.totalorder %s81, %s83
    %p87 = scmp.eq.s32.totalorder %s12, 0
    %p88 = por %p86, %p87
    %p89 = scmp.ne.s32.totalorder %s81, %s83
    %p90 = scmp.eq.s32.totalorder %s17, 1
    %p91 = por %p89, %p90
    %p92 = scmp.ne.s32.totalorder %s83, %s84
    %p93 = scmp.eq.s32.totalorder %s17, 0
    %p94 = por %p92, %p93
    %p95 = scmp.ne.s32.totalorder %s83, %s84
    %p96 = scmp.eq.s32.totalorder %s18, 1
    %p97 = por %p95, %p96
    %p99 = scmp.ne.s32.totalorder %s84, %s98
    %p100 = scmp.eq.s32.totalorder %s18, 0
    %p101 = por %p99, %p100
    %s103 = sadd.s32 %s102, 1
    %p106 = scmp.eq.s32.totalorder %s12, 1
    %p107 = scmp.ne.s32.totalorder %s102, %s104
    %p108 = scmp.eq.s32.totalorder %s12, 0
    %p109 = por %p107, %p108
    %p110 = scmp.ne.s32.totalorder %s102, %s104
    %p111 = scmp.eq.s32.totalorder %s17, 1
    %p112 = por %p110, %p111
    %p113 = scmp.ne.s32.totalorder %s104, %s105
    %p114 = scmp.eq.s32.totalorder %s17, 0
    %p115 = por %p113, %p114
    %p116 = scmp.ne.s32.totalorder %s104, %s105
    %p117 = scmp.eq.s32.totalorder %s18, 1
    %p118 = por %p116, %p117
    %p120 = scmp.ne.s32.totalorder %s105, %s119
    %p121 = scmp.eq.s32.totalorder %s18, 0
    %p122 = por %p120, %p121
    %s123 = sadd.s32 %s19, %s20
    %s124 = sadd.s32 %s31, %s27
    %s125 = ssub.s32 %s123, %s124
    %p126 = scmp.eq.s32.totalorder %s125, 0
    %s128 = sadd.s32 %s127, 1
    %s129 = scalar_select %p126, %s127, %s128
    %p132 = pneg %p126
    %p133 = scmp.eq.s32.totalorder %s12, 1
    %p134 = por %p132, %p133
    %p135 = scmp.ne.s32.totalorder %s127, %s130
    %p136 = scmp.eq.s32.totalorder %s12, 0
    %p137 = por %p135, %p136
    %p138 = scmp.ne.s32.totalorder %s127, %s130
    %p139 = scmp.eq.s32.totalorder %s17, 1
    %p140 = por %p138, %p139
    %p141 = scmp.ne.s32.totalorder %s130, %s131
    %p142 = scmp.eq.s32.totalorder %s17, 0
    %p143 = por %p141, %p142
    %p144 = scmp.ne.s32.totalorder %s130, %s131
    %p145 = scmp.eq.s32.totalorder %s18, 1
    %p146 = por %p144, %p145
    %p148 = scmp.ne.s32.totalorder %s131, %s147
    %p149 = scmp.eq.s32.totalorder %s18, 0
    %p150 = por %p148, %p149
    %s151 = ssub.s32 %s19, %s31
    %p152 = scmp.eq.s32.totalorder %s151, 0
    %s154 = sadd.s32 %s153, 1
    %s155 = scalar_select %p152, %s153, %s154
    %p158 = pneg %p152
    %p159 = scmp.eq.s32.totalorder %s12, 1
    %p160 = por %p158, %p159
    %p161 = scmp.ne.s32.totalorder %s153, %s156
    %p162 = scmp.eq.s32.totalorder %s12, 0
    %p163 = por %p161, %p162
    %p164 = scmp.ne.s32.totalorder %s153, %s156
    %p165 = scmp.eq.s32.totalorder %s17, 1
    %p166 = por %p164, %p165
    %p167 = scmp.ne.s32.totalorder %s156, %s157
    %p168 = scmp.eq.s32.totalorder %s17, 0
    %p169 = por %p167, %p168
    %p170 = scmp.ne.s32.totalorder %s156, %s157
    %p171 = scmp.eq.s32.totalorder %s18, 1
    %p172 = por %p170, %p171
    %p174 = scmp.ne.s32.totalorder %s157, %s173
    %p175 = scmp.eq.s32.totalorder %s18, 0
    %p176 = por %p174, %p175
    %p177 = scmp.le.s32.totalorder 1, %s12
    %p178 = scmp.lt.s32.totalorder %s12, 3
    %p179 = pnand %p177, %p178
    %p180 = pneg %p179
    // Predicated region
    $region9: #{bottleneck_forward.6} parent=5 // pred_check
      _
    $region10: #{bottleneck_forward.6} parent=5 // pred_check_branch
      %182 = sbr.rel (%p179) target = $region12
    $region11: #{bottleneck_forward.6} parent=5 // pred_region
      %s183 = ssub.s32 %s12, 1
      // Predicated region
      $region13: #{bottleneck_forward.6} parent=11 // pred_check
        %p184 = pneg %p73
      $region14: #{bottleneck_forward.6} parent=11 // pred_check_branch
        %186 = sbr.rel (%p184) target = $region16
      $region15: #{bottleneck_forward.6} parent=11 // pred_region
        _
      $region16: #{bottleneck_forward.6} parent=11 // pred_fallthru
        _
      // Predicated region
      $region17: #{bottleneck_forward.6} parent=11 // pred_check
        %p187 = pneg %p94
      $region18: #{bottleneck_forward.6} parent=11 // pred_check_branch
        %189 = sbr.rel (%p187) target = $region20
      $region19: #{bottleneck_forward.6} parent=11 // pred_region
        _
      $region20: #{bottleneck_forward.6} parent=11 // pred_fallthru
        _
      // Predicated region
      $region21: #{bottleneck_forward.6} parent=11 // pred_check
        %p190 = pneg %p115
      $region22: #{bottleneck_forward.6} parent=11 // pred_check_branch
        %192 = sbr.rel (%p190) target = $region24
      $region23: #{bottleneck_forward.6} parent=11 // pred_region
        _
      $region24: #{bottleneck_forward.6} parent=11 // pred_fallthru
        _
    $region12: #{bottleneck_forward.6} parent=5 // pred_fallthru
      _
    %p193 = scmp.lt.s32.totalorder %s12, 2
    // Predicated region
    $region25: #{bottleneck_forward.6} parent=5 // pred_check
      %p194 = pneg %p193
    $region26: #{bottleneck_forward.6} parent=5 // pred_check_branch
      %196 = sbr.rel (%p194) target = $region28
    $region27: #{bottleneck_forward.6} parent=5 // pred_region
      // Predicated region
      $region29: #{bottleneck_forward.6} parent=27 // pred_check
        %p197 = pneg %p46
      $region30: #{bottleneck_forward.6} parent=27 // pred_check_branch
        %199 = sbr.rel (%p197) target = $region32
      $region31: #{bottleneck_forward.6} parent=27 // pred_region
        %s200 = sadd.s32 %s19, %s20
        %s201 = smul.u32 8, %s200
        %p202 = scmp.lt.s32.totalorder %s201, 15
        %s203 = scalar_select %p202, %s201, 15
        %s204 = smul.addr %s203, 4
        %s205 = scalar_lea.vmem %s0, %s204
        %s206 = sadd.s32 %s19, %s20
        %s207 = smul.u32 8, %s206
      $region32: #{bottleneck_forward.6} parent=27 // pred_fallthru
        _
    $region28: #{bottleneck_forward.6} parent=5 // pred_fallthru
      _
    %p208 = scmp.le.s32.totalorder 1, %s12
    %p209 = scmp.lt.s32.totalorder %s12, 3
    %p210 = pnand %p208, %p209
    %p211 = pneg %p210
    // Predicated region
    $region33: #{bottleneck_forward.6} parent=5 // pred_check
      _
    $region34: #{bottleneck_forward.6} parent=5 // pred_check_branch
      %213 = sbr.rel (%p210) target = $region36
    $region35: #{bottleneck_forward.6} parent=5 // pred_region
      %s214 = ssub.s32 %s12, 1
      %s215 = sadd.s32 %s21, %s22
      %s216 = smul.u32 8, %s215
      %p217 = scmp.lt.s32.totalorder %s216, 15
      %s218 = scalar_select %p217, %s216, 15
      %s219 = smul.addr %s218, 4
      %s220 = scalar_lea.vmem %s0, %s219
      %p221 = pneg %p52
      %p222 = pneg %p49
      %p223 = pneg %p73
      %p224 = pneg %p70
      %p225 = pneg %p94
      %p226 = pneg %p91
      %p227 = pneg %p115
      %p228 = pneg %p112
      %p229 = pneg %p143
      %p230 = pneg %p140
      %s231 = sadd.s32 %s21, %s22
      %s232 = smul.u32 8, %s231
      %p233 = scmp.lt.s32.totalorder %s232, 15
      %s234 = scalar_select %p233, %s232, 15
      %s235 = smul.addr %s234, 2
      %s236 = smul.addr %s235, 4
      %s237 = scalar_lea.vmem %s4, %s236
      %p238 = pneg %p169
      %p239 = pneg %p166
      %p240 = scmp.lt.s32.totalorder %s21, 1
      %s241 = scalar_select %p240, %s21, 1
      %s242 = smul.addr %s241, 2
      %s243 = smul.addr %s242, 2
      %s244 = scalar_lea.vmem %s5, %s243
      %s245 = sadd.s32 %s21, %s22
      %s246 = smul.u32 8, %s245
      %p247 = scmp.lt.s32.totalorder %s246, 15
      %s248 = scalar_select %p247, %s246, 15
      %s249 = smul.addr %s248, 4
      %s250 = scalar_lea.vmem %s0, %s249
      %s251 = sadd.s32 %s21, %s22
      %s252 = smul.u32 8, %s251
      %s253 = sadd.s32 %s21, %s22
      %s254 = smul.u32 8, %s253
      %p255 = scmp.lt.s32.totalorder %s254, 15
      %s256 = scalar_select %p255, %s254, 15
      %s257 = smul.addr %s256, 2
      %s258 = smul.addr %s257, 4
      %s259 = scalar_lea.vmem %s4, %s258
      %s260 = sadd.s32 %s21, %s22
      %s261 = smul.u32 8, %s260
      %p262 = scmp.lt.s32.totalorder %s21, 1
      %s263 = scalar_select %p262, %s21, 1
      %s264 = smul.addr %s263, 2
      %s265 = smul.addr %s264, 2
      %s266 = scalar_lea.vmem %s5, %s265
      %v268 = vld [vmem:[%s250] sm:$0xf]
      %v269 = vld [vmem:[%s250 + $0x4] sm:$0xf]
      %v270 = vld [vmem:[%s250 + $0x8] sm:$0xf]
      %v271 = vld [vmem:[%s250 + $0xc] sm:$0xf]
      %v272 = vld [vmem:[%s250 + $0x10] sm:$0xf]
      %v273 = vld [vmem:[%s250 + $0x14] sm:$0xf]
      %v274 = vld [vmem:[%s250 + $0x18] sm:$0xf]
      %v275 = vld [vmem:[%s250 + $0x1c] sm:$0xf]
      %v276 = vunpack.c.l.bf16 %v268
      %v277 = vunpack.c.l.bf16 %v269
      %v278 = vunpack.c.l.bf16 %v270
      %v279 = vunpack.c.l.bf16 %v271
      %v280 = vunpack.c.l.bf16 %v272
      %v281 = vunpack.c.l.bf16 %v273
      %v282 = vunpack.c.l.bf16 %v274
      %v283 = vunpack.c.l.bf16 %v275
      %v284 = vld [vmem:[%s1] sm:$0x1]
      %v286 = vperm.slane %v284, 0
      %v288 = vmul.f32 %v276, %v286
      %v289 = vmul.f32 %v277, %v286
      %v290 = vmul.f32 %v278, %v286
      %v291 = vmul.f32 %v279, %v286
      %v292 = vmul.f32 %v280, %v286
      %v293 = vmul.f32 %v281, %v286
      %v294 = vmul.f32 %v282, %v286
      %v295 = vmul.f32 %v283, %v286
      %v296 = vld [vmem:[%s2] sm:$0x1]
      %v298 = vperm.slane %v296, 0
      %v300 = vadd.f32 %v288, %v298
      %v301 = vadd.f32 %v289, %v298
      %v302 = vadd.f32 %v290, %v298
      %v303 = vadd.f32 %v291, %v298
      %v304 = vadd.f32 %v292, %v298
      %v305 = vadd.f32 %v293, %v298
      %v306 = vadd.f32 %v294, %v298
      %v307 = vadd.f32 %v295, %v298
      %v308 = vmax.f32 %v300, 0.0
      %v309 = vmax.f32 %v301, 0.0
      %v310 = vmax.f32 %v302, 0.0
      %v311 = vmax.f32 %v303, 0.0
      %v312 = vmax.f32 %v304, 0.0
      %v313 = vmax.f32 %v305, 0.0
      %v314 = vmax.f32 %v306, 0.0
      %v315 = vmax.f32 %v307, 0.0
      %v316 = vpack.c.bf16 %v309, %v308
      %v317 = vpack.c.bf16 %v311, %v310
      %v318 = vpack.c.bf16 %v313, %v312
      %v319 = vpack.c.bf16 %v315, %v314
      %v320 = vld [vmem:[%s3] sm:$0xff]
      %v322 = vunpack.c.l.b16 %v320
      %v323 = vunpack.c.h.b16 %v320
      %v324 = vpack.c.b16 %v322, %v322
      %v325 = vpack.c.b16 %v323, %v323
      %vm326 = vcmask 64512
      %v328 = vsel %vm326, %v316, 0
      %v331 = vsel %vm326, %v317, 0
      %v334 = vsel %vm326, %v318, 0
      %v337 = vsel %vm326, %v319, 0
      %vm339 = vcmask 1043456
      %v341 = vsel %vm339, %v324, 0
      %v344 = vsel %vm339, %v325, 0
      %346 = vmatpush.bf16.msra.mxu0 0
      %347 = vmatpush.bf16.msra.mxu0 0
      %348 = vmatpush.bf16.msra.mxu0 0
      %349 = vmatpush.bf16.msra.mxu0 0
      %350 = vmatpush.bf16.msra.mxu0 0
      %351 = vmatpush.bf16.msra.mxu0 0
      %352 = vmatpush.bf16.msra.mxu0 0
      %353 = vmatpush.bf16.msra.mxu0 %v341
      %354 = vmatmul.bf16.gmra.mxu0 %v328
      %v355 = vpop.f32.mrf.mxu0
      %v356 = vadd.f32 0.0, %v355
      %v357 = vpop.f32.mrf.mxu0
      %v358 = vadd.f32 0.0, %v357
      %359 = vmatmul.bf16.gmra.mxu0 %v331
      %v360 = vpop.f32.mrf.mxu0
      %v361 = vadd.f32 0.0, %v360
      %v362 = vpop.f32.mrf.mxu0
      %v363 = vadd.f32 0.0, %v362
      %364 = vmatmul.bf16.gmra.mxu0 %v334
      %v365 = vpop.f32.mrf.mxu0
      %v366 = vadd.f32 0.0, %v365
      %v367 = vpop.f32.mrf.mxu0
      %v368 = vadd.f32 0.0, %v367
      %369 = vmatmul.bf16.gmra.mxu0 %v337
      %v370 = vpop.f32.mrf.mxu0
      %v371 = vadd.f32 0.0, %v370
      %v372 = vpop.f32.mrf.mxu0
      %v373 = vadd.f32 0.0, %v372
      %374 = vdwg.mxu0
      %375 = vmatpush.bf16.msra.mxu0 0
      %376 = vmatpush.bf16.msra.mxu0 0
      %377 = vmatpush.bf16.msra.mxu0 0
      %378 = vmatpush.bf16.msra.mxu0 0
      %379 = vmatpush.bf16.msra.mxu0 0
      %380 = vmatpush.bf16.msra.mxu0 0
      %381 = vmatpush.bf16.msra.mxu0 0
      %382 = vmatpush.bf16.msra.mxu0 %v344
      %383 = vmatmul.bf16.gmra.mxu0 %v328
      %v384 = vpop.f32.mrf.mxu0
      %v385 = vadd.f32 0.0, %v384
      %v386 = vpop.f32.mrf.mxu0
      %v387 = vadd.f32 0.0, %v386
      %388 = vmatmul.bf16.gmra.mxu0 %v331
      %v389 = vpop.f32.mrf.mxu0
      %v390 = vadd.f32 0.0, %v389
      %v391 = vpop.f32.mrf.mxu0
      %v392 = vadd.f32 0.0, %v391
      %393 = vmatmul.bf16.gmra.mxu0 %v334
      %v394 = vpop.f32.mrf.mxu0
      %v395 = vadd.f32 0.0, %v394
      %v396 = vpop.f32.mrf.mxu0
      %v397 = vadd.f32 0.0, %v396
      %398 = vmatmul.bf16.gmra.mxu0 %v337
      %v399 = vpop.f32.mrf.mxu0
      %v400 = vadd.f32 0.0, %v399
      %v401 = vpop.f32.mrf.mxu0
      %v402 = vadd.f32 0.0, %v401
      %403 = vdwg.mxu0
      %v404 = vpack.c.bf16 %v385, %v356
      %v405 = vpack.c.bf16 %v387, %v358
      %v406 = vpack.c.bf16 %v390, %v361
      %v407 = vpack.c.bf16 %v392, %v363
      %v408 = vpack.c.bf16 %v395, %v366
      %v409 = vpack.c.bf16 %v397, %v368
      %v410 = vpack.c.bf16 %v400, %v371
      %v411 = vpack.c.bf16 %v402, %v373
      %412 = vst [vmem:[%s259] sm:$0xff] %v404
      %413 = vst [vmem:[%s259 + $0x8] sm:$0xff] %v405
      %414 = vst [vmem:[%s259 + $0x10] sm:$0xff] %v406
      %415 = vst [vmem:[%s259 + $0x18] sm:$0xff] %v407
      %416 = vst [vmem:[%s259 + $0x20] sm:$0xff] %v408
      %417 = vst [vmem:[%s259 + $0x28] sm:$0xff] %v409
      %418 = vst [vmem:[%s259 + $0x30] sm:$0xff] %v410
      %419 = vst [vmem:[%s259 + $0x38] sm:$0xff] %v411
      %p420 = scmp.eq.s32.totalorder %s22, 0
      // Predicated region
      $region37: #{bottleneck_forward.6} parent=35 // pred_check
        %p421 = pneg %p420
      $region38: #{bottleneck_forward.6} parent=35 // pred_check_branch
        %423 = sbr.rel (%p421) target = $region40
      $region39: #{bottleneck_forward.6} parent=35 // pred_region
        %424 = vst [vmem:[%s266] sm:$0xf] 0.0
      $region40: #{bottleneck_forward.6} parent=35 // pred_fallthru
        _
      %v425 = vld [vmem:[%s266] ss:$2 sm:$0x3]
      %v426 = vadd.f32 %v356, %v358
      %v427 = vadd.f32 %v426, %v361
      %v428 = vadd.f32 %v427, %v363
      %v429 = vadd.f32 %v428, %v366
      %v430 = vadd.f32 %v429, %v368
      %v431 = vadd.f32 %v430, %v371
      %v432 = vadd.f32 %v431, %v373
      %v433 = vrot.slane %v432, 4
      %v434 = vadd.f32 %v432, %v433
      %v435 = vrot.slane %v434, 2
      %v436 = vadd.f32 %v434, %v435
      %v437 = vrot.slane %v436, 1
      %v438 = vadd.f32 %v436, %v437
      %v439 = vadd.f32 %v385, %v387
      %v440 = vadd.f32 %v439, %v390
      %v441 = vadd.f32 %v440, %v392
      %v442 = vadd.f32 %v441, %v395
      %v443 = vadd.f32 %v442, %v397
      %v444 = vadd.f32 %v443, %v400
      %v445 = vadd.f32 %v444, %v402
      %v446 = vrot.slane %v445, 4
      %v447 = vadd.f32 %v445, %v446
      %v448 = vrot.slane %v447, 2
      %v449 = vadd.f32 %v447, %v448
      %v450 = vrot.slane %v449, 1
      %v451 = vadd.f32 %v449, %v450
      %v454 = vrot.slane %v451, 7
      %vm455 = vcmask 1040384
      %v456 = vsel %vm455, %v438, %v454
      %v458 = vadd.f32 %v425, %v456
      %v459 = vlaneseq
      %vm460 = vcmp.ge.s32.totalorder %v459, 0
      %vm461 = vcmp.lt.s32.totalorder %v459, 256
      %vm462 = vmand %vm460, %vm461
      %463 = vst.msk [vmem:[%s266] ss:$2 sm:$0x3] %vm462, %v458
      %s464 = scalar_lea.vmem %s266, 1
      %v465 = vld [vmem:[%s464] ss:$2 sm:$0x3]
      %v466 = vmul.f32 %v356, %v356
      %v467 = vmul.f32 %v385, %v385
      %v468 = vmul.f32 %v358, %v358
      %v469 = vmul.f32 %v387, %v387
      %v470 = vmul.f32 %v361, %v361
      %v471 = vmul.f32 %v390, %v390
      %v472 = vmul.f32 %v363, %v363
      %v473 = vmul.f32 %v392, %v392
      %v474 = vmul.f32 %v366, %v366
      %v475 = vmul.f32 %v395, %v395
      %v476 = vmul.f32 %v368, %v368
      %v477 = vmul.f32 %v397, %v397
      %v478 = vmul.f32 %v371, %v371
      %v479 = vmul.f32 %v400, %v400
      %v480 = vmul.f32 %v373, %v373
      %v481 = vmul.f32 %v402, %v402
      %v482 = vadd.f32 %v466, %v468
      %v483 = vadd.f32 %v482, %v470
      %v484 = vadd.f32 %v483, %v472
      %v485 = vadd.f32 %v484, %v474
      %v486 = vadd.f32 %v485, %v476
      %v487 = vadd.f32 %v486, %v478
      %v488 = vadd.f32 %v487, %v480
      %v489 = vrot.slane %v488, 4
      %v490 = vadd.f32 %v488, %v489
      %v491 = vrot.slane %v490, 2
      %v492 = vadd.f32 %v490, %v491
      %v493 = vrot.slane %v492, 1
      %v494 = vadd.f32 %v492, %v493
      %v495 = vadd.f32 %v467, %v469
      %v496 = vadd.f32 %v495, %v471
      %v497 = vadd.f32 %v496, %v473
      %v498 = vadd.f32 %v497, %v475
      %v499 = vadd.f32 %v498, %v477
      %v500 = vadd.f32 %v499, %v479
      %v501 = vadd.f32 %v500, %v481
      %v502 = vrot.slane %v501, 4
      %v503 = vadd.f32 %v501, %v502
      %v504 = vrot.slane %v503, 2
      %v505 = vadd.f32 %v503, %v504
      %v506 = vrot.slane %v505, 1
      %v507 = vadd.f32 %v505, %v506
      %v510 = vrot.slane %v507, 7
      %v511 = vsel %vm455, %v494, %v510
      %v513 = vadd.f32 %v465, %v511
      %514 = vst.msk [vmem:[%s464] ss:$2 sm:$0x3] %vm462, %v513
      %s515 = sadd.s32 %s21, %s22
      %s516 = smul.u32 8, %s515
      %p517 = scmp.lt.s32.totalorder %s516, 15
      %s518 = scalar_select %p517, %s516, 15
      %s519 = smul.addr %s518, 2
      %s520 = smul.addr %s519, 4
      %s521 = scalar_lea.vmem %s4, %s520
      %p522 = scmp.lt.s32.totalorder %s21, 1
      %s523 = scalar_select %p522, %s21, 1
      %s524 = smul.addr %s523, 2
      %s525 = smul.addr %s524, 2
      %s526 = scalar_lea.vmem %s5, %s525
      // Predicated region
      $region41: #{bottleneck_forward.6} parent=35 // pred_check
        %p527 = pneg %p140
      $region42: #{bottleneck_forward.6} parent=35 // pred_check_branch
        %529 = sbr.rel (%p527) target = $region44
      $region43: #{bottleneck_forward.6} parent=35 // pred_region
        %s530 = sadd.s32 %s21, %s22
        %s531 = smul.u32 8, %s530
      $region44: #{bottleneck_forward.6} parent=35 // pred_fallthru
        _
      // Predicated region
      $region45: #{bottleneck_forward.6} parent=35 // pred_check
        %p532 = pneg %p166
      $region46: #{bottleneck_forward.6} parent=35 // pred_check_branch
        %534 = sbr.rel (%p532) target = $region48
      $region47: #{bottleneck_forward.6} parent=35 // pred_region
        _
      $region48: #{bottleneck_forward.6} parent=35 // pred_fallthru
        _
    $region36: #{bottleneck_forward.6} parent=5 // pred_fallthru
      _
    %p535 = scmp.le.s32.totalorder 2, %s12
    // Predicated region
    $region49: #{bottleneck_forward.6} parent=5 // pred_check
      %p536 = pneg %p535
    $region50: #{bottleneck_forward.6} parent=5 // pred_check_branch
      %538 = sbr.rel (%p536) target = $region52
    $region51: #{bottleneck_forward.6} parent=5 // pred_region
      %s539 = ssub.s32 %s12, 2
      // Predicated region
      $region53: #{bottleneck_forward.6} parent=51 // pred_check
        %p540 = pneg %p146
      $region54: #{bottleneck_forward.6} parent=51 // pred_check_branch
        %542 = sbr.rel (%p540) target = $region56
      $region55: #{bottleneck_forward.6} parent=51 // pred_region
        %s543 = sadd.s32 %s23, %s24
        %s544 = smul.u32 8, %s543
        %p545 = scmp.lt.s32.totalorder %s544, 15
        %s546 = scalar_select %p545, %s544, 15
        %s547 = smul.addr %s546, 2
        %s548 = smul.addr %s547, 4
        %s549 = scalar_lea.vmem %s4, %s548
      $region56: #{bottleneck_forward.6} parent=51 // pred_fallthru
        _
      // Predicated region
      $region57: #{bottleneck_forward.6} parent=51 // pred_check
        %p550 = pneg %p172
      $region58: #{bottleneck_forward.6} parent=51 // pred_check_branch
        %552 = sbr.rel (%p550) target = $region60
      $region59: #{bottleneck_forward.6} parent=51 // pred_region
        %p553 = scmp.lt.s32.totalorder %s23, 1
        %s554 = scalar_select %p553, %s23, 1
        %s555 = smul.addr %s554, 2
        %s556 = smul.addr %s555, 2
        %s557 = scalar_lea.vmem %s5, %s556
      $region60: #{bottleneck_forward.6} parent=51 // pred_fallthru
        _
    $region52: #{bottleneck_forward.6} parent=5 // pred_fallthru
      _
  $region6: #{bottleneck_forward.6} parent=0 // loop_footer
    %s16 = sadd.s32 1, %s12
  $region7: #{bottleneck_forward.6} parent=0 // loop_footer_branch
    %11 = sbr.rel target = $region3
  $region8: #{bottleneck_forward.6} parent=0 // loop_exit
    _

// kernel: bottleneck_forward.7
$region0: #{bottleneck_forward.7}
  #allocation0 [shape = 'u32[]', space=smem, size = 0x4, offset = 0x4, fixed_abs, tag = 'smem constant byte address 0x4 - core index']
  #allocation1 [shape = 'u32[72,128]{1,0:T(1,128)}', space=vmem, size = 0x9000, scoped, tag = 'internal scratch']
  %s0 = inlined_call_operand.vmem [shape: bf16[128,256], index: 0, kind: input, shape index: {}]
  %s1 = inlined_call_operand.vmem [shape: bf16[128,256], index: 1, kind: input, shape index: {}]
  %s2 = inlined_call_operand.vmem [shape: f32[1,256], index: 2, kind: input, shape index: {}]
  %s3 = inlined_call_operand.vmem [shape: f32[1,256], index: 3, kind: input, shape index: {}]
  %s4 = inlined_call_operand.hbm [shape: f32[128,256], index: 4, kind: output, shape index: {}]
  %s5 = sld [smem:[#allocation0]]
  $region49: #{bottleneck_forward.7} parent=0
    _
  %s7 = ssub.s32 1, %s5
  %s8 = scalar_select 0, %s7, %s5
  $region1: #{bottleneck_forward.7} parent=0
    #allocation2 [shape = 'u8[131072]{0}', space=vmem, size = 0x20000, scoped, tag = 'output window, operand 0']
    #allocation3 [shape = 's32[2]{0}', space=sflag, size = 0x8, scoped, tag = 'scoped memory for bottleneck_forward.7']
    %9 = vsyncpa [#allocation3], 0
    %s10 = scalar_lea.sflag [#allocation3], 1
    %11 = vsyncpa %s10, 0
    loop: start=0, step=1, limit=4
    $region2: #{bottleneck_forward.7} parent=1 // loop_pre_header
      _
    $region3: #{bottleneck_forward.7} parent=1 // loop_header
      %s13 = sphi 0, %s17
      %p14 = scmp.ge.s32.totalorder %s13, 4
      %s23 = sphi 0, %s25
      %s26 = sphi 0, %s23
      %s27 = sphi 0, %s26
      %s43 = sphi 0, %s27
      %s49 = sphi 0, %s51
      %s52 = sphi 0, %s49
      %s53 = sphi 0, %s52
      %s69 = sphi 0, %s53
      %s73 = sphi 0, %s73
      %s75 = sphi 0, %s73
      %s76 = sphi 0, %s75
      %s90 = sphi 0, %s76
      %s94 = sphi 0, %s94
      %s96 = sphi 0, %s94
      %s97 = sphi 0, %s96
      %s111 = sphi 0, %s97
      %s117 = sphi 0, %s119
      %s120 = sphi 0, %s117
      %s121 = sphi 0, %s120
      %s137 = sphi 0, %s121
    $region4: #{bottleneck_forward.7} parent=1 // loop_header_branch
      %16 = sbr.rel (%p14) target = $region8
    $region5: #{bottleneck_forward.7} parent=1 // loop_body
      %s18 = ssub.s32 %s13, 1
      %s19 = ssub.s32 %s13, 2
      %s20 = sadd.s32 %s13, 1
      %s21 = ssub.s32 %s13, %s20
      %p22 = scmp.eq.s32.totalorder %s21, 0
      %s24 = sadd.s32 %s23, 1
      %s25 = scalar_select %p22, %s23, %s24
      %p28 = pneg %p22
      %p29 = scmp.eq.s32.totalorder %s13, 1
      %p30 = por %p28, %p29
      %p31 = scmp.ne.s32.totalorder %s23, %s26
      %p32 = scmp.eq.s32.totalorder %s13, 0
      %p33 = por %p31, %p32
      %p34 = scmp.ne.s32.totalorder %s23, %s26
      %p35 = scmp.eq.s32.totalorder %s18, 1
      %p36 = por %p34, %p35
      %p37 = scmp.ne.s32.totalorder %s26, %s27
      %p38 = scmp.eq.s32.totalorder %s18, 0
      %p39 = por %p37, %p38
      %p40 = scmp.ne.s32.totalorder %s26, %s27
      %p41 = scmp.eq.s32.totalorder %s19, 1
      %p42 = por %p40, %p41
      %p44 = scmp.ne.s32.totalorder %s27, %s43
      %p45 = scmp.eq.s32.totalorder %s19, 0
      %p46 = por %p44, %p45
      %s47 = ssub.s32 %s13, %s20
      %p48 = scmp.eq.s32.totalorder %s47, 0
      %s50 = sadd.s32 %s49, 1
      %s51 = scalar_select %p48, %s49, %s50
      %p54 = pneg %p48
      %p55 = scmp.eq.s32.totalorder %s13, 1
      %p56 = por %p54, %p55
      %p57 = scmp.ne.s32.totalorder %s49, %s52
      %p58 = scmp.eq.s32.totalorder %s13, 0
      %p59 = por %p57, %p58
      %p60 = scmp.ne.s32.totalorder %s49, %s52
      %p61 = scmp.eq.s32.totalorder %s18, 1
      %p62 = por %p60, %p61
      %p63 = scmp.ne.s32.totalorder %s52, %s53
      %p64 = scmp.eq.s32.totalorder %s18, 0
      %p65 = por %p63, %p64
      %p66 = scmp.ne.s32.totalorder %s52, %s53
      %p67 = scmp.eq.s32.totalorder %s19, 1
      %p68 = por %p66, %p67
      %p70 = scmp.ne.s32.totalorder %s53, %s69
      %p71 = scmp.eq.s32.totalorder %s19, 0
      %p72 = por %p70, %p71
      %s74 = sadd.s32 %s73, 1
      %p77 = scmp.eq.s32.totalorder %s13, 1
      %p78 = scmp.ne.s32.totalorder %s73, %s75
      %p79 = scmp.eq.s32.totalorder %s13, 0
      %p80 = por %p78, %p79
      %p81 = scmp.ne.s32.totalorder %s73, %s75
      %p82 = scmp.eq.s32.totalorder %s18, 1
      %p83 = por %p81, %p82
      %p84 = scmp.ne.s32.totalorder %s75, %s76
      %p85 = scmp.eq.s32.totalorder %s18, 0
      %p86 = por %p84, %p85
      %p87 = scmp.ne.s32.totalorder %s75, %s76
      %p88 = scmp.eq.s32.totalorder %s19, 1
      %p89 = por %p87, %p88
      %p91 = scmp.ne.s32.totalorder %s76, %s90
      %p92 = scmp.eq.s32.totalorder %s19, 0
      %p93 = por %p91, %p92
      %s95 = sadd.s32 %s94, 1
      %p98 = scmp.eq.s32.totalorder %s13, 1
      %p99 = scmp.ne.s32.totalorder %s94, %s96
      %p100 = scmp.eq.s32.totalorder %s13, 0
      %p101 = por %p99, %p100
      %p102 = scmp.ne.s32.totalorder %s94, %s96
      %p103 = scmp.eq.s32.totalorder %s18, 1
      %p104 = por %p102, %p103
      %p105 = scmp.ne.s32.totalorder %s96, %s97
      %p106 = scmp.eq.s32.totalorder %s18, 0
      %p107 = por %p105, %p106
      %p108 = scmp.ne.s32.totalorder %s96, %s97
      %p109 = scmp.eq.s32.totalorder %s19, 1
      %p110 = por %p108, %p109
      %p112 = scmp.ne.s32.totalorder %s97, %s111
      %p113 = scmp.eq.s32.totalorder %s19, 0
      %p114 = por %p112, %p113
      %s115 = ssub.s32 %s13, %s20
      %p116 = scmp.eq.s32.totalorder %s115, 0
      %s118 = sadd.s32 %s117, 1
      %s119 = scalar_select %p116, %s117, %s118
      %p122 = pneg %p116
      %p123 = scmp.eq.s32.totalorder %s13, 1
      %p124 = por %p122, %p123
      %p125 = scmp.ne.s32.totalorder %s117, %s120
      %p126 = scmp.eq.s32.totalorder %s13, 0
      %p127 = por %p125, %p126
      %p128 = scmp.ne.s32.totalorder %s117, %s120
      %p129 = scmp.eq.s32.totalorder %s18, 1
      %p130 = por %p128, %p129
      %p131 = scmp.ne.s32.totalorder %s120, %s121
      %p132 = scmp.eq.s32.totalorder %s18, 0
      %p133 = por %p131, %p132
      %p134 = scmp.ne.s32.totalorder %s120, %s121
      %p135 = scmp.eq.s32.totalorder %s19, 1
      %p136 = por %p134, %p135
      %p138 = scmp.ne.s32.totalorder %s121, %s137
      %p139 = scmp.eq.s32.totalorder %s19, 0
      %p140 = por %p138, %p139
      %p141 = scmp.le.s32.totalorder 1, %s13
      %p142 = scmp.lt.s32.totalorder %s13, 3
      %p143 = pnand %p141, %p142
      %p144 = pneg %p143
      // Predicated region
      $region9: #{bottleneck_forward.7} parent=5 // pred_check
        _
      $region10: #{bottleneck_forward.7} parent=5 // pred_check_branch
        %146 = sbr.rel (%p143) target = $region12
      $region11: #{bottleneck_forward.7} parent=5 // pred_region
        %s147 = ssub.s32 %s13, 1
        // Predicated region
        $region13: #{bottleneck_forward.7} parent=11 // pred_check
          %p148 = pneg %p86
        $region14: #{bottleneck_forward.7} parent=11 // pred_check_branch
          %150 = sbr.rel (%p148) target = $region16
        $region15: #{bottleneck_forward.7} parent=11 // pred_region
          _
        $region16: #{bottleneck_forward.7} parent=11 // pred_fallthru
          _
        // Predicated region
        $region17: #{bottleneck_forward.7} parent=11 // pred_check
          %p151 = pneg %p107
        $region18: #{bottleneck_forward.7} parent=11 // pred_check_branch
          %153 = sbr.rel (%p151) target = $region20
        $region19: #{bottleneck_forward.7} parent=11 // pred_region
          _
        $region20: #{bottleneck_forward.7} parent=11 // pred_fallthru
          _
      $region12: #{bottleneck_forward.7} parent=5 // pred_fallthru
        _
      %p154 = scmp.lt.s32.totalorder %s13, 2
      // Predicated region
      $region21: #{bottleneck_forward.7} parent=5 // pred_check
        %p155 = pneg %p154
      $region22: #{bottleneck_forward.7} parent=5 // pred_check_branch
        %157 = sbr.rel (%p155) target = $region24
      $region23: #{bottleneck_forward.7} parent=5 // pred_region
        // Predicated region
        $region25: #{bottleneck_forward.7} parent=23 // pred_check
          %p158 = pneg %p33
        $region26: #{bottleneck_forward.7} parent=23 // pred_check_branch
          %160 = sbr.rel (%p158) target = $region28
        $region27: #{bottleneck_forward.7} parent=23 // pred_region
          %s161 = smul.u32 8, %s13
          %p162 = scmp.lt.s32.totalorder %s161, 15
          %s163 = scalar_select %p162, %s161, 15
          %s164 = smul.addr %s163, 2
          %s165 = smul.addr %s164, 4
          %s166 = scalar_lea.vmem %s0, %s165
          %s167 = smul.u32 8, %s13
        $region28: #{bottleneck_forward.7} parent=23 // pred_fallthru
          _
        // Predicated region
        $region29: #{bottleneck_forward.7} parent=23 // pred_check
          %p168 = pneg %p59
        $region30: #{bottleneck_forward.7} parent=23 // pred_check_branch
          %170 = sbr.rel (%p168) target = $region32
        $region31: #{bottleneck_forward.7} parent=23 // pred_region
          %s171 = smul.u32 8, %s13
          %p172 = scmp.lt.s32.totalorder %s171, 15
          %s173 = scalar_select %p172, %s171, 15
          %s174 = smul.addr %s173, 2
          %s175 = smul.addr %s174, 4
          %s176 = scalar_lea.vmem %s1, %s175
          %s177 = smul.u32 8, %s13
        $region32: #{bottleneck_forward.7} parent=23 // pred_fallthru
          _
      $region24: #{bottleneck_forward.7} parent=5 // pred_fallthru
        _
      %p178 = scmp.le.s32.totalorder 1, %s13
      %p179 = scmp.lt.s32.totalorder %s13, 3
      %p180 = pnand %p178, %p179
      %p181 = pneg %p180
      // Predicated region
      $region33: #{bottleneck_forward.7} parent=5 // pred_check
        _
      $region34: #{bottleneck_forward.7} parent=5 // pred_check_branch
        %183 = sbr.rel (%p180) target = $region36
      $region35: #{bottleneck_forward.7} parent=5 // pred_region
        %s184 = ssub.s32 %s13, 1
        %s185 = smul.u32 8, %s18
        %p186 = scmp.lt.s32.totalorder %s185, 15
        %s187 = scalar_select %p186, %s185, 15
        %s188 = smul.addr %s187, 2
        %s189 = smul.addr %s188, 4
        %s190 = scalar_lea.vmem %s0, %s189
        %p191 = pneg %p39
        %p192 = pneg %p36
        %s193 = smul.u32 8, %s18
        %p194 = scmp.lt.s32.totalorder %s193, 15
        %s195 = scalar_select %p194, %s193, 15
        %s196 = smul.addr %s195, 2
        %s197 = smul.addr %s196, 4
        %s198 = scalar_lea.vmem %s1, %s197
        %p199 = pneg %p65
        %p200 = pneg %p62
        %p201 = pneg %p86
        %p202 = pneg %p83
        %p203 = pneg %p107
        %p204 = pneg %p104
        %p205 = pneg %p133
        %p206 = pneg %p130
        %s207 = sand.u32 %s120, 1
        %s208 = scalar_lea.sflag [#allocation3], %s207
        %s209 = sand.u32 %s120, 1
        %s210 = smul.addr %s209, 128
        %s211 = scalar_lea.vmem [#allocation2], %s210
        %s212 = smul.u32 8, %s18
        %p213 = scmp.lt.s32.totalorder %s212, 15
        %s214 = scalar_select %p213, %s212, 15
        %s215 = smul.addr %s214, 2
        %s216 = smul.addr %s215, 4
        %s217 = scalar_lea.vmem %s0, %s216
        %s218 = smul.u32 8, %s18
        %s219 = smul.u32 8, %s18
        %p220 = scmp.lt.s32.totalorder %s219, 15
        %s221 = scalar_select %p220, %s219, 15
        %s222 = smul.addr %s221, 2
        %s223 = smul.addr %s222, 4
        %s224 = scalar_lea.vmem %s1, %s223
        %s225 = smul.u32 8, %s18
        %s226 = smul.u32 8, %s18
        %v227 = vld [vmem:[%s217] sm:$0xff]
        %v228 = vld [vmem:[%s217 + $0x8] sm:$0xff]
        %v229 = vld [vmem:[%s217 + $0x10] sm:$0xff]
        %v230 = vld [vmem:[%s217 + $0x18] sm:$0xff]
        %v231 = vld [vmem:[%s217 + $0x20] sm:$0xff]
        %v232 = vld [vmem:[%s217 + $0x28] sm:$0xff]
        %v233 = vld [vmem:[%s217 + $0x30] sm:$0xff]
        %v234 = vld [vmem:[%s217 + $0x38] sm:$0xff]
        %v235 = vunpack.c.l.bf16 %v227
        %v236 = vunpack.c.h.bf16 %v227
        %v237 = vunpack.c.l.bf16 %v228
        %v238 = vunpack.c.h.bf16 %v228
        %v239 = vunpack.c.l.bf16 %v229
        %v240 = vunpack.c.h.bf16 %v229
        %v241 = vunpack.c.l.bf16 %v230
        %v242 = vunpack.c.h.bf16 %v230
        %v243 = vunpack.c.l.bf16 %v231
        %v244 = vunpack.c.h.bf16 %v231
        %v245 = vunpack.c.l.bf16 %v232
        %v246 = vunpack.c.h.bf16 %v232
        %v247 = vunpack.c.l.bf16 %v233
        %v248 = vunpack.c.h.bf16 %v233
        %v249 = vunpack.c.l.bf16 %v234
        %v250 = vunpack.c.h.bf16 %v234
        %v251 = vld [vmem:[%s2] sm:$0x3]
        %v253 = vperm.slane %v251, 0
        %v254 = vperm.slane %v251, 1
        %v257 = vmul.f32 %v235, %v253
        %v258 = vmul.f32 %v236, %v254
        %v259 = vmul.f32 %v237, %v253
        %v260 = vmul.f32 %v238, %v254
        %v261 = vmul.f32 %v239, %v253
        %v262 = vmul.f32 %v240, %v254
        %v263 = vmul.f32 %v241, %v253
        %v264 = vmul.f32 %v242, %v254
        %v265 = vmul.f32 %v243, %v253
        %v266 = vmul.f32 %v244, %v254
        %v267 = vmul.f32 %v245, %v253
        %v268 = vmul.f32 %v246, %v254
        %v269 = vmul.f32 %v247, %v253
        %v270 = vmul.f32 %v248, %v254
        %v271 = vmul.f32 %v249, %v253
        %v272 = vmul.f32 %v250, %v254
        %v273 = vld [vmem:[%s3] sm:$0x3]
        %v275 = vperm.slane %v273, 0
        %v276 = vperm.slane %v273, 1
        %v279 = vadd.f32 %v257, %v275
        %v280 = vadd.f32 %v258, %v276
        %v281 = vadd.f32 %v259, %v275
        %v282 = vadd.f32 %v260, %v276
        %v283 = vadd.f32 %v261, %v275
        %v284 = vadd.f32 %v262, %v276
        %v285 = vadd.f32 %v263, %v275
        %v286 = vadd.f32 %v264, %v276
        %v287 = vadd.f32 %v265, %v275
        %v288 = vadd.f32 %v266, %v276
        %v289 = vadd.f32 %v267, %v275
        %v290 = vadd.f32 %v268, %v276
        %v291 = vadd.f32 %v269, %v275
        %v292 = vadd.f32 %v270, %v276
        %v293 = vadd.f32 %v271, %v275
        %v294 = vadd.f32 %v272, %v276
        %v295 = vld [vmem:[%s224] sm:$0xff]
        %v296 = vld [vmem:[%s224 + $0x8] sm:$0xff]
        %v297 = vld [vmem:[%s224 + $0x10] sm:$0xff]
        %v298 = vld [vmem:[%s224 + $0x18] sm:$0xff]
        %v299 = vld [vmem:[%s224 + $0x20] sm:$0xff]
        %v300 = vld [vmem:[%s224 + $0x28] sm:$0xff]
        %v301 = vld [vmem:[%s224 + $0x30] sm:$0xff]
        %v302 = vld [vmem:[%s224 + $0x38] sm:$0xff]
        %v303 = vunpack.c.l.bf16 %v295
        %v304 = vunpack.c.h.bf16 %v295
        %v305 = vunpack.c.l.bf16 %v296
        %v306 = vunpack.c.h.bf16 %v296
        %v307 = vunpack.c.l.bf16 %v297
        %v308 = vunpack.c.h.bf16 %v297
        %v309 = vunpack.c.l.bf16 %v298
        %v310 = vunpack.c.h.bf16 %v298
        %v311 = vunpack.c.l.bf16 %v299
        %v312 = vunpack.c.h.bf16 %v299
        %v313 = vunpack.c.l.bf16 %v300
        %v314 = vunpack.c.h.bf16 %v300
        %v315 = vunpack.c.l.bf16 %v301
        %v316 = vunpack.c.h.bf16 %v301
        %v317 = vunpack.c.l.bf16 %v302
        %v318 = vunpack.c.h.bf16 %v302
        %v319 = vadd.f32 %v279, %v303
        %v320 = vadd.f32 %v280, %v304
        %v321 = vadd.f32 %v281, %v305
        %v322 = vadd.f32 %v282, %v306
        %v323 = vadd.f32 %v283, %v307
        %v324 = vadd.f32 %v284, %v308
        %v325 = vadd.f32 %v285, %v309
        %v326 = vadd.f32 %v286, %v310
        %v327 = vadd.f32 %v287, %v311
        %v328 = vadd.f32 %v288, %v312
        %v329 = vadd.f32 %v289, %v313
        %v330 = vadd.f32 %v290, %v314
        %v331 = vadd.f32 %v291, %v315
        %v332 = vadd.f32 %v292, %v316
        %v333 = vadd.f32 %v293, %v317
        %v334 = vadd.f32 %v294, %v318
        %v335 = vmax.f32 %v319, 0.0
        %v336 = vmax.f32 %v320, 0.0
        %v337 = vmax.f32 %v321, 0.0
        %v338 = vmax.f32 %v322, 0.0
        %v339 = vmax.f32 %v323, 0.0
        %v340 = vmax.f32 %v324, 0.0
        %v341 = vmax.f32 %v325, 0.0
        %v342 = vmax.f32 %v326, 0.0
        %v343 = vmax.f32 %v327, 0.0
        %v344 = vmax.f32 %v328, 0.0
        %v345 = vmax.f32 %v329, 0.0
        %v346 = vmax.f32 %v330, 0.0
        %v347 = vmax.f32 %v331, 0.0
        %v348 = vmax.f32 %v332, 0.0
        %v349 = vmax.f32 %v333, 0.0
        %v350 = vmax.f32 %v334, 0.0
        %351 = vst [vmem:[%s211] sm:$0xff] %v335
        %352 = vst [vmem:[%s211 + $0x8] sm:$0xff] %v336
        %353 = vst [vmem:[%s211 + $0x10] sm:$0xff] %v337
        %354 = vst [vmem:[%s211 + $0x18] sm:$0xff] %v338
        %355 = vst [vmem:[%s211 + $0x20] sm:$0xff] %v339
        %356 = vst [vmem:[%s211 + $0x28] sm:$0xff] %v340
        %357 = vst [vmem:[%s211 + $0x30] sm:$0xff] %v341
        %358 = vst [vmem:[%s211 + $0x38] sm:$0xff] %v342
        %359 = vst [vmem:[%s211 + $0x40] sm:$0xff] %v343
        %360 = vst [vmem:[%s211 + $0x48] sm:$0xff] %v344
        %361 = vst [vmem:[%s211 + $0x50] sm:$0xff] %v345
        %362 = vst [vmem:[%s211 + $0x58] sm:$0xff] %v346
        %363 = vst [vmem:[%s211 + $0x60] sm:$0xff] %v347
        %364 = vst [vmem:[%s211 + $0x68] sm:$0xff] %v348
        %365 = vst [vmem:[%s211 + $0x70] sm:$0xff] %v349
        %366 = vst [vmem:[%s211 + $0x78] sm:$0xff] %v350
        %s367 = sand.u32 %s120, 1
        %s368 = scalar_lea.sflag [#allocation3], %s367
        %s369 = sand.u32 %s120, 1
        %s370 = smul.addr %s369, 128
        %s371 = scalar_lea.vmem [#allocation2], %s370
        // Predicated region
        $region37: #{bottleneck_forward.7} parent=35 // pred_check
          %p372 = pneg %p130
        $region38: #{bottleneck_forward.7} parent=35 // pred_check_branch
          %374 = sbr.rel (%p372) target = $region40
        $region39: #{bottleneck_forward.7} parent=35 // pred_region
          %s375 = smul.u32 8, %s18
          %377 = vsyncadd %s368, 0
          %s378 = smul.addr %s375, 2
          %s379 = smul.addr %s378, 8
          %s380 = scalar_lea.hbm %s4, %s379
          %s381 = sshll.u32 %s371, 4
          %s382 = int_to_ptr.vmem [resolvable:$true] %s381
          %s383 = sshll.u32 %s380, 4
          %s384 = int_to_ptr.hbm [resolvable:$true] %s383
          %389 = dma.vmem_to_hbm [thread:$0]  %s382, 2048, %s384, %s368, 256, 256, 16
        $region40: #{bottleneck_forward.7} parent=35 // pred_fallthru
          _
      $region36: #{bottleneck_forward.7} parent=5 // pred_fallthru
        _
      %p390 = scmp.le.s32.totalorder 2, %s13
      // Predicated region
      $region41: #{bottleneck_forward.7} parent=5 // pred_check
        %p391 = pneg %p390
      $region42: #{bottleneck_forward.7} parent=5 // pred_check_branch
        %393 = sbr.rel (%p391) target = $region44
      $region43: #{bottleneck_forward.7} parent=5 // pred_region
        %s394 = ssub.s32 %s13, 2
        // Predicated region
        $region45: #{bottleneck_forward.7} parent=43 // pred_check
          %p395 = pneg %p136
        $region46: #{bottleneck_forward.7} parent=43 // pred_check_branch
          %397 = sbr.rel (%p395) target = $region48
        $region47: #{bottleneck_forward.7} parent=43 // pred_region
          %s398 = sand.u32 %s121, 1
          %s399 = scalar_lea.sflag [#allocation3], %s398
          %s400 = sand.u32 %s121, 1
          %s401 = smul.addr %s400, 128
          %s402 = scalar_lea.vmem [#allocation2], %s401
          %404 = dma.done %s399, 2048
        $region48: #{bottleneck_forward.7} parent=43 // pred_fallthru
          _
      $region44: #{bottleneck_forward.7} parent=5 // pred_fallthru
        _
    $region6: #{bottleneck_forward.7} parent=1 // loop_footer
      %s17 = sadd.s32 1, %s13
    $region7: #{bottleneck_forward.7} parent=1 // loop_footer_branch
      %12 = sbr.rel target = $region3
    $region8: #{bottleneck_forward.7} parent=1 // loop_exit
      _
    %405 = vsyncpa [#allocation3], 1
    %s406 = scalar_lea.sflag [#allocation3], 1
    %407 = vsyncpa %s406, 1

// kernel: bottleneck_forward.5
$region0: #{bottleneck_forward.5}
  #allocation0 [shape = 'u32[]', space=smem, size = 0x4, offset = 0x4, fixed_abs, tag = 'smem constant byte address 0x4 - core index']
  #allocation1 [shape = 'u32[72,128]{1,0:T(1,128)}', space=vmem, size = 0x9000, scoped, tag = 'internal scratch']
  %s0 = inlined_call_operand.vmem [shape: bf16[2,8,8,8], index: 0, kind: input, shape index: {}]
  %s1 = inlined_call_operand.vmem [shape: f32[1,8], index: 1, kind: input, shape index: {}]
  %s2 = inlined_call_operand.vmem [shape: f32[1,8], index: 2, kind: input, shape index: {}]
  %s3 = inlined_call_operand.vmem [shape: bf16[9,8,8], index: 3, kind: input, shape index: {}]
  %s4 = inlined_call_operand.vmem [shape: bf16[2,64,8], index: 4, kind: output, shape index: {0}]
  %s5 = inlined_call_operand.vmem [shape: f32[2,2,8], index: 5, kind: output, shape index: {1}]
  %6 = xla_tuple %s4, %s5
  %s7 = sld [smem:[#allocation0]]
  $region61: #{bottleneck_forward.5} parent=0
    _
  %s9 = ssub.s32 1, %s7
  %s10 = scalar_select 0, %s9, %s7
  loop: start=0, step=1, limit=4
  $region2: #{bottleneck_forward.5} parent=0 // loop_pre_header
    _
  $region3: #{bottleneck_forward.5} parent=0 // loop_header
    %s12 = sphi 0, %s16
    %p13 = scmp.ge.s32.totalorder %s12, 4
    %s19 = sphi 0, %s31
    %s20 = sphi 0, %s27
    %s21 = sphi 0, %s19
    %s22 = sphi 0, %s20
    %s23 = sphi 0, %s21
    %s24 = sphi 0, %s22
    %s36 = sphi 0, %s38
    %s39 = sphi 0, %s36
    %s40 = sphi 0, %s39
    %s56 = sphi 0, %s40
    %s60 = sphi 0, %s60
    %s62 = sphi 0, %s60
    %s63 = sphi 0, %s62
    %s77 = sphi 0, %s63
    %s81 = sphi 0, %s81
    %s83 = sphi 0, %s81
    %s84 = sphi 0, %s83
    %s98 = sphi 0, %s84
    %s102 = sphi 0, %s102
    %s104 = sphi 0, %s102
    %s105 = sphi 0, %s104
    %s119 = sphi 0, %s105
    %s127 = sphi 0, %s129
    %s130 = sphi 0, %s127
    %s131 = sphi 0, %s130
    %s147 = sphi 0, %s131
    %s153 = sphi 0, %s155
    %s156 = sphi 0, %s153
    %s157 = sphi 0, %s156
    %s173 = sphi 0, %s157
  $region4: #{bottleneck_forward.5} parent=0 // loop_header_branch
    %15 = sbr.rel (%p13) target = $region8
  $region5: #{bottleneck_forward.5} parent=0 // loop_body
    %s17 = ssub.s32 %s12, 1
    %s18 = ssub.s32 %s12, 2
    %s25 = sadd.s32 1, %s20
    %p26 = scmp.ge.s32.totalorder %s25, 1
    %s27 = scalar_select %p26, 0, %s25
    %s28 = sadd.s32 1, %s19
    %s29 = scalar_select %p26, %s28, %s19
    %p30 = scmp.ge.s32.totalorder %s29, 2
    %s31 = scalar_select %p30, 0, %s29
    %s32 = sadd.s32 %s19, %s20
    %s33 = sadd.s32 %s31, %s27
    %s34 = ssub.s32 %s32, %s33
    %p35 = scmp.eq.s32.totalorder %s34, 0
    %s37 = sadd.s32 %s36, 1
    %s38 = scalar_select %p35, %s36, %s37
    %p41 = pneg %p35
    %p42 = scmp.eq.s32.totalorder %s12, 1
    %p43 = por %p41, %p42
    %p44 = scmp.ne.s32.totalorder %s36, %s39
    %p45 = scmp.eq.s32.totalorder %s12, 0
    %p46 = por %p44, %p45
    %p47 = scmp.ne.s32.totalorder %s36, %s39
    %p48 = scmp.eq.s32.totalorder %s17, 1
    %p49 = por %p47, %p48
    %p50 = scmp.ne.s32.totalorder %s39, %s40
    %p51 = scmp.eq.s32.totalorder %s17, 0
    %p52 = por %p50, %p51
    %p53 = scmp.ne.s32.totalorder %s39, %s40
    %p54 = scmp.eq.s32.totalorder %s18, 1
    %p55 = por %p53, %p54
    %p57 = scmp.ne.s32.totalorder %s40, %s56
    %p58 = scmp.eq.s32.totalorder %s18, 0
    %p59 = por %p57, %p58
    %s61 = sadd.s32 %s60, 1
    %p64 = scmp.eq.s32.totalorder %s12, 1
    %p65 = scmp.ne.s32.totalorder %s60, %s62
    %p66 = scmp.eq.s32.totalorder %s12, 0
    %p67 = por %p65, %p66
    %p68 = scmp.ne.s32.totalorder %s60, %s62
    %p69 = scmp.eq.s32.totalorder %s17, 1
    %p70 = por %p68, %p69
    %p71 = scmp.ne.s32.totalorder %s62, %s63
    %p72 = scmp.eq.s32.totalorder %s17, 0
    %p73 = por %p71, %p72
    %p74 = scmp.ne.s32.totalorder %s62, %s63
    %p75 = scmp.eq.s32.totalorder %s18, 1
    %p76 = por %p74, %p75
    %p78 = scmp.ne.s32.totalorder %s63, %s77
    %p79 = scmp.eq.s32.totalorder %s18, 0
    %p80 = por %p78, %p79
    %s82 = sadd.s32 %s81, 1
    %p85 = scmp.eq.s32.totalorder %s12, 1
    %p86 = scmp.ne.s32.totalorder %s81, %s83
    %p87 = scmp.eq.s32.totalorder %s12, 0
    %p88 = por %p86, %p87
    %p89 = scmp.ne.s32.totalorder %s81, %s83
    %p90 = scmp.eq.s32.totalorder %s17, 1
    %p91 = por %p89, %p90
    %p92 = scmp.ne.s32.totalorder %s83, %s84
    %p93 = scmp.eq.s32.totalorder %s17, 0
    %p94 = por %p92, %p93
    %p95 = scmp.ne.s32.totalorder %s83, %s84
    %p96 = scmp.eq.s32.totalorder %s18, 1
    %p97 = por %p95, %p96
    %p99 = scmp.ne.s32.totalorder %s84, %s98
    %p100 = scmp.eq.s32.totalorder %s18, 0
    %p101 = por %p99, %p100
    %s103 = sadd.s32 %s102, 1
    %p106 = scmp.eq.s32.totalorder %s12, 1
    %p107 = scmp.ne.s32.totalorder %s102, %s104
    %p108 = scmp.eq.s32.totalorder %s12, 0
    %p109 = por %p107, %p108
    %p110 = scmp.ne.s32.totalorder %s102, %s104
    %p111 = scmp.eq.s32.totalorder %s17, 1
    %p112 = por %p110, %p111
    %p113 = scmp.ne.s32.totalorder %s104, %s105
    %p114 = scmp.eq.s32.totalorder %s17, 0
    %p115 = por %p113, %p114
    %p116 = scmp.ne.s32.totalorder %s104, %s105
    %p117 = scmp.eq.s32.totalorder %s18, 1
    %p118 = por %p116, %p117
    %p120 = scmp.ne.s32.totalorder %s105, %s119
    %p121 = scmp.eq.s32.totalorder %s18, 0
    %p122 = por %p120, %p121
    %s123 = sadd.s32 %s19, %s20
    %s124 = sadd.s32 %s31, %s27
    %s125 = ssub.s32 %s123, %s124
    %p126 = scmp.eq.s32.totalorder %s125, 0
    %s128 = sadd.s32 %s127, 1
    %s129 = scalar_select %p126, %s127, %s128
    %p132 = pneg %p126
    %p133 = scmp.eq.s32.totalorder %s12, 1
    %p134 = por %p132, %p133
    %p135 = scmp.ne.s32.totalorder %s127, %s130
    %p136 = scmp.eq.s32.totalorder %s12, 0
    %p137 = por %p135, %p136
    %p138 = scmp.ne.s32.totalorder %s127, %s130
    %p139 = scmp.eq.s32.totalorder %s17, 1
    %p140 = por %p138, %p139
    %p141 = scmp.ne.s32.totalorder %s130, %s131
    %p142 = scmp.eq.s32.totalorder %s17, 0
    %p143 = por %p141, %p142
    %p144 = scmp.ne.s32.totalorder %s130, %s131
    %p145 = scmp.eq.s32.totalorder %s18, 1
    %p146 = por %p144, %p145
    %p148 = scmp.ne.s32.totalorder %s131, %s147
    %p149 = scmp.eq.s32.totalorder %s18, 0
    %p150 = por %p148, %p149
    %s151 = ssub.s32 %s19, %s31
    %p152 = scmp.eq.s32.totalorder %s151, 0
    %s154 = sadd.s32 %s153, 1
    %s155 = scalar_select %p152, %s153, %s154
    %p158 = pneg %p152
    %p159 = scmp.eq.s32.totalorder %s12, 1
    %p160 = por %p158, %p159
    %p161 = scmp.ne.s32.totalorder %s153, %s156
    %p162 = scmp.eq.s32.totalorder %s12, 0
    %p163 = por %p161, %p162
    %p164 = scmp.ne.s32.totalorder %s153, %s156
    %p165 = scmp.eq.s32.totalorder %s17, 1
    %p166 = por %p164, %p165
    %p167 = scmp.ne.s32.totalorder %s156, %s157
    %p168 = scmp.eq.s32.totalorder %s17, 0
    %p169 = por %p167, %p168
    %p170 = scmp.ne.s32.totalorder %s156, %s157
    %p171 = scmp.eq.s32.totalorder %s18, 1
    %p172 = por %p170, %p171
    %p174 = scmp.ne.s32.totalorder %s157, %s173
    %p175 = scmp.eq.s32.totalorder %s18, 0
    %p176 = por %p174, %p175
    %p177 = scmp.le.s32.totalorder 1, %s12
    %p178 = scmp.lt.s32.totalorder %s12, 3
    %p179 = pnand %p177, %p178
    %p180 = pneg %p179
    // Predicated region
    $region9: #{bottleneck_forward.5} parent=5 // pred_check
      _
    $region10: #{bottleneck_forward.5} parent=5 // pred_check_branch
      %182 = sbr.rel (%p179) target = $region12
    $region11: #{bottleneck_forward.5} parent=5 // pred_region
      %s183 = ssub.s32 %s12, 1
      // Predicated region
      $region13: #{bottleneck_forward.5} parent=11 // pred_check
        %p184 = pneg %p73
      $region14: #{bottleneck_forward.5} parent=11 // pred_check_branch
        %186 = sbr.rel (%p184) target = $region16
      $region15: #{bottleneck_forward.5} parent=11 // pred_region
        _
      $region16: #{bottleneck_forward.5} parent=11 // pred_fallthru
        _
      // Predicated region
      $region17: #{bottleneck_forward.5} parent=11 // pred_check
        %p187 = pneg %p94
      $region18: #{bottleneck_forward.5} parent=11 // pred_check_branch
        %189 = sbr.rel (%p187) target = $region20
      $region19: #{bottleneck_forward.5} parent=11 // pred_region
        _
      $region20: #{bottleneck_forward.5} parent=11 // pred_fallthru
        _
      // Predicated region
      $region21: #{bottleneck_forward.5} parent=11 // pred_check
        %p190 = pneg %p115
      $region22: #{bottleneck_forward.5} parent=11 // pred_check_branch
        %192 = sbr.rel (%p190) target = $region24
      $region23: #{bottleneck_forward.5} parent=11 // pred_region
        _
      $region24: #{bottleneck_forward.5} parent=11 // pred_fallthru
        _
    $region12: #{bottleneck_forward.5} parent=5 // pred_fallthru
      _
    %p193 = scmp.lt.s32.totalorder %s12, 2
    // Predicated region
    $region25: #{bottleneck_forward.5} parent=5 // pred_check
      %p194 = pneg %p193
    $region26: #{bottleneck_forward.5} parent=5 // pred_check_branch
      %196 = sbr.rel (%p194) target = $region28
    $region27: #{bottleneck_forward.5} parent=5 // pred_region
      // Predicated region
      $region29: #{bottleneck_forward.5} parent=27 // pred_check
        %p197 = pneg %p46
      $region30: #{bottleneck_forward.5} parent=27 // pred_check_branch
        %199 = sbr.rel (%p197) target = $region32
      $region31: #{bottleneck_forward.5} parent=27 // pred_region
        %s200 = sadd.s32 %s19, %s20
        %p201 = scmp.lt.s32.totalorder %s200, 1
        %s202 = scalar_select %p201, %s200, 1
        %s203 = smul.addr %s202, 8
        %s204 = smul.addr %s203, 4
        %s205 = scalar_lea.vmem %s0, %s204
        %s206 = sadd.s32 %s19, %s20
      $region32: #{bottleneck_forward.5} parent=27 // pred_fallthru
        _
    $region28: #{bottleneck_forward.5} parent=5 // pred_fallthru
      _
    %p207 = scmp.le.s32.totalorder 1, %s12
    %p208 = scmp.lt.s32.totalorder %s12, 3
    %p209 = pnand %p207, %p208
    %p210 = pneg %p209
    // Predicated region
    $region33: #{bottleneck_forward.5} parent=5 // pred_check
      _
    $region34: #{bottleneck_forward.5} parent=5 // pred_check_branch
      %212 = sbr.rel (%p209) target = $region36
    $region35: #{bottleneck_forward.5} parent=5 // pred_region
      %s213 = ssub.s32 %s12, 1
      %s214 = sadd.s32 %s21, %s22
      %p215 = scmp.lt.s32.totalorder %s214, 1
      %s216 = scalar_select %p215, %s214, 1
      %s217 = smul.addr %s216, 8
      %s218 = smul.addr %s217, 4
      %s219 = scalar_lea.vmem %s0, %s218
      %p220 = pneg %p52
      %p221 = pneg %p49
      %p222 = pneg %p73
      %p223 = pneg %p70
      %p224 = pneg %p94
      %p225 = pneg %p91
      %p226 = pneg %p115
      %p227 = pneg %p112
      %p228 = pneg %p143
      %p229 = pneg %p140
      %s230 = sadd.s32 %s21, %s22
      %p231 = scmp.lt.s32.totalorder %s230, 1
      %s232 = scalar_select %p231, %s230, 1
      %s233 = smul.addr %s232, 8
      %s234 = smul.addr %s233, 4
      %s235 = scalar_lea.vmem %s4, %s234
      %p236 = pneg %p169
      %p237 = pneg %p166
      %p238 = scmp.lt.s32.totalorder %s21, 1
      %s239 = scalar_select %p238, %s21, 1
      %s240 = smul.addr %s239, 2
      %s241 = scalar_lea.vmem %s5, %s240
      %s242 = sadd.s32 %s21, %s22
      %p243 = scmp.lt.s32.totalorder %s242, 1
      %s244 = scalar_select %p243, %s242, 1
      %s245 = smul.addr %s244, 8
      %s246 = smul.addr %s245, 4
      %s247 = scalar_lea.vmem %s0, %s246
      %s248 = sadd.s32 %s21, %s22
      %s249 = sadd.s32 %s21, %s22
      %p250 = scmp.lt.s32.totalorder %s249, 1
      %s251 = scalar_select %p250, %s249, 1
      %s252 = smul.addr %s251, 8
      %s253 = smul.addr %s252, 4
      %s254 = scalar_lea.vmem %s4, %s253
      %s255 = sadd.s32 %s21, %s22
      %p256 = scmp.lt.s32.totalorder %s21, 1
      %s257 = scalar_select %p256, %s21, 1
      %s258 = smul.addr %s257, 2
      %s259 = scalar_lea.vmem %s5, %s258
      %v261 = vld [vmem:[%s247] sm:$0xf]
      %v262 = vld [vmem:[%s247 + $0x4] sm:$0xf]
      %v263 = vld [vmem:[%s247 + $0x8] sm:$0xf]
      %v264 = vld [vmem:[%s247 + $0xc] sm:$0xf]
      %v265 = vld [vmem:[%s247 + $0x10] sm:$0xf]
      %v266 = vld [vmem:[%s247 + $0x14] sm:$0xf]
      %v267 = vld [vmem:[%s247 + $0x18] sm:$0xf]
      %v268 = vld [vmem:[%s247 + $0x1c] sm:$0xf]
      %v269 = vunpack.c.l.bf16 %v261
      %v270 = vunpack.c.l.bf16 %v262
      %v271 = vunpack.c.l.bf16 %v263
      %v272 = vunpack.c.l.bf16 %v264
      %v273 = vunpack.c.l.bf16 %v265
      %v274 = vunpack.c.l.bf16 %v266
      %v275 = vunpack.c.l.bf16 %v267
      %v276 = vunpack.c.l.bf16 %v268
      %v277 = vld [vmem:[%s1] sm:$0x1]
      %v279 = vperm.slane %v277, 0
      %v281 = vmul.f32 %v269, %v279
      %v282 = vmul.f32 %v270, %v279
      %v283 = vmul.f32 %v271, %v279
      %v284 = vmul.f32 %v272, %v279
      %v285 = vmul.f32 %v273, %v279
      %v286 = vmul.f32 %v274, %v279
      %v287 = vmul.f32 %v275, %v279
      %v288 = vmul.f32 %v276, %v279
      %v289 = vld [vmem:[%s2] sm:$0x1]
      %v291 = vperm.slane %v289, 0
      %v293 = vadd.f32 %v281, %v291
      %v294 = vadd.f32 %v282, %v291
      %v295 = vadd.f32 %v283, %v291
      %v296 = vadd.f32 %v284, %v291
      %v297 = vadd.f32 %v285, %v291
      %v298 = vadd.f32 %v286, %v291
      %v299 = vadd.f32 %v287, %v291
      %v300 = vadd.f32 %v288, %v291
      %v301 = vmax.f32 %v293, 0.0
      %v302 = vmax.f32 %v294, 0.0
      %v303 = vmax.f32 %v295, 0.0
      %v304 = vmax.f32 %v296, 0.0
      %v305 = vmax.f32 %v297, 0.0
      %v306 = vmax.f32 %v298, 0.0
      %v307 = vmax.f32 %v299, 0.0
      %v308 = vmax.f32 %v300, 0.0
      %v309 = vpack.c.bf16 %v301, %v301
      %v310 = vpack.c.bf16 %v302, %v302
      %v311 = vpack.c.bf16 %v303, %v303
      %v312 = vpack.c.bf16 %v304, %v304
      %v313 = vpack.c.bf16 %v305, %v305
      %v314 = vpack.c.bf16 %v306, %v306
      %v315 = vpack.c.bf16 %v307, %v307
      %v316 = vpack.c.bf16 %v308, %v308
      %v318 = vshrl.u32 0, 16
      %v320 = vrot.slane %v318, 7
      %v321 = vshll.u32 0, 16
      %v323 = vor.u32 %v320, %v321
      %v325 = vshrl.u32 %v309, 16
      %v327 = vrot.slane %v325, 7
      %v328 = vshll.u32 %v309, 16
      %v330 = vor.u32 %v327, %v328
      %v332 = vshrl.u32 %v310, 16
      %v334 = vrot.slane %v332, 7
      %v335 = vshll.u32 %v310, 16
      %v337 = vor.u32 %v334, %v335
      %v339 = vshrl.u32 %v311, 16
      %v341 = vrot.slane %v339, 7
      %v342 = vshll.u32 %v311, 16
      %v344 = vor.u32 %v341, %v342
      %v346 = vshrl.u32 %v312, 16
      %v348 = vrot.slane %v346, 7
      %v349 = vshll.u32 %v312, 16
      %v351 = vor.u32 %v348, %v349
      %v353 = vshrl.u32 %v313, 16
      %v355 = vrot.slane %v353, 7
      %v356 = vshll.u32 %v313, 16
      %v358 = vor.u32 %v355, %v356
      %v360 = vshrl.u32 %v314, 16
      %v362 = vrot.slane %v360, 7
      %v363 = vshll.u32 %v314, 16
      %v365 = vor.u32 %v362, %v363
      %v367 = vshrl.u32 %v315, 16
      %v369 = vrot.slane %v367, 7
      %v370 = vshll.u32 %v315, 16
      %v372 = vor.u32 %v369, %v370
      %v374 = vshrl.u32 %v316, 16
      %v376 = vrot.slane %v374, 7
      %v377 = vshll.u32 %v316, 16
      %v379 = vor.u32 %v376, %v377
      %vm389 = vcmask 1040384
      %vm390 = vsmask.f32 256
      %vm391 = vmand %vm389, %vm390
      %v392 = vsel %vm391, 0, %v323
      %v393 = vsel %vm391, 0, %v330
      %v394 = vsel %vm391, 0, %v337
      %v395 = vsel %vm391, 0, %v344
      %v396 = vsel %vm391, 0, %v351
      %v397 = vsel %vm391, 0, %v358
      %v398 = vsel %vm391, 0, %v365
      %v399 = vsel %vm391, 0, %v372
      %v400 = vsel %vm391, 0, %v379
      %vm401 = vcmask 1044480
      %vm402 = vsmask.f32 4352
      %vm403 = vmand %vm401, %vm402
      %v404 = vsel %vm403, %v392, 0
      %v405 = vsel %vm403, %v393, 0
      %v406 = vsel %vm403, %v394, 0
      %v407 = vsel %vm403, %v395, 0
      %v408 = vsel %vm403, %v396, 0
      %v409 = vsel %vm403, %v397, 0
      %v410 = vsel %vm403, %v398, 0
      %v411 = vsel %vm403, %v399, 0
      %v412 = vsel %vm403, %v400, 0
      %v413 = vld [vmem:[%s3] sm:$0xf]
      %v422 = vunpack.c.l.b16 %v404
      %v423 = vunpack.c.h.b16 %v404
      %v424 = vunpack.c.l.b16 %v405
      %v425 = vunpack.c.h.b16 %v405
      %v426 = vunpack.c.l.b16 %v406
      %v427 = vunpack.c.h.b16 %v406
      %v428 = vunpack.c.l.b16 %v407
      %v429 = vunpack.c.h.b16 %v407
      %v430 = vunpack.c.l.b16 %v408
      %v431 = vunpack.c.h.b16 %v408
      %v432 = vunpack.c.l.b16 %v409
      %v433 = vunpack.c.h.b16 %v409
      %v434 = vunpack.c.l.b16 %v410
      %v435 = vunpack.c.h.b16 %v410
      %v436 = vunpack.c.l.b16 %v411
      %v437 = vunpack.c.h.b16 %v411
      %v438 = vpack.c.b16 %v422, %v422
      %v439 = vpack.c.b16 %v423, %v423
      %v440 = vpack.c.b16 %v424, %v424
      %v441 = vpack.c.b16 %v425, %v425
      %v442 = vpack.c.b16 %v426, %v426
      %v443 = vpack.c.b16 %v427, %v427
      %v444 = vpack.c.b16 %v428, %v428
      %v445 = vpack.c.b16 %v429, %v429
      %v446 = vpack.c.b16 %v430, %v430
      %v447 = vpack.c.b16 %v431, %v431
      %v448 = vpack.c.b16 %v432, %v432
      %v449 = vpack.c.b16 %v433, %v433
      %v450 = vpack.c.b16 %v434, %v434
      %v451 = vpack.c.b16 %v435, %v435
      %v452 = vpack.c.b16 %v436, %v436
      %v453 = vpack.c.b16 %v437, %v437
      %vm454 = vsmask.f32 3328
      %vm455 = vsmask.f32 7440
      %vm456 = vmor %vm454, %vm455
      %v458 = vshrl.u32 %v438, 16
      %v460 = vrot.slane %v458, 4
      %v461 = vshll.u32 %v438, 16
      %v463 = vrot.slane %v461, 5
      %v464 = vor.u32 %v460, %v463
      %v465 = vrot.slane %v464, 4
      %v467 = vshll.u32 %v439, 16
      %v469 = vrot.slane %v467, 5
      %v470 = vsel %vm456, %v465, %v469
      %v472 = vshrl.u32 %v440, 16
      %v474 = vrot.slane %v472, 4
      %v475 = vshll.u32 %v440, 16
      %v477 = vrot.slane %v475, 5
      %v478 = vor.u32 %v474, %v477
      %v479 = vrot.slane %v478, 4
      %v481 = vshll.u32 %v441, 16
      %v483 = vrot.slane %v481, 5
      %v484 = vsel %vm456, %v479, %v483
      %v486 = vshrl.u32 %v442, 16
      %v488 = vrot.slane %v486, 4
      %v489 = vshll.u32 %v442, 16
      %v491 = vrot.slane %v489, 5
      %v492 = vor.u32 %v488, %v491
      %v493 = vrot.slane %v492, 4
      %v495 = vshll.u32 %v443, 16
      %v497 = vrot.slane %v495, 5
      %v498 = vsel %vm456, %v493, %v497
      %v500 = vshrl.u32 %v444, 16
      %v502 = vrot.slane %v500, 4
      %v503 = vshll.u32 %v444, 16
      %v505 = vrot.slane %v503, 5
      %v506 = vor.u32 %v502, %v505
      %v507 = vrot.slane %v506, 4
      %v509 = vshll.u32 %v445, 16
      %v511 = vrot.slane %v509, 5
      %v512 = vsel %vm456, %v507, %v511
      %v514 = vshrl.u32 %v446, 16
      %v516 = vrot.slane %v514, 4
      %v517 = vshll.u32 %v446, 16
      %v519 = vrot.slane %v517, 5
      %v520 = vor.u32 %v516, %v519
      %v521 = vrot.slane %v520, 4
      %v523 = vshll.u32 %v447, 16
      %v525 = vrot.slane %v523, 5
      %v526 = vsel %vm456, %v521, %v525
      %v528 = vshrl.u32 %v448, 16
      %v530 = vrot.slane %v528, 4
      %v531 = vshll.u32 %v448, 16
      %v533 = vrot.slane %v531, 5
      %v534 = vor.u32 %v530, %v533
      %v535 = vrot.slane %v534, 4
      %v537 = vshll.u32 %v449, 16
      %v539 = vrot.slane %v537, 5
      %v540 = vsel %vm456, %v535, %v539
      %v542 = vshrl.u32 %v450, 16
      %v544 = vrot.slane %v542, 4
      %v545 = vshll.u32 %v450, 16
      %v547 = vrot.slane %v545, 5
      %v548 = vor.u32 %v544, %v547
      %v549 = vrot.slane %v548, 4
      %v551 = vshll.u32 %v451, 16
      %v553 = vrot.slane %v551, 5
      %v554 = vsel %vm456, %v549, %v553
      %v556 = vshrl.u32 %v452, 16
      %v558 = vrot.slane %v556, 4
      %v559 = vshll.u32 %v452, 16
      %v561 = vrot.slane %v559, 5
      %v562 = vor.u32 %v558, %v561
      %v563 = vrot.slane %v562, 4
      %v565 = vshll.u32 %v453, 16
      %v567 = vrot.slane %v565, 5
      %v568 = vsel %vm456, %v563, %v567
      %s569 = scalar_lea.vmem %s3, 4
      %v570 = vld [vmem:[%s569] sm:$0xf]
      %v571 = vunpack.c.l.b16 %v470
      %v572 = vunpack.c.l.b16 %v484
      %v573 = vunpack.c.l.b16 %v498
      %v574 = vunpack.c.l.b16 %v512
      %v575 = vunpack.c.l.b16 %v526
      %v576 = vunpack.c.l.b16 %v540
      %v577 = vunpack.c.l.b16 %v554
      %v578 = vunpack.c.l.b16 %v568
      %v579 = vpack.c.b16 %v572, %v571
      %v580 = vpack.c.b16 %v574, %v573
      %v581 = vpack.c.b16 %v576, %v575
      %v582 = vpack.c.b16 %v578, %v577
      %vm583 = vcmask 64512
      %v585 = vsel %vm583, %v579, 0
      %v588 = vsel %vm583, %v580, 0
      %v591 = vsel %vm583, %v581, 0
      %v594 = vsel %vm583, %v582, 0
      %vm596 = vcmask 1043456
      %v598 = vsel %vm596, %v570, 0
      %600 = vmatpush.bf16.msra.mxu0 0
      %601 = vmatpush.bf16.msra.mxu0 0
      %602 = vmatpush.bf16.msra.mxu0 0
      %603 = vmatpush.bf16.msra.mxu0 0
      %604 = vmatpush.bf16.msra.mxu0 0
      %605 = vmatpush.bf16.msra.mxu0 0
      %606 = vmatpush.bf16.msra.mxu0 0
      %607 = vmatpush.bf16.msra.mxu0 %v598
      %608 = vmatmul.bf16.gmra.mxu0 %v585
      %v609 = vpop.f32.mrf.mxu0
      %v610 = vadd.f32 0.0, %v609
      %v611 = vpop.f32.mrf.mxu0
      %v612 = vadd.f32 0.0, %v611
      %613 = vmatmul.bf16.gmra.mxu0 %v588
      %v614 = vpop.f32.mrf.mxu0
      %v615 = vadd.f32 0.0, %v614
      %v616 = vpop.f32.mrf.mxu0
      %v617 = vadd.f32 0.0, %v616
      %618 = vmatmul.bf16.gmra.mxu0 %v591
      %v619 = vpop.f32.mrf.mxu0
      %v620 = vadd.f32 0.0, %v619
      %v621 = vpop.f32.mrf.mxu0
      %v622 = vadd.f32 0.0, %v621
      %623 = vmatmul.bf16.gmra.mxu0 %v594
      %v624 = vpop.f32.mrf.mxu0
      %v625 = vadd.f32 0.0, %v624
      %v626 = vpop.f32.mrf.mxu0
      %v627 = vadd.f32 0.0, %v626
      %628 = vdwg.mxu0
      %v629 = vpack.c.b16 %v424, %v422
      %v630 = vpack.c.b16 %v428, %v426
      %v631 = vpack.c.b16 %v432, %v430
      %v632 = vpack.c.b16 %v436, %v434
      %v634 = vsel %vm583, %v629, 0
      %v637 = vsel %vm583, %v630, 0
      %v640 = vsel %vm583, %v631, 0
      %v643 = vsel %vm583, %v632, 0
      %v646 = vsel %vm596, %v413, 0
      %648 = vmatpush.bf16.msra.mxu0 0
      %649 = vmatpush.bf16.msra.mxu0 0
      %650 = vmatpush.bf16.msra.mxu0 0
      %651 = vmatpush.bf16.msra.mxu0 0
      %652 = vmatpush.bf16.msra.mxu0 0
      %653 = vmatpush.bf16.msra.mxu0 0
      %654 = vmatpush.bf16.msra.mxu0 0
      %655 = vmatpush.bf16.msra.mxu0 %v646
      %656 = vmatmul.bf16.gmra.mxu0 %v634
      %v657 = vpop.f32.mrf.mxu0
      %v658 = vadd.f32 %v610, %v657
      %v659 = vpop.f32.mrf.mxu0
      %v660 = vadd.f32 %v612, %v659
      %661 = vmatmul.bf16.gmra.mxu0 %v637
      %v662 = vpop.f32.mrf.mxu0
      %v663 = vadd.f32 %v615, %v662
      %v664 = vpop.f32.mrf.mxu0
      %v665 = vadd.f32 %v617, %v664
      %666 = vmatmul.bf16.gmra.mxu0 %v640
      %v667 = vpop.f32.mrf.mxu0
      %v668 = vadd.f32 %v620, %v667
      %v669 = vpop.f32.mrf.mxu0
      %v670 = vadd.f32 %v622, %v669
      %671 = vmatmul.bf16.gmra.mxu0 %v643
      %v672 = vpop.f32.mrf.mxu0
      %v673 = vadd.f32 %v625, %v672
      %v674 = vpop.f32.mrf.mxu0
      %v675 = vadd.f32 %v627, %v674
      %676 = vdwg.mxu0
      %vm677 = vcmask 1042432
      %vm678 = vcmask 1046532
      %vm679 = vmor %vm677, %vm678
      %v680 = vrot.slane %v438, 5
      %v681 = vrot.slane %v680, 4
      %v682 = vrot.slane %v439, 5
      %v683 = vsel %vm679, %v681, %v682
      %v684 = vrot.slane %v440, 5
      %v685 = vrot.slane %v684, 4
      %v686 = vrot.slane %v441, 5
      %v687 = vsel %vm679, %v685, %v686
      %v688 = vrot.slane %v442, 5
      %v689 = vrot.slane %v688, 4
      %v690 = vrot.slane %v443, 5
      %v691 = vsel %vm679, %v689, %v690
      %v692 = vrot.slane %v444, 5
      %v693 = vrot.slane %v692, 4
      %v694 = vrot.slane %v445, 5
      %v695 = vsel %vm679, %v693, %v694
      %v696 = vrot.slane %v446, 5
      %v697 = vrot.slane %v696, 4
      %v698 = vrot.slane %v447, 5
      %v699 = vsel %vm679, %v697, %v698
      %v700 = vrot.slane %v448, 5
      %v701 = vrot.slane %v700, 4
      %v702 = vrot.slane %v449, 5
      %v703 = vsel %vm679, %v701, %v702
      %v704 = vrot.slane %v450, 5
      %v705 = vrot.slane %v704, 4
      %v706 = vrot.slane %v451, 5
      %v707 = vsel %vm679, %v705, %v706
      %v708 = vrot.slane %v452, 5
      %v709 = vrot.slane %v708, 4
      %v710 = vrot.slane %v453, 5
      %v711 = vsel %vm679, %v709, %v710
      %s712 = scalar_lea.vmem %s3, 8
      %v713 = vld [vmem:[%s712] sm:$0xf]
      %v714 = vunpack.c.l.b16 %v683
      %v715 = vunpack.c.l.b16 %v687
      %v716 = vunpack.c.l.b16 %v691
      %v717 = vunpack.c.l.b16 %v695
      %v718 = vunpack.c.l.b16 %v699
      %v719 = vunpack.c.l.b16 %v703
      %v720 = vunpack.c.l.b16 %v707
      %v721 = vunpack.c.l.b16 %v711
      %v722 = vpack.c.b16 %v715, %v714
      %v723 = vpack.c.b16 %v717, %v716
      %v724 = vpack.c.b16 %v719, %v718
      %v725 = vpack.c.b16 %v721, %v720
      %v727 = vsel %vm583, %v722, 0
      %v730 = vsel %vm583, %v723, 0
      %v733 = vsel %vm583, %v724, 0
      %v736 = vsel %vm583, %v725, 0
      %v739 = vsel %vm596, %v713, 0
      %741 = vmatpush.bf16.msra.mxu0 0
      %742 = vmatpush.bf16.msra.mxu0 0
      %743 = vmatpush.bf16.msra.mxu0 0
      %744 = vmatpush.bf16.msra.mxu0 0
      %745 = vmatpush.bf16.msra.mxu0 0
      %746 = vmatpush.bf16.msra.mxu0 0
      %747 = vmatpush.bf16.msra.mxu0 0
      %748 = vmatpush.bf16.msra.mxu0 %v739
      %749 = vmatmul.bf16.gmra.mxu0 %v727
      %v750 = vpop.f32.mrf.mxu0
      %v751 = vadd.f32 0.0, %v750
      %v752 = vpop.f32.mrf.mxu0
      %v753 = vadd.f32 0.0, %v752
      %754 = vmatmul.bf16.gmra.mxu0 %v730
      %v755 = vpop.f32.mrf.mxu0
      %v756 = vadd.f32 0.0, %v755
      %v757 = vpop.f32.mrf.mxu0
      %v758 = vadd.f32 0.0, %v757
      %759 = vmatmul.bf16.gmra.mxu0 %v733
      %v760 = vpop.f32.mrf.mxu0
      %v761 = vadd.f32 0.0, %v760
      %v762 = vpop.f32.mrf.mxu0
      %v763 = vadd.f32 0.0, %v762
      %764 = vmatmul.bf16.gmra.mxu0 %v736
      %v765 = vpop.f32.mrf.mxu0
      %v766 = vadd.f32 0.0, %v765
      %v767 = vpop.f32.mrf.mxu0
      %v768 = vadd.f32 0.0, %v767
      %769 = vdwg.mxu0
      %v770 = vadd.f32 %v658, %v751
      %v771 = vadd.f32 %v660, %v753
      %v772 = vadd.f32 %v663, %v756
      %v773 = vadd.f32 %v665, %v758
      %v774 = vadd.f32 %v668, %v761
      %v775 = vadd.f32 %v670, %v763
      %v776 = vadd.f32 %v673, %v766
      %v777 = vadd.f32 %v675, %v768
      %s778 = scalar_lea.vmem %s3, 12
      %v779 = vld [vmem:[%s778] sm:$0xf]
      %v781 = vunpack.c.l.b16 %v412
      %v782 = vpack.c.b16 %v426, %v424
      %v783 = vpack.c.b16 %v430, %v428
      %v784 = vpack.c.b16 %v434, %v432
      %v785 = vpack.c.b16 %v781, %v436
      %v787 = vsel %vm583, %v782, 0
      %v790 = vsel %vm583, %v783, 0
      %v793 = vsel %vm583, %v784, 0
      %v796 = vsel %vm583, %v785, 0
      %v799 = vsel %vm596, %v779, 0
      %801 = vmatpush.bf16.msra.mxu0 0
      %802 = vmatpush.bf16.msra.mxu0 0
      %803 = vmatpush.bf16.msra.mxu0 0
      %804 = vmatpush.bf16.msra.mxu0 0
      %805 = vmatpush.bf16.msra.mxu0 0
      %806 = vmatpush.bf16.msra.mxu0 0
      %807 = vmatpush.bf16.msra.mxu0 0
      %808 = vmatpush.bf16.msra.mxu0 %v799
      %809 = vmatmul.bf16.gmra.mxu0 %v787
      %v810 = vpop.f32.mrf.mxu0
      %v811 = vadd.f32 0.0, %v810
      %v812 = vpop.f32.mrf.mxu0
      %v813 = vadd.f32 0.0, %v812
      %814 = vmatmul.bf16.gmra.mxu0 %v790
      %v815 = vpop.f32.mrf.mxu0
      %v816 = vadd.f32 0.0, %v815
      %v817 = vpop.f32.mrf.mxu0
      %v818 = vadd.f32 0.0, %v817
      %819 = vmatmul.bf16.gmra.mxu0 %v793
      %v820 = vpop.f32.mrf.mxu0
      %v821 = vadd.f32 0.0, %v820
      %v822 = vpop.f32.mrf.mxu0
      %v823 = vadd.f32 0.0, %v822
      %824 = vmatmul.bf16.gmra.mxu0 %v796
      %v825 = vpop.f32.mrf.mxu0
      %v826 = vadd.f32 0.0, %v825
      %v827 = vpop.f32.mrf.mxu0
      %v828 = vadd.f32 0.0, %v827
      %829 = vdwg.mxu0
      %v830 = vadd.f32 %v770, %v811
      %v831 = vadd.f32 %v771, %v813
      %v832 = vadd.f32 %v772, %v816
      %v833 = vadd.f32 %v773, %v818
      %v834 = vadd.f32 %v774, %v821
      %v835 = vadd.f32 %v775, %v823
      %v836 = vadd.f32 %v776, %v826
      %v837 = vadd.f32 %v777, %v828
      %v838 = vunpack.c.h.b16 %v412
      %v839 = vpack.c.b16 %v781, %v781
      %v840 = vpack.c.b16 %v838, %v838
      %v842 = vshrl.u32 %v839, 16
      %v844 = vrot.slane %v842, 4
      %v845 = vshll.u32 %v839, 16
      %v847 = vrot.slane %v845, 5
      %v848 = vor.u32 %v844, %v847
      %v849 = vrot.slane %v848, 4
      %v851 = vshll.u32 %v840, 16
      %v853 = vrot.slane %v851, 5
      %v854 = vsel %vm456, %v849, %v853
      %s855 = scalar_lea.vmem %s3, 16
      %v856 = vld [vmem:[%s855] sm:$0xf]
      %v857 = vunpack.c.l.b16 %v854
      %v858 = vpack.c.b16 %v573, %v572
      %v859 = vpack.c.b16 %v575, %v574
      %v860 = vpack.c.b16 %v577, %v576
      %v861 = vpack.c.b16 %v857, %v578
      %v863 = vsel %vm583, %v858, 0
      %v866 = vsel %vm583, %v859, 0
      %v869 = vsel %vm583, %v860, 0
      %v872 = vsel %vm583, %v861, 0
      %v875 = vsel %vm596, %v856, 0
      %877 = vmatpush.bf16.msra.mxu0 0
      %878 = vmatpush.bf16.msra.mxu0 0
      %879 = vmatpush.bf16.msra.mxu0 0
      %880 = vmatpush.bf16.msra.mxu0 0
      %881 = vmatpush.bf16.msra.mxu0 0
      %882 = vmatpush.bf16.msra.mxu0 0
      %883 = vmatpush.bf16.msra.mxu0 0
      %884 = vmatpush.bf16.msra.mxu0 %v875
      %885 = vmatmul.bf16.gmra.mxu0 %v863
      %v886 = vpop.f32.mrf.mxu0
      %v887 = vadd.f32 0.0, %v886
      %v888 = vpop.f32.mrf.mxu0
      %v889 = vadd.f32 0.0, %v888
      %890 = vmatmul.bf16.gmra.mxu0 %v866
      %v891 = vpop.f32.mrf.mxu0
      %v892 = vadd.f32 0.0, %v891
      %v893 = vpop.f32.mrf.mxu0
      %v894 = vadd.f32 0.0, %v893
      %895 = vmatmul.bf16.gmra.mxu0 %v869
      %v896 = vpop.f32.mrf.mxu0
      %v897 = vadd.f32 0.0, %v896
      %v898 = vpop.f32.mrf.mxu0
      %v899 = vadd.f32 0.0, %v898
      %900 = vmatmul.bf16.gmra.mxu0 %v872
      %v901 = vpop.f32.mrf.mxu0
      %v902 = vadd.f32 0.0, %v901
      %v903 = vpop.f32.mrf.mxu0
      %v904 = vadd.f32 0.0, %v903
      %905 = vdwg.mxu0
      %v906 = vadd.f32 %v830, %v887
      %v907 = vadd.f32 %v831, %v889
      %v908 = vadd.f32 %v832, %v892
      %v909 = vadd.f32 %v833, %v894
      %v910 = vadd.f32 %v834, %v897
      %v911 = vadd.f32 %v835, %v899
      %v912 = vadd.f32 %v836, %v902
      %v913 = vadd.f32 %v837, %v904
      %v914 = vrot.slane %v839, 5
      %v915 = vrot.slane %v914, 4
      %v916 = vrot.slane %v840, 5
      %v917 = vsel %vm679, %v915, %v916
      %s918 = scalar_lea.vmem %s3, 20
      %v919 = vld [vmem:[%s918] sm:$0xf]
      %v920 = vunpack.c.l.b16 %v917
      %v921 = vpack.c.b16 %v716, %v715
      %v922 = vpack.c.b16 %v718, %v717
      %v923 = vpack.c.b16 %v720, %v719
      %v924 = vpack.c.b16 %v920, %v721
      %v926 = vsel %vm583, %v921, 0
      %v929 = vsel %vm583, %v922, 0
      %v932 = vsel %vm583, %v923, 0
      %v935 = vsel %vm583, %v924, 0
      %v938 = vsel %vm596, %v919, 0
      %940 = vmatpush.bf16.msra.mxu0 0
      %941 = vmatpush.bf16.msra.mxu0 0
      %942 = vmatpush.bf16.msra.mxu0 0
      %943 = vmatpush.bf16.msra.mxu0 0
      %944 = vmatpush.bf16.msra.mxu0 0
      %945 = vmatpush.bf16.msra.mxu0 0
      %946 = vmatpush.bf16.msra.mxu0 0
      %947 = vmatpush.bf16.msra.mxu0 %v938
      %948 = vmatmul.bf16.gmra.mxu0 %v926
      %v949 = vpop.f32.mrf.mxu0
      %v950 = vadd.f32 0.0, %v949
      %v951 = vpop.f32.mrf.mxu0
      %v952 = vadd.f32 0.0, %v951
      %953 = vmatmul.bf16.gmra.mxu0 %v929
      %v954 = vpop.f32.mrf.mxu0
      %v955 = vadd.f32 0.0, %v954
      %v956 = vpop.f32.mrf.mxu0
      %v957 = vadd.f32 0.0, %v956
      %958 = vmatmul.bf16.gmra.mxu0 %v932
      %v959 = vpop.f32.mrf.mxu0
      %v960 = vadd.f32 0.0, %v959
      %v961 = vpop.f32.mrf.mxu0
      %v962 = vadd.f32 0.0, %v961
      %963 = vmatmul.bf16.gmra.mxu0 %v935
      %v964 = vpop.f32.mrf.mxu0
      %v965 = vadd.f32 0.0, %v964
      %v966 = vpop.f32.mrf.mxu0
      %v967 = vadd.f32 0.0, %v966
      %968 = vdwg.mxu0
      %v969 = vadd.f32 %v906, %v950
      %v970 = vadd.f32 %v907, %v952
      %v971 = vadd.f32 %v908, %v955
      %v972 = vadd.f32 %v909, %v957
      %v973 = vadd.f32 %v910, %v960
      %v974 = vadd.f32 %v911, %v962
      %v975 = vadd.f32 %v912, %v965
      %v976 = vadd.f32 %v913, %v967
      %s977 = scalar_lea.vmem %s3, 24
      %v978 = vld [vmem:[%s977] sm:$0xf]
      %v979 = vpack.c.b16 %v422, %v781
      %v981 = vsel %vm583, %v979, 0
      %v984 = vsel %vm596, %v978, 0
      %986 = vmatpush.bf16.msra.mxu0 0
      %987 = vmatpush.bf16.msra.mxu0 0
      %988 = vmatpush.bf16.msra.mxu0 0
      %989 = vmatpush.bf16.msra.mxu0 0
      %990 = vmatpush.bf16.msra.mxu0 0
      %991 = vmatpush.bf16.msra.mxu0 0
      %992 = vmatpush.bf16.msra.mxu0 0
      %993 = vmatpush.bf16.msra.mxu0 %v984
      %994 = vmatmul.bf16.gmra.mxu0 %v637
      %v995 = vpop.f32.mrf.mxu0
      %v996 = vadd.f32 0.0, %v995
      %v997 = vpop.f32.mrf.mxu0
      %v998 = vadd.f32 0.0, %v997
      %999 = vmatmul.bf16.gmra.mxu0 %v640
      %v1000 = vpop.f32.mrf.mxu0
      %v1001 = vadd.f32 0.0, %v1000
      %v1002 = vpop.f32.mrf.mxu0
      %v1003 = vadd.f32 0.0, %v1002
      %1004 = vmatmul.bf16.gmra.mxu0 %v643
      %v1005 = vpop.f32.mrf.mxu0
      %v1006 = vadd.f32 0.0, %v1005
      %v1007 = vpop.f32.mrf.mxu0
      %v1008 = vadd.f32 0.0, %v1007
      %1009 = vmatmul.bf16.gmra.mxu0 %v981
      %v1010 = vpop.f32.mrf.mxu0
      %v1011 = vadd.f32 0.0, %v1010
      %v1012 = vpop.f32.mrf.mxu0
      %v1013 = vadd.f32 0.0, %v1012
      %1014 = vdwg.mxu0
      %v1015 = vadd.f32 %v969, %v996
      %v1016 = vadd.f32 %v970, %v998
      %v1017 = vadd.f32 %v971, %v1001
      %v1018 = vadd.f32 %v972, %v1003
      %v1019 = vadd.f32 %v973, %v1006
      %v1020 = vadd.f32 %v974, %v1008
      %v1021 = vadd.f32 %v975, %v1011
      %v1022 = vadd.f32 %v976, %v1013
      %s1023 = scalar_lea.vmem %s3, 28
      %v1024 = vld [vmem:[%s1023] sm:$0xf]
      %v1025 = vpack.c.b16 %v571, %v857
      %v1027 = vsel %vm583, %v1025, 0
      %v1030 = vsel %vm596, %v1024, 0
      %1032 = vmatpush.bf16.msra.mxu0 0
      %1033 = vmatpush.bf16.msra.mxu0 0
      %1034 = vmatpush.bf16.msra.mxu0 0
      %1035 = vmatpush.bf16.msra.mxu0 0
      %1036 = vmatpush.bf16.msra.mxu0 0
      %1037 = vmatpush.bf16.msra.mxu0 0
      %1038 = vmatpush.bf16.msra.mxu0 0
      %1039 = vmatpush.bf16.msra.mxu0 %v1030
      %1040 = vmatmul.bf16.gmra.mxu0 %v588
      %v1041 = vpop.f32.mrf.mxu0
      %v1042 = vadd.f32 0.0, %v1041
      %v1043 = vpop.f32.mrf.mxu0
      %v1044 = vadd.f32 0.0, %v1043
      %1045 = vmatmul.bf16.gmra.mxu0 %v591
      %v1046 = vpop.f32.mrf.mxu0
      %v1047 = vadd.f32 0.0, %v1046
      %v1048 = vpop.f32.mrf.mxu0
      %v1049 = vadd.f32 0.0, %v1048
      %1050 = vmatmul.bf16.gmra.mxu0 %v594
      %v1051 = vpop.f32.mrf.mxu0
      %v1052 = vadd.f32 0.0, %v1051
      %v1053 = vpop.f32.mrf.mxu0
      %v1054 = vadd.f32 0.0, %v1053
      %1055 = vmatmul.bf16.gmra.mxu0 %v1027
      %v1056 = vpop.f32.mrf.mxu0
      %v1057 = vadd.f32 0.0, %v1056
      %v1058 = vpop.f32.mrf.mxu0
      %v1059 = vadd.f32 0.0, %v1058
      %1060 = vdwg.mxu0
      %v1061 = vadd.f32 %v1015, %v1042
      %v1062 = vadd.f32 %v1016, %v1044
      %v1063 = vadd.f32 %v1017, %v1047
      %v1064 = vadd.f32 %v1018, %v1049
      %v1065 = vadd.f32 %v1019, %v1052
      %v1066 = vadd.f32 %v1020, %v1054
      %v1067 = vadd.f32 %v1021, %v1057
      %v1068 = vadd.f32 %v1022, %v1059
      %s1069 = scalar_lea.vmem %s3, 32
      %v1070 = vld [vmem:[%s1069] sm:$0xf]
      %v1071 = vpack.c.b16 %v714, %v920
      %v1073 = vsel %vm583, %v1071, 0
      %v1076 = vsel %vm596, %v1070, 0
      %1078 = vmatpush.bf16.msra.mxu0 0
      %1079 = vmatpush.bf16.msra.mxu0 0
      %1080 = vmatpush.bf16.msra.mxu0 0
      %1081 = vmatpush.bf16.msra.mxu0 0
      %1082 = vmatpush.bf16.msra.mxu0 0
      %1083 = vmatpush.bf16.msra.mxu0 0
      %1084 = vmatpush.bf16.msra.mxu0 0
      %1085 = vmatpush.bf16.msra.mxu0 %v1076
      %1086 = vmatmul.bf16.gmra.mxu0 %v730
      %v1087 = vpop.f32.mrf.mxu0
      %v1088 = vadd.f32 0.0, %v1087
      %v1089 = vpop.f32.mrf.mxu0
      %v1090 = vadd.f32 0.0, %v1089
      %1091 = vmatmul.bf16.gmra.mxu0 %v733
      %v1092 = vpop.f32.mrf.mxu0
      %v1093 = vadd.f32 0.0, %v1092
      %v1094 = vpop.f32.mrf.mxu0
      %v1095 = vadd.f32 0.0, %v1094
      %1096 = vmatmul.bf16.gmra.mxu0 %v736
      %v1097 = vpop.f32.mrf.mxu0
      %v1098 = vadd.f32 0.0, %v1097
      %v1099 = vpop.f32.mrf.mxu0
      %v1100 = vadd.f32 0.0, %v1099
      %1101 = vmatmul.bf16.gmra.mxu0 %v1073
      %v1102 = vpop.f32.mrf.mxu0
      %v1103 = vadd.f32 0.0, %v1102
      %v1104 = vpop.f32.mrf.mxu0
      %v1105 = vadd.f32 0.0, %v1104
      %1106 = vdwg.mxu0
      %v1107 = vadd.f32 %v1061, %v1088
      %v1108 = vadd.f32 %v1062, %v1090
      %v1109 = vadd.f32 %v1063, %v1093
      %v1110 = vadd.f32 %v1064, %v1095
      %v1111 = vadd.f32 %v1065, %v1098
      %v1112 = vadd.f32 %v1066, %v1100
      %v1113 = vadd.f32 %v1067, %v1103
      %v1114 = vadd.f32 %v1068, %v1105
      %v1115 = vpack.c.bf16 %v1107, %v1107
      %v1116 = vpack.c.bf16 %v1108, %v1108
      %v1117 = vpack.c.bf16 %v1109, %v1109
      %v1118 = vpack.c.bf16 %v1110, %v1110
      %v1119 = vpack.c.bf16 %v1111, %v1111
      %v1120 = vpack.c.bf16 %v1112, %v1112
      %v1121 = vpack.c.bf16 %v1113, %v1113
      %v1122 = vpack.c.bf16 %v1114, %v1114
      %vm1123 = vcmask 60416
      %1124 = vst.msk [vmem:[%s254] sm:$0xf] %vm1123, %v1115
      %1125 = vst.msk [vmem:[%s254 + $0x4] sm:$0xf] %vm1123, %v1116
      %1126 = vst.msk [vmem:[%s254 + $0x8] sm:$0xf] %vm1123, %v1117
      %1127 = vst.msk [vmem:[%s254 + $0xc] sm:$0xf] %vm1123, %v1118
      %1128 = vst.msk [vmem:[%s254 + $0x10] sm:$0xf] %vm1123, %v1119
      %1129 = vst.msk [vmem:[%s254 + $0x14] sm:$0xf] %vm1123, %v1120
      %1130 = vst.msk [vmem:[%s254 + $0x18] sm:$0xf] %vm1123, %v1121
      %1131 = vst.msk [vmem:[%s254 + $0x1c] sm:$0xf] %vm1123, %v1122
      %p1132 = scmp.eq.s32.totalorder %s22, 0
      // Predicated region
      $region37: #{bottleneck_forward.5} parent=35 // pred_check
        %p1133 = pneg %p1132
      $region38: #{bottleneck_forward.5} parent=35 // pred_check_branch
        %1135 = sbr.rel (%p1133) target = $region40
      $region39: #{bottleneck_forward.5} parent=35 // pred_region
        %vm1136 = vcmask 58368
        %1137 = vst.msk [vmem:[%s259] sm:$0x3] %vm1136, 0.0
      $region40: #{bottleneck_forward.5} parent=35 // pred_fallthru
        _
      %v1138 = vld [vmem:[%s259] sm:$0x1]
      %v1139 = vsel %vm583, %v1107, 0.0
      %v1140 = vsel %vm583, %v1108, 0.0
      %v1141 = vadd.f32 %v1139, %v1140
      %v1142 = vsel %vm583, %v1109, 0.0
      %v1143 = vadd.f32 %v1141, %v1142
      %v1144 = vsel %vm583, %v1110, 0.0
      %v1145 = vadd.f32 %v1143, %v1144
      %v1146 = vsel %vm583, %v1111, 0.0
      %v1147 = vadd.f32 %v1145, %v1146
      %v1148 = vsel %vm583, %v1112, 0.0
      %v1149 = vadd.f32 %v1147, %v1148
      %v1150 = vsel %vm583, %v1113, 0.0
      %v1151 = vadd.f32 %v1149, %v1150
      %v1152 = vsel %vm583, %v1114, 0.0
      %v1153 = vadd.f32 %v1151, %v1152
      %v1154 = vrot.slane %v1153, 4
      %v1155 = vadd.f32 %v1153, %v1154
      %v1156 = vrot.slane %v1155, 2
      %v1157 = vadd.f32 %v1155, %v1156
      %v1158 = vrot.slane %v1157, 1
      %v1159 = vadd.f32 %v1157, %v1158
      %v1160 = vadd.f32 %v1138, %v1159
      %vm1161 = vcmask 57344
      %1162 = vst.msk [vmem:[%s259] sm:$0x1] %vm1161, %v1160
      %v1163 = vld [vmem:[%s259 + $0x1] sm:$0x1]
      %v1164 = vmul.f32 %v1107, %v1107
      %v1165 = vmul.f32 %v1108, %v1108
      %v1166 = vmul.f32 %v1109, %v1109
      %v1167 = vmul.f32 %v1110, %v1110
      %v1168 = vmul.f32 %v1111, %v1111
      %v1169 = vmul.f32 %v1112, %v1112
      %v1170 = vmul.f32 %v1113, %v1113
      %v1171 = vmul.f32 %v1114, %v1114
      %v1172 = vsel %vm583, %v1164, 0.0
      %v1173 = vsel %vm583, %v1165, 0.0
      %v1174 = vadd.f32 %v1172, %v1173
      %v1175 = vsel %vm583, %v1166, 0.0
      %v1176 = vadd.f32 %v1174, %v1175
      %v1177 = vsel %vm583, %v1167, 0.0
      %v1178 = vadd.f32 %v1176, %v1177
      %v1179 = vsel %vm583, %v1168, 0.0
      %v1180 = vadd.f32 %v1178, %v1179
      %v1181 = vsel %vm583, %v1169, 0.0
      %v1182 = vadd.f32 %v1180, %v1181
      %v1183 = vsel %vm583, %v1170, 0.0
      %v1184 = vadd.f32 %v1182, %v1183
      %v1185 = vsel %vm583, %v1171, 0.0
      %v1186 = vadd.f32 %v1184, %v1185
      %v1187 = vrot.slane %v1186, 4
      %v1188 = vadd.f32 %v1186, %v1187
      %v1189 = vrot.slane %v1188, 2
      %v1190 = vadd.f32 %v1188, %v1189
      %v1191 = vrot.slane %v1190, 1
      %v1192 = vadd.f32 %v1190, %v1191
      %v1193 = vadd.f32 %v1163, %v1192
      %1194 = vst.msk [vmem:[%s259 + $0x1] sm:$0x1] %vm1161, %v1193
      %s1195 = sadd.s32 %s21, %s22
      %p1196 = scmp.lt.s32.totalorder %s1195, 1
      %s1197 = scalar_select %p1196, %s1195, 1
      %s1198 = smul.addr %s1197, 8
      %s1199 = smul.addr %s1198, 4
      %s1200 = scalar_lea.vmem %s4, %s1199
      %p1201 = scmp.lt.s32.totalorder %s21, 1
      %s1202 = scalar_select %p1201, %s21, 1
      %s1203 = smul.addr %s1202, 2
      %s1204 = scalar_lea.vmem %s5, %s1203
      // Predicated region
      $region41: #{bottleneck_forward.5} parent=35 // pred_check
        %p1205 = pneg %p140
      $region42: #{bottleneck_forward.5} parent=35 // pred_check_branch
        %1207 = sbr.rel (%p1205) target = $region44
      $region43: #{bottleneck_forward.5} parent=35 // pred_region
        %s1208 = sadd.s32 %s21, %s22
      $region44: #{bottleneck_forward.5} parent=35 // pred_fallthru
        _
      // Predicated region
      $region45: #{bottleneck_forward.5} parent=35 // pred_check
        %p1209 = pneg %p166
      $region46: #{bottleneck_forward.5} parent=35 // pred_check_branch
        %1211 = sbr.rel (%p1209) target = $region48
      $region47: #{bottleneck_forward.5} parent=35 // pred_region
        _
      $region48: #{bottleneck_forward.5} parent=35 // pred_fallthru
        _
    $region36: #{bottleneck_forward.5} parent=5 // pred_fallthru
      _
    %p1212 = scmp.le.s32.totalorder 2, %s12
    // Predicated region
    $region49: #{bottleneck_forward.5} parent=5 // pred_check
      %p1213 = pneg %p1212
    $region50: #{bottleneck_forward.5} parent=5 // pred_check_branch
      %1215 = sbr.rel (%p1213) target = $region52
    $region51: #{bottleneck_forward.5} parent=5 // pred_region
      %s1216 = ssub.s32 %s12, 2
      // Predicated region
      $region53: #{bottleneck_forward.5} parent=51 // pred_check
        %p1217 = pneg %p146
      $region54: #{bottleneck_forward.5} parent=51 // pred_check_branch
        %1219 = sbr.rel (%p1217) target = $region56
      $region55: #{bottleneck_forward.5} parent=51 // pred_region
        %s1220 = sadd.s32 %s23, %s24
        %p1221 = scmp.lt.s32.totalorder %s1220, 1
        %s1222 = scalar_select %p1221, %s1220, 1
        %s1223 = smul.addr %s1222, 8
        %s1224 = smul.addr %s1223, 4
        %s1225 = scalar_lea.vmem %s4, %s1224
      $region56: #{bottleneck_forward.5} parent=51 // pred_fallthru
        _
      // Predicated region
      $region57: #{bottleneck_forward.5} parent=51 // pred_check
        %p1226 = pneg %p172
      $region58: #{bottleneck_forward.5} parent=51 // pred_check_branch
        %1228 = sbr.rel (%p1226) target = $region60
      $region59: #{bottleneck_forward.5} parent=51 // pred_region
        %p1229 = scmp.lt.s32.totalorder %s23, 1
        %s1230 = scalar_select %p1229, %s23, 1
        %s1231 = smul.addr %s1230, 2
        %s1232 = scalar_lea.vmem %s5, %s1231
      $region60: #{bottleneck_forward.5} parent=51 // pred_fallthru
        _
    $region52: #{bottleneck_forward.5} parent=5 // pred_fallthru
      _
  $region6: #{bottleneck_forward.5} parent=0 // loop_footer
    %s16 = sadd.s32 1, %s12
  $region7: #{bottleneck_forward.5} parent=0 // loop_footer_branch
    %11 = sbr.rel target = $region3
  $region8: #{bottleneck_forward.5} parent=0 // loop_exit
    _

</llo_original>
